<compile_context>
chip_gen: v6e
topology: v6e:2x2x1
jax: 0.10.0
libtpu: 0.0.40
codegen_flags: <defaults>
</compile_context>

<pallas_src>
import jax
import jax.numpy as jnp
from jax.experimental import pallas as pl
from jax.experimental.pallas import tpu as pltpu


# ---------------------------------------------------------------------------
# Pallas kernels
# ---------------------------------------------------------------------------
def _sigmoid(y):
    # exp and the approximate reciprocal both run on the EUP, keeping the
    # activation epilogue off the VPU divide path (f32 on all generations).
    return pl.reciprocal(1.0 + jnp.exp(-y), approx=True)


def _conv_pool_kernel(x_ref, w_ref, b_ref, o_ref):
    """o = mean_{p<4} sigmoid(X_p @ W + b)  — conv-as-matmul + fused 2x2 avg-pool.

    x_ref: (4, Q, K) bf16 patches, pool-position major.
    w_ref: (K, 128) bf16.  b_ref: (1, 128) f32.  o_ref: (Q, 128) bf16.
    """
    w = w_ref[...]
    b = b_ref[...]
    acc = jnp.zeros(o_ref.shape, jnp.float32)
    for p in range(4):                       # static unroll: 4 small MXU matmuls
        h = jnp.dot(x_ref[p], w, preferred_element_type=jnp.float32)
        acc = acc + _sigmoid(h + b)          # pool accumulation in f32 (VPU)
    o_ref[...] = (acc * 0.25).astype(o_ref.dtype)


def _fc_stack_kernel(x_ref, w3_ref, b3_ref, w4_ref, b4_ref, w5_ref, b5_ref, o_ref):
    """Fused classifier: ((sigmoid(x@W3+b3)) @ W4 + b4) @ W5 + b5."""
    h = jnp.dot(x_ref[...], w3_ref[...], preferred_element_type=jnp.float32)
    h = _sigmoid(h + b3_ref[...])
    h = jnp.dot(h.astype(jnp.bfloat16), w4_ref[...],
                preferred_element_type=jnp.float32) + b4_ref[...]
    h = jnp.dot(h.astype(jnp.bfloat16), w5_ref[...],
                preferred_element_type=jnp.float32) + b5_ref[...]
    o_ref[...] = h.astype(o_ref.dtype)


# ---------------------------------------------------------------------------
# pallas_call wrappers
# ---------------------------------------------------------------------------
def _conv_pool_stage(patches, w, b):
    """patches: (B, 4, Q, K) bf16 -> (B, Q, 128) bf16, batch axis is 'parallel'."""
    bsz, _, q, k = patches.shape
    n = w.shape[1]
    return pl.pallas_call(
        _conv_pool_kernel,
        out_shape=jax.ShapeDtypeStruct((bsz, q, n), jnp.bfloat16),
        grid=(bsz,),
        in_specs=[
            pl.BlockSpec((None, 4, q, k), lambda i: (i, 0, 0, 0)),
            pl.BlockSpec((k, n), lambda i: (0, 0)),     # weight: VMEM-resident
            pl.BlockSpec((1, n), lambda i: (0, 0)),     # bias:   VMEM-resident
        ],
        out_specs=pl.BlockSpec((None, q, n), lambda i: (i, 0, 0)),
        compiler_params=pltpu.CompilerParams(dimension_semantics=("parallel",)),
    )(patches, w, b)


def _fc_stack(x, w3, b3, w4, b4, w5, b5):
    bsz, k = x.shape
    n = w3.shape[1]
    return pl.pallas_call(
        _fc_stack_kernel,
        out_shape=jax.ShapeDtypeStruct((bsz, n), jnp.float32),
        grid=(1,),
        in_specs=[
            pl.BlockSpec((bsz, k), lambda i: (0, 0)),
            pl.BlockSpec((k, n), lambda i: (0, 0)),
            pl.BlockSpec((1, n), lambda i: (0, 0)),
            pl.BlockSpec((n, n), lambda i: (0, 0)),
            pl.BlockSpec((1, n), lambda i: (0, 0)),
            pl.BlockSpec((n, n), lambda i: (0, 0)),
            pl.BlockSpec((1, n), lambda i: (0, 0)),
        ],
        out_specs=pl.BlockSpec((bsz, n), lambda i: (0, 0)),
        compiler_params=pltpu.CompilerParams(dimension_semantics=("arbitrary",)),
    )(x, w3, b3, w4, b4, w5, b5)


# ---------------------------------------------------------------------------
# One-time parameter packing (hoisted out of the hot path, batch-independent)
# ---------------------------------------------------------------------------
def _pad_to(a, rows, cols):
    return jnp.zeros((rows, cols), jnp.float32).at[: a.shape[0], : a.shape[1]].set(
        a.astype(jnp.float32))


def _pad_bias(b, cols):
    return jnp.zeros((1, cols), jnp.float32).at[0, : b.shape[0]].set(
        b.astype(jnp.float32))


def prepare(params):
    """Pre-transpose / zero-pad weights to lane-dense bf16 slabs."""
    bf = jnp.bfloat16
    w1col = params["w1"].reshape(6, 25).T                         # K order (kh,kw), C_in=1
    w2col = params["w2"].transpose(2, 3, 1, 0).reshape(150, 16)   # K order (kh,kw,c)
    return {
        "w1": _pad_to(w1col, 32, 128).astype(bf),  "b1": _pad_bias(params["b1"], 128),
        "w2": _pad_to(w2col, 160, 128).astype(bf), "b2": _pad_bias(params["b2"], 128),
        "w3": _pad_to(params["w3"].T, 400, 128).astype(bf), "b3": _pad_bias(params["b3"], 128),
        "w4": _pad_to(params["w4"].T, 128, 128).astype(bf), "b4": _pad_bias(params["b4"], 128),
        "w5": _pad_to(params["w5"].T, 128, 128).astype(bf), "b5": _pad_bias(params["b5"], 128),
    }


# ---------------------------------------------------------------------------
# Layout-only glue: im2col with pool-position-major row ordering
# ---------------------------------------------------------------------------
def _im2col_pool_major(feat, conv_hw, pool_hw):
    """feat: (B, H, W, C) channel-last.  5x5 valid conv -> conv_hw x conv_hw,
    rows reordered for the 2x2/stride-2 pool: (B, 4, pool_hw^2, 25*C)."""
    b, c = feat.shape[0], feat.shape[-1]
    cols = [feat[:, i:i + conv_hw, j:j + conv_hw, :]
            for i in range(5) for j in range(5)]
    pat = jnp.stack(cols, axis=3)                        # (B, ch, cw, 25, C)
    pat = pat.reshape(b, pool_hw, 2, pool_hw, 2, 25 * c)
    pat = pat.transpose(0, 2, 4, 1, 3, 5)                # (B, dh, dw, ohp, owp, K)
    return pat.reshape(b, 4, pool_hw * pool_hw, 25 * c)


def _pad_cast(pat, kpad):
    return jnp.pad(pat, ((0, 0), (0, 0), (0, 0),
                         (0, kpad - pat.shape[-1]))).astype(jnp.bfloat16)


# ---------------------------------------------------------------------------
# Forward pass: 3 pallas_calls + layout-only XLA glue
# ---------------------------------------------------------------------------
def lenet_forward(prep, x):
    B = x.shape[0]

    # stage 1: conv1 (5x5, pad 2) + sigmoid + 2x2 avg-pool  -> (B, 196, 128) bf16
    xp = jnp.pad(x[:, 0], ((0, 0), (2, 2), (2, 2)))[..., None]      # (B,32,32,1)
    p1 = _pad_cast(_im2col_pool_major(xp, 28, 14), 32)              # (B,4,196,32)
    y1 = _conv_pool_stage(p1, prep["w1"], prep["b1"])               # (B,196,128)

    # stage 2: conv2 (5x5, valid) + sigmoid + 2x2 avg-pool  -> (B, 25, 128) bf16
    a1 = y1[:, :, :6].reshape(B, 14, 14, 6)                         # channel-last
    p2 = _pad_cast(_im2col_pool_major(a1, 10, 5), 160)              # (B,4,25,160)
    y2 = _conv_pool_stage(p2, prep["w2"], prep["b2"])               # (B,25,128)

    # classifier: PyTorch NCHW flatten, then one fused FC kernel
    z = y2[:, :, :16].reshape(B, 5, 5, 16).transpose(0, 3, 1, 2).reshape(B, 400)
    out = _fc_stack(z, prep["w3"], prep["b3"], prep["w4"], prep["b4"],
                    prep["w5"], prep["b5"])                         # (B, 128) f32
    return out[:, :10]


# ---------------------------------------------------------------------------
# Parameters (deterministic, PyTorch-style uniform fan-in init) + f32 reference
# ---------------------------------------------------------------------------
def init_params(key):
    ks = jax.random.split(key, 10)

    def u(k, shape, fan_in):
        bound = 1.0 / jnp.sqrt(jnp.float32(fan_in))
        return jax.random.uniform(k, shape, jnp.float32, -bound, bound)

    return {
        "w1": u(ks[0], (6, 1, 5, 5), 25),    "b1": u(ks[1], (6,), 25),
        "w2": u(ks[2], (16, 6, 5, 5), 150),  "b2": u(ks[3], (16,), 150),
        "w3": u(ks[4], (120, 400), 400),     "b3": u(ks[5], (120,), 400),
        "w4": u(ks[6], (84, 120), 120),      "b4": u(ks[7], (84,), 120),
        "w5": u(ks[8], (10, 84), 84),        "b5": u(ks[9], (10,), 84),
    }


def _lenet_reference(params, x):
    """Plain-JAX f32 reference of the PyTorch module (for a sanity check)."""
    dn = ("NCHW", "OIHW", "NCHW")
    y = jax.lax.conv_general_dilated(x, params["w1"], (1, 1), ((2, 2), (2, 2)),
                                     dimension_numbers=dn)
    y = jax.nn.sigmoid(y + params["b1"].reshape(1, 6, 1, 1))
    y = jax.lax.reduce_window(y, 0.0, jax.lax.add, (1, 1, 2, 2), (1, 1, 2, 2),
                              "VALID") * 0.25
    y = jax.lax.conv_general_dilated(y, params["w2"], (1, 1), ((0, 0), (0, 0)),
                                     dimension_numbers=dn)
    y = jax.nn.sigmoid(y + params["b2"].reshape(1, 16, 1, 1))
    y = jax.lax.reduce_window(y, 0.0, jax.lax.add, (1, 1, 2, 2), (1, 1, 2, 2),
                              "VALID") * 0.25
    z = y.reshape(y.shape[0], -1)
    z = jax.nn.sigmoid(z @ params["w3"].T + params["b3"])
    z = z @ params["w4"].T + params["b4"]
    return z @ params["w5"].T + params["b5"]


if __name__ == "__main__":
    key = jax.random.PRNGKey(0)
    kx, kp = jax.random.split(key)
    # LeNet's classifier hard-codes 16*5*5, which implies 1x28x28 inputs.
    x = jax.random.normal(kx, (2, 1, 28, 28), jnp.float32)
    params = init_params(kp)
    prep = prepare(params)                       # one-time, batch-independent

    fwd = jax.jit(lenet_forward)
    out = jax.block_until_ready(fwd(prep, x))

    assert out.shape == (2, 10) and bool(jnp.all(jnp.isfinite(out)))
    # Loose sanity check against the f32 reference (bf16 MXU + approx recip).
    ref = _lenet_reference(params, x)
    assert float(jnp.max(jnp.abs(out - ref))) < 0.15
    print("KERNEL_OK")
</pallas_src>

<mosaic_0001>
module attributes {stable_mosaic.version = 11 : i64} {
  func.func @_conv_pool_kernel(%arg0: i32, %arg1: memref<1x4x196x32xbf16, #tpu.memory_space<vmem>>, %arg2: memref<32x128xbf16, #tpu.memory_space<vmem>>, %arg3: memref<1x128xf32, #tpu.memory_space<vmem>>, %arg4: memref<1x196x128xbf16, #tpu.memory_space<vmem>>) attributes {dimension_semantics = [#tpu.dimension_semantics<parallel>], iteration_bounds = array<i64: 2>, scalar_prefetch = 0 : i64, scratch_operands = 0 : i64, tpu.core_type = #tpu.core_type<tc>, window_params = [{transform_indices = @transform_0, window_bounds = array<i64: 1, 4, 196, 32>}, {pipeline_mode = #tpu.pipeline_mode<synchronous>, transform_indices = @transform_1, window_bounds = array<i64: 32, 128>}, {pipeline_mode = #tpu.pipeline_mode<synchronous>, transform_indices = @transform_2, window_bounds = array<i64: 1, 128>}, {transform_indices = @transform_3, window_bounds = array<i64: 1, 196, 128>}]} {
    %c0 = arith.constant 0 : index
    %c0_0 = arith.constant 0 : index
    %0 = vector.load %arg2[%c0, %c0_0] : memref<32x128xbf16, #tpu.memory_space<vmem>>, vector<32x128xbf16>
    %c0_1 = arith.constant 0 : index
    %c0_2 = arith.constant 0 : index
    %1 = vector.load %arg3[%c0_1, %c0_2] : memref<1x128xf32, #tpu.memory_space<vmem>>, vector<1x128xf32>
    %cst = arith.constant 0.000000e+00 : f32
    %2 = vector.broadcast %cst : f32 to vector<196x128xf32>
    %c0_3 = arith.constant 0 : index
    %c0_4 = arith.constant 0 : index
    %c0_5 = arith.constant 0 : index
    %c0_6 = arith.constant 0 : index
    %3 = vector.load %arg1[%c0_3, %c0_4, %c0_5, %c0_6] : memref<1x4x196x32xbf16, #tpu.memory_space<vmem>>, vector<1x1x196x32xbf16>
    %4 = vector.shape_cast %3 : vector<1x1x196x32xbf16> to vector<196x32xbf16>
    %cst_7 = arith.constant dense<0.000000e+00> : vector<196x128xf32>
    %5 = tpu.matmul %4, %0, %cst_7 {dimension_numbers = #tpu.dot_dimension_numbers<[1], [0], [0], [1], [0, 0, 1, 1], [], []>} : vector<196x32xbf16>, vector<32x128xbf16>, vector<196x128xf32> -> vector<196x128xf32>
    %6 = vector.broadcast %1 : vector<1x128xf32> to vector<196x128xf32>
    %7 = arith.addf %5, %6 : vector<196x128xf32>
    %cst_8 = arith.constant 0.000000e+00 : f32
    %8 = vector.broadcast %cst_8 : f32 to vector<196x128xf32>
    %9 = arith.subf %8, %7 : vector<196x128xf32>
    %10 = math.exp %9 : vector<196x128xf32>
    %cst_9 = arith.constant 1.000000e+00 : f32
    %11 = vector.broadcast %cst_9 : f32 to vector<196x128xf32>
    %12 = arith.addf %11, %10 : vector<196x128xf32>
    %13 = tpu.reciprocal %12 {approx = true} : vector<196x128xf32> -> vector<196x128xf32>
    %14 = arith.addf %2, %13 : vector<196x128xf32>
    %c0_10 = arith.constant 0 : index
    %c1 = arith.constant 1 : index
    %c0_11 = arith.constant 0 : index
    %c0_12 = arith.constant 0 : index
    %15 = vector.load %arg1[%c0_10, %c1, %c0_11, %c0_12] : memref<1x4x196x32xbf16, #tpu.memory_space<vmem>>, vector<1x1x196x32xbf16>
    %16 = vector.shape_cast %15 : vector<1x1x196x32xbf16> to vector<196x32xbf16>
    %cst_13 = arith.constant dense<0.000000e+00> : vector<196x128xf32>
    %17 = tpu.matmul %16, %0, %cst_13 {dimension_numbers = #tpu.dot_dimension_numbers<[1], [0], [0], [1], [0, 0, 1, 1], [], []>} : vector<196x32xbf16>, vector<32x128xbf16>, vector<196x128xf32> -> vector<196x128xf32>
    %18 = vector.broadcast %1 : vector<1x128xf32> to vector<196x128xf32>
    %19 = arith.addf %17, %18 : vector<196x128xf32>
    %cst_14 = arith.constant 0.000000e+00 : f32
    %20 = vector.broadcast %cst_14 : f32 to vector<196x128xf32>
    %21 = arith.subf %20, %19 : vector<196x128xf32>
    %22 = math.exp %21 : vector<196x128xf32>
    %cst_15 = arith.constant 1.000000e+00 : f32
    %23 = vector.broadcast %cst_15 : f32 to vector<196x128xf32>
    %24 = arith.addf %23, %22 : vector<196x128xf32>
    %25 = tpu.reciprocal %24 {approx = true} : vector<196x128xf32> -> vector<196x128xf32>
    %26 = arith.addf %14, %25 : vector<196x128xf32>
    %c0_16 = arith.constant 0 : index
    %c2 = arith.constant 2 : index
    %c0_17 = arith.constant 0 : index
    %c0_18 = arith.constant 0 : index
    %27 = vector.load %arg1[%c0_16, %c2, %c0_17, %c0_18] : memref<1x4x196x32xbf16, #tpu.memory_space<vmem>>, vector<1x1x196x32xbf16>
    %28 = vector.shape_cast %27 : vector<1x1x196x32xbf16> to vector<196x32xbf16>
    %cst_19 = arith.constant dense<0.000000e+00> : vector<196x128xf32>
    %29 = tpu.matmul %28, %0, %cst_19 {dimension_numbers = #tpu.dot_dimension_numbers<[1], [0], [0], [1], [0, 0, 1, 1], [], []>} : vector<196x32xbf16>, vector<32x128xbf16>, vector<196x128xf32> -> vector<196x128xf32>
    %30 = vector.broadcast %1 : vector<1x128xf32> to vector<196x128xf32>
    %31 = arith.addf %29, %30 : vector<196x128xf32>
    %cst_20 = arith.constant 0.000000e+00 : f32
    %32 = vector.broadcast %cst_20 : f32 to vector<196x128xf32>
    %33 = arith.subf %32, %31 : vector<196x128xf32>
    %34 = math.exp %33 : vector<196x128xf32>
    %cst_21 = arith.constant 1.000000e+00 : f32
    %35 = vector.broadcast %cst_21 : f32 to vector<196x128xf32>
    %36 = arith.addf %35, %34 : vector<196x128xf32>
    %37 = tpu.reciprocal %36 {approx = true} : vector<196x128xf32> -> vector<196x128xf32>
    %38 = arith.addf %26, %37 : vector<196x128xf32>
    %c0_22 = arith.constant 0 : index
    %c3 = arith.constant 3 : index
    %c0_23 = arith.constant 0 : index
    %c0_24 = arith.constant 0 : index
    %39 = vector.load %arg1[%c0_22, %c3, %c0_23, %c0_24] : memref<1x4x196x32xbf16, #tpu.memory_space<vmem>>, vector<1x1x196x32xbf16>
    %40 = vector.shape_cast %39 : vector<1x1x196x32xbf16> to vector<196x32xbf16>
    %cst_25 = arith.constant dense<0.000000e+00> : vector<196x128xf32>
    %41 = tpu.matmul %40, %0, %cst_25 {dimension_numbers = #tpu.dot_dimension_numbers<[1], [0], [0], [1], [0, 0, 1, 1], [], []>} : vector<196x32xbf16>, vector<32x128xbf16>, vector<196x128xf32> -> vector<196x128xf32>
    %42 = vector.broadcast %1 : vector<1x128xf32> to vector<196x128xf32>
    %43 = arith.addf %41, %42 : vector<196x128xf32>
    %cst_26 = arith.constant 0.000000e+00 : f32
    %44 = vector.broadcast %cst_26 : f32 to vector<196x128xf32>
    %45 = arith.subf %44, %43 : vector<196x128xf32>
    %46 = math.exp %45 : vector<196x128xf32>
    %cst_27 = arith.constant 1.000000e+00 : f32
    %47 = vector.broadcast %cst_27 : f32 to vector<196x128xf32>
    %48 = arith.addf %47, %46 : vector<196x128xf32>
    %49 = tpu.reciprocal %48 {approx = true} : vector<196x128xf32> -> vector<196x128xf32>
    %50 = arith.addf %38, %49 : vector<196x128xf32>
    %cst_28 = arith.constant 2.500000e-01 : f32
    %51 = vector.broadcast %cst_28 : f32 to vector<196x128xf32>
    %52 = arith.mulf %50, %51 : vector<196x128xf32>
    %53 = arith.truncf %52 : vector<196x128xf32> to vector<196x128xbf16>
    %c0_29 = arith.constant 0 : index
    %c0_30 = arith.constant 0 : index
    %c0_31 = arith.constant 0 : index
    %54 = vector.load %arg4[%c0_29, %c0_30, %c0_31] : memref<1x196x128xbf16, #tpu.memory_space<vmem>>, vector<1x196x128xbf16>
    %55 = vector.shape_cast %54 : vector<1x196x128xbf16> to vector<196x128xbf16>
    %56 = vector.shape_cast %53 : vector<196x128xbf16> to vector<1x196x128xbf16>
    tpu.vector_store %arg4[%c0_29, %c0_30, %c0_31], %56 {strides = array<i32>} : memref<1x196x128xbf16, #tpu.memory_space<vmem>>, vector<1x196x128xbf16>,
    return
  }
  func.func @transform_0(%arg0: i32) -> (i32, i32, i32, i32) {
    %c0_i32 = arith.constant 0 : i32
    %c0_i32_0 = arith.constant 0 : i32
    %c0_i32_1 = arith.constant 0 : i32
    %c0_i32_2 = arith.constant 0 : i32
    return %arg0, %c0_i32, %c0_i32_0, %c0_i32_1 : i32, i32, i32, i32
  }
  func.func @transform_1(%arg0: i32) -> (i32, i32) {
    %c0_i32 = arith.constant 0 : i32
    %c0_i32_0 = arith.constant 0 : i32
    %c0_i32_1 = arith.constant 0 : i32
    return %c0_i32, %c0_i32_0 : i32, i32
  }
  func.func @transform_2(%arg0: i32) -> (i32, i32) {
    %c0_i32 = arith.constant 0 : i32
    %c0_i32_0 = arith.constant 0 : i32
    %c0_i32_1 = arith.constant 0 : i32
    return %c0_i32, %c0_i32_0 : i32, i32
  }
  func.func @transform_3(%arg0: i32) -> (i32, i32, i32) {
    %c0_i32 = arith.constant 0 : i32
    %c0_i32_0 = arith.constant 0 : i32
    %c0_i32_1 = arith.constant 0 : i32
    return %arg0, %c0_i32, %c0_i32_0 : i32, i32, i32
  }
}

module attributes {stable_mosaic.version = 11 : i64} {
  func.func @_conv_pool_kernel(%arg0: i32, %arg1: memref<1x4x25x160xbf16, #tpu.memory_space<vmem>>, %arg2: memref<160x128xbf16, #tpu.memory_space<vmem>>, %arg3: memref<1x128xf32, #tpu.memory_space<vmem>>, %arg4: memref<1x25x128xbf16, #tpu.memory_space<vmem>>) attributes {dimension_semantics = [#tpu.dimension_semantics<parallel>], iteration_bounds = array<i64: 2>, scalar_prefetch = 0 : i64, scratch_operands = 0 : i64, tpu.core_type = #tpu.core_type<tc>, window_params = [{transform_indices = @transform_0, window_bounds = array<i64: 1, 4, 25, 160>}, {pipeline_mode = #tpu.pipeline_mode<synchronous>, transform_indices = @transform_1, window_bounds = array<i64: 160, 128>}, {pipeline_mode = #tpu.pipeline_mode<synchronous>, transform_indices = @transform_2, window_bounds = array<i64: 1, 128>}, {transform_indices = @transform_3, window_bounds = array<i64: 1, 25, 128>}]} {
    %c0 = arith.constant 0 : index
    %c0_0 = arith.constant 0 : index
    %0 = vector.load %arg2[%c0, %c0_0] : memref<160x128xbf16, #tpu.memory_space<vmem>>, vector<160x128xbf16>
    %c0_1 = arith.constant 0 : index
    %c0_2 = arith.constant 0 : index
    %1 = vector.load %arg3[%c0_1, %c0_2] : memref<1x128xf32, #tpu.memory_space<vmem>>, vector<1x128xf32>
    %cst = arith.constant 0.000000e+00 : f32
    %2 = vector.broadcast %cst : f32 to vector<25x128xf32>
    %c0_3 = arith.constant 0 : index
    %c0_4 = arith.constant 0 : index
    %c0_5 = arith.constant 0 : index
    %c0_6 = arith.constant 0 : index
    %3 = vector.load %arg1[%c0_3, %c0_4, %c0_5, %c0_6] : memref<1x4x25x160xbf16, #tpu.memory_space<vmem>>, vector<1x1x25x160xbf16>
    %4 = vector.shape_cast %3 : vector<1x1x25x160xbf16> to vector<25x160xbf16>
    %cst_7 = arith.constant dense<0.000000e+00> : vector<25x128xf32>
    %5 = tpu.matmul %4, %0, %cst_7 {dimension_numbers = #tpu.dot_dimension_numbers<[1], [0], [0], [1], [0, 0, 1, 1], [], []>} : vector<25x160xbf16>, vector<160x128xbf16>, vector<25x128xf32> -> vector<25x128xf32>
    %6 = vector.broadcast %1 : vector<1x128xf32> to vector<25x128xf32>
    %7 = arith.addf %5, %6 : vector<25x128xf32>
    %cst_8 = arith.constant 0.000000e+00 : f32
    %8 = vector.broadcast %cst_8 : f32 to vector<25x128xf32>
    %9 = arith.subf %8, %7 : vector<25x128xf32>
    %10 = math.exp %9 : vector<25x128xf32>
    %cst_9 = arith.constant 1.000000e+00 : f32
    %11 = vector.broadcast %cst_9 : f32 to vector<25x128xf32>
    %12 = arith.addf %11, %10 : vector<25x128xf32>
    %13 = tpu.reciprocal %12 {approx = true} : vector<25x128xf32> -> vector<25x128xf32>
    %14 = arith.addf %2, %13 : vector<25x128xf32>
    %c0_10 = arith.constant 0 : index
    %c1 = arith.constant 1 : index
    %c0_11 = arith.constant 0 : index
    %c0_12 = arith.constant 0 : index
    %15 = vector.load %arg1[%c0_10, %c1, %c0_11, %c0_12] : memref<1x4x25x160xbf16, #tpu.memory_space<vmem>>, vector<1x1x25x160xbf16>
    %16 = vector.shape_cast %15 : vector<1x1x25x160xbf16> to vector<25x160xbf16>
    %cst_13 = arith.constant dense<0.000000e+00> : vector<25x128xf32>
    %17 = tpu.matmul %16, %0, %cst_13 {dimension_numbers = #tpu.dot_dimension_numbers<[1], [0], [0], [1], [0, 0, 1, 1], [], []>} : vector<25x160xbf16>, vector<160x128xbf16>, vector<25x128xf32> -> vector<25x128xf32>
    %18 = vector.broadcast %1 : vector<1x128xf32> to vector<25x128xf32>
    %19 = arith.addf %17, %18 : vector<25x128xf32>
    %cst_14 = arith.constant 0.000000e+00 : f32
    %20 = vector.broadcast %cst_14 : f32 to vector<25x128xf32>
    %21 = arith.subf %20, %19 : vector<25x128xf32>
    %22 = math.exp %21 : vector<25x128xf32>
    %cst_15 = arith.constant 1.000000e+00 : f32
    %23 = vector.broadcast %cst_15 : f32 to vector<25x128xf32>
    %24 = arith.addf %23, %22 : vector<25x128xf32>
    %25 = tpu.reciprocal %24 {approx = true} : vector<25x128xf32> -> vector<25x128xf32>
    %26 = arith.addf %14, %25 : vector<25x128xf32>
    %c0_16 = arith.constant 0 : index
    %c2 = arith.constant 2 : index
    %c0_17 = arith.constant 0 : index
    %c0_18 = arith.constant 0 : index
    %27 = vector.load %arg1[%c0_16, %c2, %c0_17, %c0_18] : memref<1x4x25x160xbf16, #tpu.memory_space<vmem>>, vector<1x1x25x160xbf16>
    %28 = vector.shape_cast %27 : vector<1x1x25x160xbf16> to vector<25x160xbf16>
    %cst_19 = arith.constant dense<0.000000e+00> : vector<25x128xf32>
    %29 = tpu.matmul %28, %0, %cst_19 {dimension_numbers = #tpu.dot_dimension_numbers<[1], [0], [0], [1], [0, 0, 1, 1], [], []>} : vector<25x160xbf16>, vector<160x128xbf16>, vector<25x128xf32> -> vector<25x128xf32>
    %30 = vector.broadcast %1 : vector<1x128xf32> to vector<25x128xf32>
    %31 = arith.addf %29, %30 : vector<25x128xf32>
    %cst_20 = arith.constant 0.000000e+00 : f32
    %32 = vector.broadcast %cst_20 : f32 to vector<25x128xf32>
    %33 = arith.subf %32, %31 : vector<25x128xf32>
    %34 = math.exp %33 : vector<25x128xf32>
    %cst_21 = arith.constant 1.000000e+00 : f32
    %35 = vector.broadcast %cst_21 : f32 to vector<25x128xf32>
    %36 = arith.addf %35, %34 : vector<25x128xf32>
    %37 = tpu.reciprocal %36 {approx = true} : vector<25x128xf32> -> vector<25x128xf32>
    %38 = arith.addf %26, %37 : vector<25x128xf32>
    %c0_22 = arith.constant 0 : index
    %c3 = arith.constant 3 : index
    %c0_23 = arith.constant 0 : index
    %c0_24 = arith.constant 0 : index
    %39 = vector.load %arg1[%c0_22, %c3, %c0_23, %c0_24] : memref<1x4x25x160xbf16, #tpu.memory_space<vmem>>, vector<1x1x25x160xbf16>
    %40 = vector.shape_cast %39 : vector<1x1x25x160xbf16> to vector<25x160xbf16>
    %cst_25 = arith.constant dense<0.000000e+00> : vector<25x128xf32>
    %41 = tpu.matmul %40, %0, %cst_25 {dimension_numbers = #tpu.dot_dimension_numbers<[1], [0], [0], [1], [0, 0, 1, 1], [], []>} : vector<25x160xbf16>, vector<160x128xbf16>, vector<25x128xf32> -> vector<25x128xf32>
    %42 = vector.broadcast %1 : vector<1x128xf32> to vector<25x128xf32>
    %43 = arith.addf %41, %42 : vector<25x128xf32>
    %cst_26 = arith.constant 0.000000e+00 : f32
    %44 = vector.broadcast %cst_26 : f32 to vector<25x128xf32>
    %45 = arith.subf %44, %43 : vector<25x128xf32>
    %46 = math.exp %45 : vector<25x128xf32>
    %cst_27 = arith.constant 1.000000e+00 : f32
    %47 = vector.broadcast %cst_27 : f32 to vector<25x128xf32>
    %48 = arith.addf %47, %46 : vector<25x128xf32>
    %49 = tpu.reciprocal %48 {approx = true} : vector<25x128xf32> -> vector<25x128xf32>
    %50 = arith.addf %38, %49 : vector<25x128xf32>
    %cst_28 = arith.constant 2.500000e-01 : f32
    %51 = vector.broadcast %cst_28 : f32 to vector<25x128xf32>
    %52 = arith.mulf %50, %51 : vector<25x128xf32>
    %53 = arith.truncf %52 : vector<25x128xf32> to vector<25x128xbf16>
    %c0_29 = arith.constant 0 : index
    %c0_30 = arith.constant 0 : index
    %c0_31 = arith.constant 0 : index
    %54 = vector.load %arg4[%c0_29, %c0_30, %c0_31] : memref<1x25x128xbf16, #tpu.memory_space<vmem>>, vector<1x25x128xbf16>
    %55 = vector.shape_cast %54 : vector<1x25x128xbf16> to vector<25x128xbf16>
    %56 = vector.shape_cast %53 : vector<25x128xbf16> to vector<1x25x128xbf16>
    tpu.vector_store %arg4[%c0_29, %c0_30, %c0_31], %56 {strides = array<i32>} : memref<1x25x128xbf16, #tpu.memory_space<vmem>>, vector<1x25x128xbf16>,
    return
  }
  func.func @transform_0(%arg0: i32) -> (i32, i32, i32, i32) {
    %c0_i32 = arith.constant 0 : i32
    %c0_i32_0 = arith.constant 0 : i32
    %c0_i32_1 = arith.constant 0 : i32
    %c0_i32_2 = arith.constant 0 : i32
    return %arg0, %c0_i32, %c0_i32_0, %c0_i32_1 : i32, i32, i32, i32
  }
  func.func @transform_1(%arg0: i32) -> (i32, i32) {
    %c0_i32 = arith.constant 0 : i32
    %c0_i32_0 = arith.constant 0 : i32
    %c0_i32_1 = arith.constant 0 : i32
    return %c0_i32, %c0_i32_0 : i32, i32
  }
  func.func @transform_2(%arg0: i32) -> (i32, i32) {
    %c0_i32 = arith.constant 0 : i32
    %c0_i32_0 = arith.constant 0 : i32
    %c0_i32_1 = arith.constant 0 : i32
    return %c0_i32, %c0_i32_0 : i32, i32
  }
  func.func @transform_3(%arg0: i32) -> (i32, i32, i32) {
    %c0_i32 = arith.constant 0 : i32
    %c0_i32_0 = arith.constant 0 : i32
    %c0_i32_1 = arith.constant 0 : i32
    return %arg0, %c0_i32, %c0_i32_0 : i32, i32, i32
  }
}

module attributes {stable_mosaic.version = 11 : i64} {
  func.func @_fc_stack_kernel(%arg0: i32, %arg1: memref<2x400xbf16, #tpu.memory_space<vmem>>, %arg2: memref<400x128xbf16, #tpu.memory_space<vmem>>, %arg3: memref<1x128xf32, #tpu.memory_space<vmem>>, %arg4: memref<128x128xbf16, #tpu.memory_space<vmem>>, %arg5: memref<1x128xf32, #tpu.memory_space<vmem>>, %arg6: memref<128x128xbf16, #tpu.memory_space<vmem>>, %arg7: memref<1x128xf32, #tpu.memory_space<vmem>>, %arg8: memref<2x128xf32, #tpu.memory_space<vmem>>) attributes {dimension_semantics = [#tpu.dimension_semantics<arbitrary>], iteration_bounds = array<i64: 1>, scalar_prefetch = 0 : i64, scratch_operands = 0 : i64, tpu.core_type = #tpu.core_type<tc>, window_params = [{pipeline_mode = #tpu.pipeline_mode<synchronous>, transform_indices = @transform_0, window_bounds = array<i64: 2, 400>}, {pipeline_mode = #tpu.pipeline_mode<synchronous>, transform_indices = @transform_1, window_bounds = array<i64: 400, 128>}, {pipeline_mode = #tpu.pipeline_mode<synchronous>, transform_indices = @transform_2, window_bounds = array<i64: 1, 128>}, {pipeline_mode = #tpu.pipeline_mode<synchronous>, transform_indices = @transform_3, window_bounds = array<i64: 128, 128>}, {pipeline_mode = #tpu.pipeline_mode<synchronous>, transform_indices = @transform_4, window_bounds = array<i64: 1, 128>}, {pipeline_mode = #tpu.pipeline_mode<synchronous>, transform_indices = @transform_5, window_bounds = array<i64: 128, 128>}, {pipeline_mode = #tpu.pipeline_mode<synchronous>, transform_indices = @transform_6, window_bounds = array<i64: 1, 128>}, {pipeline_mode = #tpu.pipeline_mode<synchronous>, transform_indices = @transform_7, window_bounds = array<i64: 2, 128>}]} {
    %c0 = arith.constant 0 : index
    %c0_0 = arith.constant 0 : index
    %0 = vector.load %arg1[%c0, %c0_0] : memref<2x400xbf16, #tpu.memory_space<vmem>>, vector<2x400xbf16>
    %c0_1 = arith.constant 0 : index
    %c0_2 = arith.constant 0 : index
    %1 = vector.load %arg2[%c0_1, %c0_2] : memref<400x128xbf16, #tpu.memory_space<vmem>>, vector<400x128xbf16>
    %cst = arith.constant dense<0.000000e+00> : vector<2x128xf32>
    %2 = tpu.matmul %0, %1, %cst {dimension_numbers = #tpu.dot_dimension_numbers<[1], [0], [0], [1], [0, 0, 1, 1], [], []>} : vector<2x400xbf16>, vector<400x128xbf16>, vector<2x128xf32> -> vector<2x128xf32>
    %c0_3 = arith.constant 0 : index
    %c0_4 = arith.constant 0 : index
    %3 = vector.load %arg3[%c0_3, %c0_4] : memref<1x128xf32, #tpu.memory_space<vmem>>, vector<1x128xf32>
    %4 = vector.broadcast %3 : vector<1x128xf32> to vector<2x128xf32>
    %5 = arith.addf %2, %4 : vector<2x128xf32>
    %cst_5 = arith.constant 0.000000e+00 : f32
    %6 = vector.broadcast %cst_5 : f32 to vector<2x128xf32>
    %7 = arith.subf %6, %5 : vector<2x128xf32>
    %8 = math.exp %7 : vector<2x128xf32>
    %cst_6 = arith.constant 1.000000e+00 : f32
    %9 = vector.broadcast %cst_6 : f32 to vector<2x128xf32>
    %10 = arith.addf %9, %8 : vector<2x128xf32>
    %11 = tpu.reciprocal %10 {approx = true} : vector<2x128xf32> -> vector<2x128xf32>
    %12 = arith.truncf %11 : vector<2x128xf32> to vector<2x128xbf16>
    %c0_7 = arith.constant 0 : index
    %c0_8 = arith.constant 0 : index
    %13 = vector.load %arg4[%c0_7, %c0_8] : memref<128x128xbf16, #tpu.memory_space<vmem>>, vector<128x128xbf16>
    %cst_9 = arith.constant dense<0.000000e+00> : vector<2x128xf32>
    %14 = tpu.matmul %12, %13, %cst_9 {dimension_numbers = #tpu.dot_dimension_numbers<[1], [0], [0], [1], [0, 0, 1, 1], [], []>} : vector<2x128xbf16>, vector<128x128xbf16>, vector<2x128xf32> -> vector<2x128xf32>
    %c0_10 = arith.constant 0 : index
    %c0_11 = arith.constant 0 : index
    %15 = vector.load %arg5[%c0_10, %c0_11] : memref<1x128xf32, #tpu.memory_space<vmem>>, vector<1x128xf32>
    %16 = vector.broadcast %15 : vector<1x128xf32> to vector<2x128xf32>
    %17 = arith.addf %14, %16 : vector<2x128xf32>
    %18 = arith.truncf %17 : vector<2x128xf32> to vector<2x128xbf16>
    %c0_12 = arith.constant 0 : index
    %c0_13 = arith.constant 0 : index
    %19 = vector.load %arg6[%c0_12, %c0_13] : memref<128x128xbf16, #tpu.memory_space<vmem>>, vector<128x128xbf16>
    %cst_14 = arith.constant dense<0.000000e+00> : vector<2x128xf32>
    %20 = tpu.matmul %18, %19, %cst_14 {dimension_numbers = #tpu.dot_dimension_numbers<[1], [0], [0], [1], [0, 0, 1, 1], [], []>} : vector<2x128xbf16>, vector<128x128xbf16>, vector<2x128xf32> -> vector<2x128xf32>
    %c0_15 = arith.constant 0 : index
    %c0_16 = arith.constant 0 : index
    %21 = vector.load %arg7[%c0_15, %c0_16] : memref<1x128xf32, #tpu.memory_space<vmem>>, vector<1x128xf32>
    %22 = vector.broadcast %21 : vector<1x128xf32> to vector<2x128xf32>
    %23 = arith.addf %20, %22 : vector<2x128xf32>
    %c0_17 = arith.constant 0 : index
    %c0_18 = arith.constant 0 : index
    %24 = vector.load %arg8[%c0_17, %c0_18] : memref<2x128xf32, #tpu.memory_space<vmem>>, vector<2x128xf32>
    tpu.vector_store %arg8[%c0_17, %c0_18], %23 {strides = array<i32>} : memref<2x128xf32, #tpu.memory_space<vmem>>, vector<2x128xf32>,
    return
  }
  func.func @transform_0(%arg0: i32) -> (i32, i32) {
    %c0_i32 = arith.constant 0 : i32
    %c0_i32_0 = arith.constant 0 : i32
    %c0_i32_1 = arith.constant 0 : i32
    return %c0_i32, %c0_i32_0 : i32, i32
  }
  func.func @transform_1(%arg0: i32) -> (i32, i32) {
    %c0_i32 = arith.constant 0 : i32
    %c0_i32_0 = arith.constant 0 : i32
    %c0_i32_1 = arith.constant 0 : i32
    return %c0_i32, %c0_i32_0 : i32, i32
  }
  func.func @transform_2(%arg0: i32) -> (i32, i32) {
    %c0_i32 = arith.constant 0 : i32
    %c0_i32_0 = arith.constant 0 : i32
    %c0_i32_1 = arith.constant 0 : i32
    return %c0_i32, %c0_i32_0 : i32, i32
  }
  func.func @transform_3(%arg0: i32) -> (i32, i32) {
    %c0_i32 = arith.constant 0 : i32
    %c0_i32_0 = arith.constant 0 : i32
    %c0_i32_1 = arith.constant 0 : i32
    return %c0_i32, %c0_i32_0 : i32, i32
  }
  func.func @transform_4(%arg0: i32) -> (i32, i32) {
    %c0_i32 = arith.constant 0 : i32
    %c0_i32_0 = arith.constant 0 : i32
    %c0_i32_1 = arith.constant 0 : i32
    return %c0_i32, %c0_i32_0 : i32, i32
  }
  func.func @transform_5(%arg0: i32) -> (i32, i32) {
    %c0_i32 = arith.constant 0 : i32
    %c0_i32_0 = arith.constant 0 : i32
    %c0_i32_1 = arith.constant 0 : i32
    return %c0_i32, %c0_i32_0 : i32, i32
  }
  func.func @transform_6(%arg0: i32) -> (i32, i32) {
    %c0_i32 = arith.constant 0 : i32
    %c0_i32_0 = arith.constant 0 : i32
    %c0_i32_1 = arith.constant 0 : i32
    return %c0_i32, %c0_i32_0 : i32, i32
  }
  func.func @transform_7(%arg0: i32) -> (i32, i32) {
    %c0_i32 = arith.constant 0 : i32
    %c0_i32_0 = arith.constant 0 : i32
    %c0_i32_1 = arith.constant 0 : i32
    return %c0_i32, %c0_i32_0 : i32, i32
  }
}

</mosaic_0001>

<llo_original>
// kernel: lenet_forward.3
$region0: #{lenet_forward.3}
  #allocation0 [shape = 'u32[]', space=smem, size = 0x4, offset = 0x4, fixed_abs, tag = 'smem constant byte address 0x4 - core index']
  #allocation1 [shape = 'u32[144,128]{1,0:T(1,128)}', space=vmem, size = 0x12000, scoped, tag = 'internal scratch']
  %s0 = inlined_call_operand.vmem [shape: bf16[2,4,196,32], index: 0, kind: input, shape index: {}]
  %s1 = inlined_call_operand.vmem [shape: bf16[32,128], index: 1, kind: input, shape index: {}]
  %s2 = inlined_call_operand.vmem [shape: f32[1,128], index: 2, kind: input, shape index: {}]
  %s3 = inlined_call_operand.vmem [shape: bf16[2,196,128], index: 3, kind: output, shape index: {}]
  %s4 = sld [smem:[#allocation0]]
  $region45: #{lenet_forward.3} parent=0
    _
  %s6 = ssub.s32 1, %s4
  %s7 = scalar_select 0, %s6, %s4
  loop: start=0, step=1, limit=4
  $region2: #{lenet_forward.3} parent=0 // loop_pre_header
    _
  $region3: #{lenet_forward.3} parent=0 // loop_header
    %s9 = sphi 0, %s13
    %p10 = scmp.ge.s32.totalorder %s9, 4
    %s19 = sphi 0, %s21
    %s22 = sphi 0, %s19
    %s23 = sphi 0, %s22
    %s39 = sphi 0, %s23
    %s43 = sphi 0, %s43
    %s45 = sphi 0, %s43
    %s46 = sphi 0, %s45
    %s60 = sphi 0, %s46
    %s64 = sphi 0, %s64
    %s66 = sphi 0, %s64
    %s67 = sphi 0, %s66
    %s81 = sphi 0, %s67
    %s87 = sphi 0, %s89
    %s90 = sphi 0, %s87
    %s91 = sphi 0, %s90
    %s107 = sphi 0, %s91
  $region4: #{lenet_forward.3} parent=0 // loop_header_branch
    %12 = sbr.rel (%p10) target = $region8
  $region5: #{lenet_forward.3} parent=0 // loop_body
    %s14 = ssub.s32 %s9, 1
    %s15 = ssub.s32 %s9, 2
    %s16 = sadd.s32 %s9, 1
    %s17 = ssub.s32 %s9, %s16
    %p18 = scmp.eq.s32.totalorder %s17, 0
    %s20 = sadd.s32 %s19, 1
    %s21 = scalar_select %p18, %s19, %s20
    %p24 = pneg %p18
    %p25 = scmp.eq.s32.totalorder %s9, 1
    %p26 = por %p24, %p25
    %p27 = scmp.ne.s32.totalorder %s19, %s22
    %p28 = scmp.eq.s32.totalorder %s9, 0
    %p29 = por %p27, %p28
    %p30 = scmp.ne.s32.totalorder %s19, %s22
    %p31 = scmp.eq.s32.totalorder %s14, 1
    %p32 = por %p30, %p31
    %p33 = scmp.ne.s32.totalorder %s22, %s23
    %p34 = scmp.eq.s32.totalorder %s14, 0
    %p35 = por %p33, %p34
    %p36 = scmp.ne.s32.totalorder %s22, %s23
    %p37 = scmp.eq.s32.totalorder %s15, 1
    %p38 = por %p36, %p37
    %p40 = scmp.ne.s32.totalorder %s23, %s39
    %p41 = scmp.eq.s32.totalorder %s15, 0
    %p42 = por %p40, %p41
    %s44 = sadd.s32 %s43, 1
    %p47 = scmp.eq.s32.totalorder %s9, 1
    %p48 = scmp.ne.s32.totalorder %s43, %s45
    %p49 = scmp.eq.s32.totalorder %s9, 0
    %p50 = por %p48, %p49
    %p51 = scmp.ne.s32.totalorder %s43, %s45
    %p52 = scmp.eq.s32.totalorder %s14, 1
    %p53 = por %p51, %p52
    %p54 = scmp.ne.s32.totalorder %s45, %s46
    %p55 = scmp.eq.s32.totalorder %s14, 0
    %p56 = por %p54, %p55
    %p57 = scmp.ne.s32.totalorder %s45, %s46
    %p58 = scmp.eq.s32.totalorder %s15, 1
    %p59 = por %p57, %p58
    %p61 = scmp.ne.s32.totalorder %s46, %s60
    %p62 = scmp.eq.s32.totalorder %s15, 0
    %p63 = por %p61, %p62
    %s65 = sadd.s32 %s64, 1
    %p68 = scmp.eq.s32.totalorder %s9, 1
    %p69 = scmp.ne.s32.totalorder %s64, %s66
    %p70 = scmp.eq.s32.totalorder %s9, 0
    %p71 = por %p69, %p70
    %p72 = scmp.ne.s32.totalorder %s64, %s66
    %p73 = scmp.eq.s32.totalorder %s14, 1
    %p74 = por %p72, %p73
    %p75 = scmp.ne.s32.totalorder %s66, %s67
    %p76 = scmp.eq.s32.totalorder %s14, 0
    %p77 = por %p75, %p76
    %p78 = scmp.ne.s32.totalorder %s66, %s67
    %p79 = scmp.eq.s32.totalorder %s15, 1
    %p80 = por %p78, %p79
    %p82 = scmp.ne.s32.totalorder %s67, %s81
    %p83 = scmp.eq.s32.totalorder %s15, 0
    %p84 = por %p82, %p83
    %s85 = ssub.s32 %s9, %s16
    %p86 = scmp.eq.s32.totalorder %s85, 0
    %s88 = sadd.s32 %s87, 1
    %s89 = scalar_select %p86, %s87, %s88
    %p92 = pneg %p86
    %p93 = scmp.eq.s32.totalorder %s9, 1
    %p94 = por %p92, %p93
    %p95 = scmp.ne.s32.totalorder %s87, %s90
    %p96 = scmp.eq.s32.totalorder %s9, 0
    %p97 = por %p95, %p96
    %p98 = scmp.ne.s32.totalorder %s87, %s90
    %p99 = scmp.eq.s32.totalorder %s14, 1
    %p100 = por %p98, %p99
    %p101 = scmp.ne.s32.totalorder %s90, %s91
    %p102 = scmp.eq.s32.totalorder %s14, 0
    %p103 = por %p101, %p102
    %p104 = scmp.ne.s32.totalorder %s90, %s91
    %p105 = scmp.eq.s32.totalorder %s15, 1
    %p106 = por %p104, %p105
    %p108 = scmp.ne.s32.totalorder %s91, %s107
    %p109 = scmp.eq.s32.totalorder %s15, 0
    %p110 = por %p108, %p109
    %p111 = scmp.le.s32.totalorder 1, %s9
    %p112 = scmp.lt.s32.totalorder %s9, 3
    %p113 = pnand %p111, %p112
    %p114 = pneg %p113
    // Predicated region
    $region9: #{lenet_forward.3} parent=5 // pred_check
      _
    $region10: #{lenet_forward.3} parent=5 // pred_check_branch
      %116 = sbr.rel (%p113) target = $region12
    $region11: #{lenet_forward.3} parent=5 // pred_region
      %s117 = ssub.s32 %s9, 1
      // Predicated region
      $region13: #{lenet_forward.3} parent=11 // pred_check
        %p118 = pneg %p56
      $region14: #{lenet_forward.3} parent=11 // pred_check_branch
        %120 = sbr.rel (%p118) target = $region16
      $region15: #{lenet_forward.3} parent=11 // pred_region
        _
      $region16: #{lenet_forward.3} parent=11 // pred_fallthru
        _
      // Predicated region
      $region17: #{lenet_forward.3} parent=11 // pred_check
        %p121 = pneg %p77
      $region18: #{lenet_forward.3} parent=11 // pred_check_branch
        %123 = sbr.rel (%p121) target = $region20
      $region19: #{lenet_forward.3} parent=11 // pred_region
        _
      $region20: #{lenet_forward.3} parent=11 // pred_fallthru
        _
    $region12: #{lenet_forward.3} parent=5 // pred_fallthru
      _
    %p124 = scmp.lt.s32.totalorder %s9, 2
    // Predicated region
    $region21: #{lenet_forward.3} parent=5 // pred_check
      %p125 = pneg %p124
    $region22: #{lenet_forward.3} parent=5 // pred_check_branch
      %127 = sbr.rel (%p125) target = $region24
    $region23: #{lenet_forward.3} parent=5 // pred_region
      // Predicated region
      $region25: #{lenet_forward.3} parent=23 // pred_check
        %p128 = pneg %p29
      $region26: #{lenet_forward.3} parent=23 // pred_check_branch
        %130 = sbr.rel (%p128) target = $region28
      $region27: #{lenet_forward.3} parent=23 // pred_region
        %p131 = scmp.lt.s32.totalorder %s9, 1
        %s132 = scalar_select %p131, %s9, 1
        %s133 = smul.addr %s132, 100
        %s134 = smul.addr %s133, 4
        %s135 = scalar_lea.vmem %s0, %s134
      $region28: #{lenet_forward.3} parent=23 // pred_fallthru
        _
    $region24: #{lenet_forward.3} parent=5 // pred_fallthru
      _
    %p136 = scmp.le.s32.totalorder 1, %s9
    %p137 = scmp.lt.s32.totalorder %s9, 3
    %p138 = pnand %p136, %p137
    %p139 = pneg %p138
    // Predicated region
    $region29: #{lenet_forward.3} parent=5 // pred_check
      _
    $region30: #{lenet_forward.3} parent=5 // pred_check_branch
      %141 = sbr.rel (%p138) target = $region32
    $region31: #{lenet_forward.3} parent=5 // pred_region
      %s142 = ssub.s32 %s9, 1
      %p143 = scmp.lt.s32.totalorder %s14, 1
      %s144 = scalar_select %p143, %s14, 1
      %s145 = smul.addr %s144, 100
      %s146 = smul.addr %s145, 4
      %s147 = scalar_lea.vmem %s0, %s146
      %p148 = pneg %p35
      %p149 = pneg %p32
      %p150 = pneg %p56
      %p151 = pneg %p53
      %p152 = pneg %p77
      %p153 = pneg %p74
      %p154 = pneg %p103
      %p155 = pneg %p100
      %p156 = scmp.lt.s32.totalorder %s14, 1
      %s157 = scalar_select %p156, %s14, 1
      %s158 = smul.addr %s157, 25
      %s159 = smul.addr %s158, 4
      %s160 = scalar_lea.vmem %s3, %s159
      %p161 = scmp.lt.s32.totalorder %s14, 1
      %s162 = scalar_select %p161, %s14, 1
      %s163 = smul.addr %s162, 100
      %s164 = smul.addr %s163, 4
      %s165 = scalar_lea.vmem %s0, %s164
      %p166 = scmp.lt.s32.totalorder %s14, 1
      %s167 = scalar_select %p166, %s14, 1
      %s168 = smul.addr %s167, 25
      %s169 = smul.addr %s168, 4
      %s170 = scalar_lea.vmem %s3, %s169
      %v172 = vld [vmem:[%s1] sm:$0xf]
      %v173 = vld [vmem:[%s1 + $0x4] sm:$0xf]
      %v174 = vld [vmem:[%s1 + $0x8] sm:$0xf]
      %v175 = vld [vmem:[%s1 + $0xc] sm:$0xf]
      %v176 = vld [vmem:[%s2] sm:$0x1]
      %v177 = vld [vmem:[%s165] sm:$0xf]
      %v178 = vld [vmem:[%s165 + $0x4] sm:$0xf]
      %v179 = vld [vmem:[%s165 + $0x8] sm:$0xf]
      %v180 = vld [vmem:[%s165 + $0xc] sm:$0xf]
      %v181 = vld [vmem:[%s165 + $0x10] sm:$0xf]
      %v182 = vld [vmem:[%s165 + $0x14] sm:$0xf]
      %v183 = vld [vmem:[%s165 + $0x18] sm:$0xf]
      %v184 = vld [vmem:[%s165 + $0x1c] sm:$0xf]
      %v185 = vld [vmem:[%s165 + $0x20] sm:$0xf]
      %v186 = vld [vmem:[%s165 + $0x24] sm:$0xf]
      %v187 = vld [vmem:[%s165 + $0x28] sm:$0xf]
      %v188 = vld [vmem:[%s165 + $0x2c] sm:$0xf]
      %v189 = vld [vmem:[%s165 + $0x30] sm:$0xf]
      %v190 = vld [vmem:[%s165 + $0x34] sm:$0xf]
      %v191 = vld [vmem:[%s165 + $0x38] sm:$0xf]
      %v192 = vld [vmem:[%s165 + $0x3c] sm:$0xf]
      %v193 = vld [vmem:[%s165 + $0x40] sm:$0xf]
      %v194 = vld [vmem:[%s165 + $0x44] sm:$0xf]
      %v195 = vld [vmem:[%s165 + $0x48] sm:$0xf]
      %v196 = vld [vmem:[%s165 + $0x4c] sm:$0xf]
      %v197 = vld [vmem:[%s165 + $0x50] sm:$0xf]
      %v198 = vld [vmem:[%s165 + $0x54] sm:$0xf]
      %v199 = vld [vmem:[%s165 + $0x58] sm:$0xf]
      %v200 = vld [vmem:[%s165 + $0x5c] sm:$0xf]
      %v201 = vld [vmem:[%s165 + $0x60] sm:$0x3]
      %v203 = vlaneseq
      %v204 = vshrl.u32 %v203, 7
      %v205 = vsub.s32 0, %v204
      %v206 = vrot.slane %v176, %v205
      %v233 = vunpack.c.l.b16 %v177
      %v234 = vunpack.c.l.b16 %v178
      %v235 = vunpack.c.l.b16 %v179
      %v236 = vunpack.c.l.b16 %v180
      %v237 = vunpack.c.l.b16 %v181
      %v238 = vunpack.c.l.b16 %v182
      %v239 = vunpack.c.l.b16 %v183
      %v240 = vunpack.c.l.b16 %v184
      %v241 = vunpack.c.l.b16 %v185
      %v242 = vunpack.c.l.b16 %v186
      %v243 = vunpack.c.l.b16 %v187
      %v244 = vunpack.c.l.b16 %v188
      %v245 = vunpack.c.l.b16 %v189
      %v246 = vunpack.c.l.b16 %v190
      %v247 = vunpack.c.l.b16 %v191
      %v248 = vunpack.c.l.b16 %v192
      %v249 = vunpack.c.l.b16 %v193
      %v250 = vunpack.c.l.b16 %v194
      %v251 = vunpack.c.l.b16 %v195
      %v252 = vunpack.c.l.b16 %v196
      %v253 = vunpack.c.l.b16 %v197
      %v254 = vunpack.c.l.b16 %v198
      %v255 = vunpack.c.l.b16 %v199
      %v256 = vunpack.c.l.b16 %v200
      %v257 = vunpack.c.l.b16 %v201
      %v258 = vpack.c.b16 %v234, %v233
      %v259 = vpack.c.b16 %v236, %v235
      %v260 = vpack.c.b16 %v238, %v237
      %v261 = vpack.c.b16 %v240, %v239
      %v262 = vpack.c.b16 %v242, %v241
      %v263 = vpack.c.b16 %v244, %v243
      %v264 = vpack.c.b16 %v246, %v245
      %v265 = vpack.c.b16 %v248, %v247
      %v266 = vpack.c.b16 %v250, %v249
      %v267 = vpack.c.b16 %v252, %v251
      %v268 = vpack.c.b16 %v254, %v253
      %v269 = vpack.c.b16 %v256, %v255
      %v270 = vpack.c.b16 %v257, %v257
      %v275 = vunpack.c.l.b16 %v172
      %v276 = vunpack.c.l.b16 %v173
      %v277 = vunpack.c.l.b16 %v174
      %v278 = vunpack.c.l.b16 %v175
      %v279 = vpack.c.b16 %v276, %v275
      %v280 = vpack.c.b16 %v278, %v277
      %vm283 = vcmask 261120
      %v285 = vsel %vm283, %v258, 0
      %v288 = vsel %vm283, %v259, 0
      %v291 = vsel %vm283, %v260, 0
      %v294 = vsel %vm283, %v261, 0
      %v297 = vsel %vm283, %v262, 0
      %v300 = vsel %vm283, %v263, 0
      %v303 = vsel %vm283, %v264, 0
      %v306 = vsel %vm283, %v265, 0
      %v309 = vsel %vm283, %v266, 0
      %v312 = vsel %vm283, %v267, 0
      %v315 = vsel %vm283, %v268, 0
      %v318 = vsel %vm283, %v269, 0
      %v321 = vsel %vm283, %v270, 0
      %323 = vmatprep.subr.bf16.mxu0 0
      %324 = vmatpush1.bf16.msra.mxu0 0
      %325 = vmatprep.subr.bf16.mxu0 0
      %326 = vmatpush1.bf16.msra.mxu0 0
      %327 = vmatprep.subr.bf16.mxu0 0
      %328 = vmatpush1.bf16.msra.mxu0 0
      %329 = vmatprep.subr.bf16.mxu0 0
      %330 = vmatpush1.bf16.msra.mxu0 0
      %331 = vmatprep.subr.bf16.mxu0 0
      %332 = vmatpush1.bf16.msra.mxu0 0
      %333 = vmatprep.subr.bf16.mxu0 0
      %334 = vmatpush1.bf16.msra.mxu0 0
      %335 = vmatprep.subr.bf16.mxu0 0
      %336 = vmatpush1.bf16.msra.mxu0 %v280
      %337 = vmatprep.subr.bf16.mxu0 0
      %338 = vmatpush1.bf16.msra.mxu0 %v279
      %339 = vmatprep.subr.bf16.mxu0 0
      %340 = vmatpush2.bf16.msra.mxu0 0
      %341 = vmatprep.subr.bf16.mxu0 0
      %342 = vmatpush2.bf16.msra.mxu0 0
      %343 = vmatprep.subr.bf16.mxu0 0
      %344 = vmatpush2.bf16.msra.mxu0 0
      %345 = vmatprep.subr.bf16.mxu0 0
      %346 = vmatpush2.bf16.msra.mxu0 0
      %347 = vmatprep.subr.bf16.mxu0 0
      %348 = vmatpush2.bf16.msra.mxu0 0
      %349 = vmatprep.subr.bf16.mxu0 0
      %350 = vmatpush2.bf16.msra.mxu0 0
      %351 = vmatprep.subr.bf16.mxu0 0
      %352 = vmatpush2.bf16.msra.mxu0 0
      %353 = vmatprep.subr.bf16.mxu0 0
      %354 = vmatpush2.bf16.msra.mxu0 0
      %355 = vmatprep.mubr.bf16.mxu0 0
      %356 = vmatmul.mubr.bf16.gmra.mxu0 %v285
      %v357 = vpop.f32.mrf.mxu0
      %v358 = vadd.f32 %v206, %v357
      %v359 = vpop.f32.mrf.mxu0
      %v360 = vpop.f32.mrf.mxu0
      %v361 = vadd.f32 %v206, %v360
      %v362 = vpop.f32.mrf.mxu0
      %363 = vmatprep.mubr.bf16.mxu0 0
      %364 = vmatmul.mubr.bf16.gmra.mxu0 %v288
      %v365 = vpop.f32.mrf.mxu0
      %v366 = vadd.f32 %v206, %v365
      %v367 = vpop.f32.mrf.mxu0
      %v368 = vpop.f32.mrf.mxu0
      %v369 = vadd.f32 %v206, %v368
      %v370 = vpop.f32.mrf.mxu0
      %371 = vmatprep.mubr.bf16.mxu0 0
      %372 = vmatmul.mubr.bf16.gmra.mxu0 %v291
      %v373 = vpop.f32.mrf.mxu0
      %v374 = vadd.f32 %v206, %v373
      %v375 = vpop.f32.mrf.mxu0
      %v376 = vpop.f32.mrf.mxu0
      %v377 = vadd.f32 %v206, %v376
      %v378 = vpop.f32.mrf.mxu0
      %379 = vmatprep.mubr.bf16.mxu0 0
      %380 = vmatmul.mubr.bf16.gmra.mxu0 %v294
      %v381 = vpop.f32.mrf.mxu0
      %v382 = vadd.f32 %v206, %v381
      %v383 = vpop.f32.mrf.mxu0
      %v384 = vpop.f32.mrf.mxu0
      %v385 = vadd.f32 %v206, %v384
      %v386 = vpop.f32.mrf.mxu0
      %387 = vmatprep.mubr.bf16.mxu0 0
      %388 = vmatmul.mubr.bf16.gmra.mxu0 %v297
      %v389 = vpop.f32.mrf.mxu0
      %v390 = vadd.f32 %v206, %v389
      %v391 = vpop.f32.mrf.mxu0
      %v392 = vpop.f32.mrf.mxu0
      %v393 = vadd.f32 %v206, %v392
      %v394 = vpop.f32.mrf.mxu0
      %395 = vmatprep.mubr.bf16.mxu0 0
      %396 = vmatmul.mubr.bf16.gmra.mxu0 %v300
      %v397 = vpop.f32.mrf.mxu0
      %v398 = vadd.f32 %v206, %v397
      %v399 = vpop.f32.mrf.mxu0
      %v400 = vpop.f32.mrf.mxu0
      %v401 = vadd.f32 %v206, %v400
      %v402 = vpop.f32.mrf.mxu0
      %403 = vmatprep.mubr.bf16.mxu0 0
      %404 = vmatmul.mubr.bf16.gmra.mxu0 %v303
      %v405 = vpop.f32.mrf.mxu0
      %v406 = vadd.f32 %v206, %v405
      %v407 = vpop.f32.mrf.mxu0
      %v408 = vpop.f32.mrf.mxu0
      %v409 = vadd.f32 %v206, %v408
      %v410 = vpop.f32.mrf.mxu0
      %411 = vmatprep.mubr.bf16.mxu0 0
      %412 = vmatmul.mubr.bf16.gmra.mxu0 %v306
      %v413 = vpop.f32.mrf.mxu0
      %v414 = vadd.f32 %v206, %v413
      %v415 = vpop.f32.mrf.mxu0
      %v416 = vpop.f32.mrf.mxu0
      %v417 = vadd.f32 %v206, %v416
      %v418 = vpop.f32.mrf.mxu0
      %419 = vmatprep.mubr.bf16.mxu0 0
      %420 = vmatmul.mubr.bf16.gmra.mxu0 %v309
      %v421 = vpop.f32.mrf.mxu0
      %v422 = vadd.f32 %v206, %v421
      %v423 = vpop.f32.mrf.mxu0
      %v424 = vpop.f32.mrf.mxu0
      %v425 = vadd.f32 %v206, %v424
      %v426 = vpop.f32.mrf.mxu0
      %427 = vmatprep.mubr.bf16.mxu0 0
      %428 = vmatmul.mubr.bf16.gmra.mxu0 %v312
      %v429 = vpop.f32.mrf.mxu0
      %v430 = vadd.f32 %v206, %v429
      %v431 = vpop.f32.mrf.mxu0
      %v432 = vpop.f32.mrf.mxu0
      %v433 = vadd.f32 %v206, %v432
      %v434 = vpop.f32.mrf.mxu0
      %435 = vmatprep.mubr.bf16.mxu0 0
      %436 = vmatmul.mubr.bf16.gmra.mxu0 %v315
      %v437 = vpop.f32.mrf.mxu0
      %v438 = vadd.f32 %v206, %v437
      %v439 = vpop.f32.mrf.mxu0
      %v440 = vpop.f32.mrf.mxu0
      %v441 = vadd.f32 %v206, %v440
      %v442 = vpop.f32.mrf.mxu0
      %443 = vmatprep.mubr.bf16.mxu0 0
      %444 = vmatmul.mubr.bf16.gmra.mxu0 %v318
      %v445 = vpop.f32.mrf.mxu0
      %v446 = vadd.f32 %v206, %v445
      %v447 = vpop.f32.mrf.mxu0
      %v448 = vpop.f32.mrf.mxu0
      %v449 = vadd.f32 %v206, %v448
      %v450 = vpop.f32.mrf.mxu0
      %451 = vmatprep.mubr.bf16.mxu0 0
      %452 = vmatmul.mubr.bf16.gmra.mxu0 %v321
      %v453 = vpop.f32.mrf.mxu0
      %v454 = vadd.f32 %v206, %v453
      %v455 = vpop.f32.mrf.mxu0
      %v456 = vpop.f32.mrf.mxu0
      %v457 = vpop.f32.mrf.mxu0
      %458 = vdwg.mxu0
      %v459 = vsub.f32 0.0, %v358
      %v460 = vsub.f32 0.0, %v361
      %v461 = vsub.f32 0.0, %v366
      %v462 = vsub.f32 0.0, %v369
      %v463 = vsub.f32 0.0, %v374
      %v464 = vsub.f32 0.0, %v377
      %v465 = vsub.f32 0.0, %v382
      %v466 = vsub.f32 0.0, %v385
      %v467 = vsub.f32 0.0, %v390
      %v468 = vsub.f32 0.0, %v393
      %v469 = vsub.f32 0.0, %v398
      %v470 = vsub.f32 0.0, %v401
      %v471 = vsub.f32 0.0, %v406
      %v472 = vsub.f32 0.0, %v409
      %v473 = vsub.f32 0.0, %v414
      %v474 = vsub.f32 0.0, %v417
      %v475 = vsub.f32 0.0, %v422
      %v476 = vsub.f32 0.0, %v425
      %v477 = vsub.f32 0.0, %v430
      %v478 = vsub.f32 0.0, %v433
      %v479 = vsub.f32 0.0, %v438
      %v480 = vsub.f32 0.0, %v441
      %v481 = vsub.f32 0.0, %v446
      %v482 = vsub.f32 0.0, %v449
      %v483 = vsub.f32 0.0, %v454
      %v484 = vmul.f32 %v459, 1.442695
      %v485 = vpow.pop %v484
      %v486 = vmul.f32 %v460, 1.442695
      %v487 = vpow.pop %v486
      %v488 = vmul.f32 %v461, 1.442695
      %v489 = vpow.pop %v488
      %v490 = vmul.f32 %v462, 1.442695
      %v491 = vpow.pop %v490
      %v492 = vmul.f32 %v463, 1.442695
      %v493 = vpow.pop %v492
      %v494 = vmul.f32 %v464, 1.442695
      %v495 = vpow.pop %v494
      %v496 = vmul.f32 %v465, 1.442695
      %v497 = vpow.pop %v496
      %v498 = vmul.f32 %v466, 1.442695
      %v499 = vpow.pop %v498
      %v500 = vmul.f32 %v467, 1.442695
      %v501 = vpow.pop %v500
      %v502 = vmul.f32 %v468, 1.442695
      %v503 = vpow.pop %v502
      %v504 = vmul.f32 %v469, 1.442695
      %v505 = vpow.pop %v504
      %v506 = vmul.f32 %v470, 1.442695
      %v507 = vpow.pop %v506
      %v508 = vmul.f32 %v471, 1.442695
      %v509 = vpow.pop %v508
      %v510 = vmul.f32 %v472, 1.442695
      %v511 = vpow.pop %v510
      %v512 = vmul.f32 %v473, 1.442695
      %v513 = vpow.pop %v512
      %v514 = vmul.f32 %v474, 1.442695
      %v515 = vpow.pop %v514
      %v516 = vmul.f32 %v475, 1.442695
      %v517 = vpow.pop %v516
      %v518 = vmul.f32 %v476, 1.442695
      %v519 = vpow.pop %v518
      %v520 = vmul.f32 %v477, 1.442695
      %v521 = vpow.pop %v520
      %v522 = vmul.f32 %v478, 1.442695
      %v523 = vpow.pop %v522
      %v524 = vmul.f32 %v479, 1.442695
      %v525 = vpow.pop %v524
      %v526 = vmul.f32 %v480, 1.442695
      %v527 = vpow.pop %v526
      %v528 = vmul.f32 %v481, 1.442695
      %v529 = vpow.pop %v528
      %v530 = vmul.f32 %v482, 1.442695
      %v531 = vpow.pop %v530
      %v532 = vmul.f32 %v483, 1.442695
      %v533 = vpow.pop %v532
      %v534 = vadd.f32 %v485, 1.0
      %v535 = vadd.f32 %v487, 1.0
      %v536 = vadd.f32 %v489, 1.0
      %v537 = vadd.f32 %v491, 1.0
      %v538 = vadd.f32 %v493, 1.0
      %v539 = vadd.f32 %v495, 1.0
      %v540 = vadd.f32 %v497, 1.0
      %v541 = vadd.f32 %v499, 1.0
      %v542 = vadd.f32 %v501, 1.0
      %v543 = vadd.f32 %v503, 1.0
      %v544 = vadd.f32 %v505, 1.0
      %v545 = vadd.f32 %v507, 1.0
      %v546 = vadd.f32 %v509, 1.0
      %v547 = vadd.f32 %v511, 1.0
      %v548 = vadd.f32 %v513, 1.0
      %v549 = vadd.f32 %v515, 1.0
      %v550 = vadd.f32 %v517, 1.0
      %v551 = vadd.f32 %v519, 1.0
      %v552 = vadd.f32 %v521, 1.0
      %v553 = vadd.f32 %v523, 1.0
      %v554 = vadd.f32 %v525, 1.0
      %v555 = vadd.f32 %v527, 1.0
      %v556 = vadd.f32 %v529, 1.0
      %v557 = vadd.f32 %v531, 1.0
      %v558 = vadd.f32 %v533, 1.0
      %v559 = vrcp.pop %v534
      %v560 = vrcp.pop %v535
      %v561 = vrcp.pop %v536
      %v562 = vrcp.pop %v537
      %v563 = vrcp.pop %v538
      %v564 = vrcp.pop %v539
      %v565 = vrcp.pop %v540
      %v566 = vrcp.pop %v541
      %v567 = vrcp.pop %v542
      %v568 = vrcp.pop %v543
      %v569 = vrcp.pop %v544
      %v570 = vrcp.pop %v545
      %v571 = vrcp.pop %v546
      %v572 = vrcp.pop %v547
      %v573 = vrcp.pop %v548
      %v574 = vrcp.pop %v549
      %v575 = vrcp.pop %v550
      %v576 = vrcp.pop %v551
      %v577 = vrcp.pop %v552
      %v578 = vrcp.pop %v553
      %v579 = vrcp.pop %v554
      %v580 = vrcp.pop %v555
      %v581 = vrcp.pop %v556
      %v582 = vrcp.pop %v557
      %v583 = vrcp.pop %v558
      %v584 = vadd.f32 %v559, 0.0
      %v585 = vadd.f32 %v560, 0.0
      %v586 = vadd.f32 %v561, 0.0
      %v587 = vadd.f32 %v562, 0.0
      %v588 = vadd.f32 %v563, 0.0
      %v589 = vadd.f32 %v564, 0.0
      %v590 = vadd.f32 %v565, 0.0
      %v591 = vadd.f32 %v566, 0.0
      %v592 = vadd.f32 %v567, 0.0
      %v593 = vadd.f32 %v568, 0.0
      %v594 = vadd.f32 %v569, 0.0
      %v595 = vadd.f32 %v570, 0.0
      %v596 = vadd.f32 %v571, 0.0
      %v597 = vadd.f32 %v572, 0.0
      %v598 = vadd.f32 %v573, 0.0
      %v599 = vadd.f32 %v574, 0.0
      %v600 = vadd.f32 %v575, 0.0
      %v601 = vadd.f32 %v576, 0.0
      %v602 = vadd.f32 %v577, 0.0
      %v603 = vadd.f32 %v578, 0.0
      %v604 = vadd.f32 %v579, 0.0
      %v605 = vadd.f32 %v580, 0.0
      %v606 = vadd.f32 %v581, 0.0
      %v607 = vadd.f32 %v582, 0.0
      %v608 = vadd.f32 %v583, 0.0
      %s609 = scalar_lea.vmem %s165, 100
      %v610 = vld [vmem:[%s609] sm:$0xf]
      %v611 = vld [vmem:[%s609 + $0x4] sm:$0xf]
      %v612 = vld [vmem:[%s609 + $0x8] sm:$0xf]
      %v613 = vld [vmem:[%s609 + $0xc] sm:$0xf]
      %v614 = vld [vmem:[%s609 + $0x10] sm:$0xf]
      %v615 = vld [vmem:[%s609 + $0x14] sm:$0xf]
      %v616 = vld [vmem:[%s609 + $0x18] sm:$0xf]
      %v617 = vld [vmem:[%s609 + $0x1c] sm:$0xf]
      %v618 = vld [vmem:[%s609 + $0x20] sm:$0xf]
      %v619 = vld [vmem:[%s609 + $0x24] sm:$0xf]
      %v620 = vld [vmem:[%s609 + $0x28] sm:$0xf]
      %v621 = vld [vmem:[%s609 + $0x2c] sm:$0xf]
      %v622 = vld [vmem:[%s609 + $0x30] sm:$0xf]
      %v623 = vld [vmem:[%s609 + $0x34] sm:$0xf]
      %v624 = vld [vmem:[%s609 + $0x38] sm:$0xf]
      %v625 = vld [vmem:[%s609 + $0x3c] sm:$0xf]
      %v626 = vld [vmem:[%s609 + $0x40] sm:$0xf]
      %v627 = vld [vmem:[%s609 + $0x44] sm:$0xf]
      %v628 = vld [vmem:[%s609 + $0x48] sm:$0xf]
      %v629 = vld [vmem:[%s609 + $0x4c] sm:$0xf]
      %v630 = vld [vmem:[%s609 + $0x50] sm:$0xf]
      %v631 = vld [vmem:[%s609 + $0x54] sm:$0xf]
      %v632 = vld [vmem:[%s609 + $0x58] sm:$0xf]
      %v633 = vld [vmem:[%s609 + $0x5c] sm:$0xf]
      %v634 = vld [vmem:[%s609 + $0x60] sm:$0x3]
      %v660 = vunpack.c.l.b16 %v610
      %v661 = vunpack.c.l.b16 %v611
      %v662 = vunpack.c.l.b16 %v612
      %v663 = vunpack.c.l.b16 %v613
      %v664 = vunpack.c.l.b16 %v614
      %v665 = vunpack.c.l.b16 %v615
      %v666 = vunpack.c.l.b16 %v616
      %v667 = vunpack.c.l.b16 %v617
      %v668 = vunpack.c.l.b16 %v618
      %v669 = vunpack.c.l.b16 %v619
      %v670 = vunpack.c.l.b16 %v620
      %v671 = vunpack.c.l.b16 %v621
      %v672 = vunpack.c.l.b16 %v622
      %v673 = vunpack.c.l.b16 %v623
      %v674 = vunpack.c.l.b16 %v624
      %v675 = vunpack.c.l.b16 %v625
      %v676 = vunpack.c.l.b16 %v626
      %v677 = vunpack.c.l.b16 %v627
      %v678 = vunpack.c.l.b16 %v628
      %v679 = vunpack.c.l.b16 %v629
      %v680 = vunpack.c.l.b16 %v630
      %v681 = vunpack.c.l.b16 %v631
      %v682 = vunpack.c.l.b16 %v632
      %v683 = vunpack.c.l.b16 %v633
      %v684 = vunpack.c.l.b16 %v634
      %v685 = vpack.c.b16 %v661, %v660
      %v686 = vpack.c.b16 %v663, %v662
      %v687 = vpack.c.b16 %v665, %v664
      %v688 = vpack.c.b16 %v667, %v666
      %v689 = vpack.c.b16 %v669, %v668
      %v690 = vpack.c.b16 %v671, %v670
      %v691 = vpack.c.b16 %v673, %v672
      %v692 = vpack.c.b16 %v675, %v674
      %v693 = vpack.c.b16 %v677, %v676
      %v694 = vpack.c.b16 %v679, %v678
      %v695 = vpack.c.b16 %v681, %v680
      %v696 = vpack.c.b16 %v683, %v682
      %v697 = vpack.c.b16 %v684, %v684
      %v699 = vsel %vm283, %v685, 0
      %v702 = vsel %vm283, %v686, 0
      %v705 = vsel %vm283, %v687, 0
      %v708 = vsel %vm283, %v688, 0
      %v711 = vsel %vm283, %v689, 0
      %v714 = vsel %vm283, %v690, 0
      %v717 = vsel %vm283, %v691, 0
      %v720 = vsel %vm283, %v692, 0
      %v723 = vsel %vm283, %v693, 0
      %v726 = vsel %vm283, %v694, 0
      %v729 = vsel %vm283, %v695, 0
      %v732 = vsel %vm283, %v696, 0
      %v735 = vsel %vm283, %v697, 0
      %737 = vmatprep.subr.bf16.mxu0 0
      %738 = vmatpush1.bf16.msra.mxu0 0
      %739 = vmatprep.subr.bf16.mxu0 0
      %740 = vmatpush1.bf16.msra.mxu0 0
      %741 = vmatprep.subr.bf16.mxu0 0
      %742 = vmatpush1.bf16.msra.mxu0 0
      %743 = vmatprep.subr.bf16.mxu0 0
      %744 = vmatpush1.bf16.msra.mxu0 0
      %745 = vmatprep.subr.bf16.mxu0 0
      %746 = vmatpush1.bf16.msra.mxu0 0
      %747 = vmatprep.subr.bf16.mxu0 0
      %748 = vmatpush1.bf16.msra.mxu0 0
      %749 = vmatprep.subr.bf16.mxu0 0
      %750 = vmatpush1.bf16.msra.mxu0 %v280
      %751 = vmatprep.subr.bf16.mxu0 0
      %752 = vmatpush1.bf16.msra.mxu0 %v279
      %753 = vmatprep.subr.bf16.mxu0 0
      %754 = vmatpush2.bf16.msra.mxu0 0
      %755 = vmatprep.subr.bf16.mxu0 0
      %756 = vmatpush2.bf16.msra.mxu0 0
      %757 = vmatprep.subr.bf16.mxu0 0
      %758 = vmatpush2.bf16.msra.mxu0 0
      %759 = vmatprep.subr.bf16.mxu0 0
      %760 = vmatpush2.bf16.msra.mxu0 0
      %761 = vmatprep.subr.bf16.mxu0 0
      %762 = vmatpush2.bf16.msra.mxu0 0
      %763 = vmatprep.subr.bf16.mxu0 0
      %764 = vmatpush2.bf16.msra.mxu0 0
      %765 = vmatprep.subr.bf16.mxu0 0
      %766 = vmatpush2.bf16.msra.mxu0 0
      %767 = vmatprep.subr.bf16.mxu0 0
      %768 = vmatpush2.bf16.msra.mxu0 0
      %769 = vmatprep.mubr.bf16.mxu0 0
      %770 = vmatmul.mubr.bf16.gmra.mxu0 %v699
      %v771 = vpop.f32.mrf.mxu0
      %v772 = vadd.f32 %v206, %v771
      %v773 = vpop.f32.mrf.mxu0
      %v774 = vpop.f32.mrf.mxu0
      %v775 = vadd.f32 %v206, %v774
      %v776 = vpop.f32.mrf.mxu0
      %777 = vmatprep.mubr.bf16.mxu0 0
      %778 = vmatmul.mubr.bf16.gmra.mxu0 %v702
      %v779 = vpop.f32.mrf.mxu0
      %v780 = vadd.f32 %v206, %v779
      %v781 = vpop.f32.mrf.mxu0
      %v782 = vpop.f32.mrf.mxu0
      %v783 = vadd.f32 %v206, %v782
      %v784 = vpop.f32.mrf.mxu0
      %785 = vmatprep.mubr.bf16.mxu0 0
      %786 = vmatmul.mubr.bf16.gmra.mxu0 %v705
      %v787 = vpop.f32.mrf.mxu0
      %v788 = vadd.f32 %v206, %v787
      %v789 = vpop.f32.mrf.mxu0
      %v790 = vpop.f32.mrf.mxu0
      %v791 = vadd.f32 %v206, %v790
      %v792 = vpop.f32.mrf.mxu0
      %793 = vmatprep.mubr.bf16.mxu0 0
      %794 = vmatmul.mubr.bf16.gmra.mxu0 %v708
      %v795 = vpop.f32.mrf.mxu0
      %v796 = vadd.f32 %v206, %v795
      %v797 = vpop.f32.mrf.mxu0
      %v798 = vpop.f32.mrf.mxu0
      %v799 = vadd.f32 %v206, %v798
      %v800 = vpop.f32.mrf.mxu0
      %801 = vmatprep.mubr.bf16.mxu0 0
      %802 = vmatmul.mubr.bf16.gmra.mxu0 %v711
      %v803 = vpop.f32.mrf.mxu0
      %v804 = vadd.f32 %v206, %v803
      %v805 = vpop.f32.mrf.mxu0
      %v806 = vpop.f32.mrf.mxu0
      %v807 = vadd.f32 %v206, %v806
      %v808 = vpop.f32.mrf.mxu0
      %809 = vmatprep.mubr.bf16.mxu0 0
      %810 = vmatmul.mubr.bf16.gmra.mxu0 %v714
      %v811 = vpop.f32.mrf.mxu0
      %v812 = vadd.f32 %v206, %v811
      %v813 = vpop.f32.mrf.mxu0
      %v814 = vpop.f32.mrf.mxu0
      %v815 = vadd.f32 %v206, %v814
      %v816 = vpop.f32.mrf.mxu0
      %817 = vmatprep.mubr.bf16.mxu0 0
      %818 = vmatmul.mubr.bf16.gmra.mxu0 %v717
      %v819 = vpop.f32.mrf.mxu0
      %v820 = vadd.f32 %v206, %v819
      %v821 = vpop.f32.mrf.mxu0
      %v822 = vpop.f32.mrf.mxu0
      %v823 = vadd.f32 %v206, %v822
      %v824 = vpop.f32.mrf.mxu0
      %825 = vmatprep.mubr.bf16.mxu0 0
      %826 = vmatmul.mubr.bf16.gmra.mxu0 %v720
      %v827 = vpop.f32.mrf.mxu0
      %v828 = vadd.f32 %v206, %v827
      %v829 = vpop.f32.mrf.mxu0
      %v830 = vpop.f32.mrf.mxu0
      %v831 = vadd.f32 %v206, %v830
      %v832 = vpop.f32.mrf.mxu0
      %833 = vmatprep.mubr.bf16.mxu0 0
      %834 = vmatmul.mubr.bf16.gmra.mxu0 %v723
      %v835 = vpop.f32.mrf.mxu0
      %v836 = vadd.f32 %v206, %v835
      %v837 = vpop.f32.mrf.mxu0
      %v838 = vpop.f32.mrf.mxu0
      %v839 = vadd.f32 %v206, %v838
      %v840 = vpop.f32.mrf.mxu0
      %841 = vmatprep.mubr.bf16.mxu0 0
      %842 = vmatmul.mubr.bf16.gmra.mxu0 %v726
      %v843 = vpop.f32.mrf.mxu0
      %v844 = vadd.f32 %v206, %v843
      %v845 = vpop.f32.mrf.mxu0
      %v846 = vpop.f32.mrf.mxu0
      %v847 = vadd.f32 %v206, %v846
      %v848 = vpop.f32.mrf.mxu0
      %849 = vmatprep.mubr.bf16.mxu0 0
      %850 = vmatmul.mubr.bf16.gmra.mxu0 %v729
      %v851 = vpop.f32.mrf.mxu0
      %v852 = vadd.f32 %v206, %v851
      %v853 = vpop.f32.mrf.mxu0
      %v854 = vpop.f32.mrf.mxu0
      %v855 = vadd.f32 %v206, %v854
      %v856 = vpop.f32.mrf.mxu0
      %857 = vmatprep.mubr.bf16.mxu0 0
      %858 = vmatmul.mubr.bf16.gmra.mxu0 %v732
      %v859 = vpop.f32.mrf.mxu0
      %v860 = vadd.f32 %v206, %v859
      %v861 = vpop.f32.mrf.mxu0
      %v862 = vpop.f32.mrf.mxu0
      %v863 = vadd.f32 %v206, %v862
      %v864 = vpop.f32.mrf.mxu0
      %865 = vmatprep.mubr.bf16.mxu0 0
      %866 = vmatmul.mubr.bf16.gmra.mxu0 %v735
      %v867 = vpop.f32.mrf.mxu0
      %v868 = vadd.f32 %v206, %v867
      %v869 = vpop.f32.mrf.mxu0
      %v870 = vpop.f32.mrf.mxu0
      %v871 = vpop.f32.mrf.mxu0
      %872 = vdwg.mxu0
      %v873 = vsub.f32 0.0, %v772
      %v874 = vsub.f32 0.0, %v775
      %v875 = vsub.f32 0.0, %v780
      %v876 = vsub.f32 0.0, %v783
      %v877 = vsub.f32 0.0, %v788
      %v878 = vsub.f32 0.0, %v791
      %v879 = vsub.f32 0.0, %v796
      %v880 = vsub.f32 0.0, %v799
      %v881 = vsub.f32 0.0, %v804
      %v882 = vsub.f32 0.0, %v807
      %v883 = vsub.f32 0.0, %v812
      %v884 = vsub.f32 0.0, %v815
      %v885 = vsub.f32 0.0, %v820
      %v886 = vsub.f32 0.0, %v823
      %v887 = vsub.f32 0.0, %v828
      %v888 = vsub.f32 0.0, %v831
      %v889 = vsub.f32 0.0, %v836
      %v890 = vsub.f32 0.0, %v839
      %v891 = vsub.f32 0.0, %v844
      %v892 = vsub.f32 0.0, %v847
      %v893 = vsub.f32 0.0, %v852
      %v894 = vsub.f32 0.0, %v855
      %v895 = vsub.f32 0.0, %v860
      %v896 = vsub.f32 0.0, %v863
      %v897 = vsub.f32 0.0, %v868
      %v898 = vmul.f32 %v873, 1.442695
      %v899 = vpow.pop %v898
      %v900 = vmul.f32 %v874, 1.442695
      %v901 = vpow.pop %v900
      %v902 = vmul.f32 %v875, 1.442695
      %v903 = vpow.pop %v902
      %v904 = vmul.f32 %v876, 1.442695
      %v905 = vpow.pop %v904
      %v906 = vmul.f32 %v877, 1.442695
      %v907 = vpow.pop %v906
      %v908 = vmul.f32 %v878, 1.442695
      %v909 = vpow.pop %v908
      %v910 = vmul.f32 %v879, 1.442695
      %v911 = vpow.pop %v910
      %v912 = vmul.f32 %v880, 1.442695
      %v913 = vpow.pop %v912
      %v914 = vmul.f32 %v881, 1.442695
      %v915 = vpow.pop %v914
      %v916 = vmul.f32 %v882, 1.442695
      %v917 = vpow.pop %v916
      %v918 = vmul.f32 %v883, 1.442695
      %v919 = vpow.pop %v918
      %v920 = vmul.f32 %v884, 1.442695
      %v921 = vpow.pop %v920
      %v922 = vmul.f32 %v885, 1.442695
      %v923 = vpow.pop %v922
      %v924 = vmul.f32 %v886, 1.442695
      %v925 = vpow.pop %v924
      %v926 = vmul.f32 %v887, 1.442695
      %v927 = vpow.pop %v926
      %v928 = vmul.f32 %v888, 1.442695
      %v929 = vpow.pop %v928
      %v930 = vmul.f32 %v889, 1.442695
      %v931 = vpow.pop %v930
      %v932 = vmul.f32 %v890, 1.442695
      %v933 = vpow.pop %v932
      %v934 = vmul.f32 %v891, 1.442695
      %v935 = vpow.pop %v934
      %v936 = vmul.f32 %v892, 1.442695
      %v937 = vpow.pop %v936
      %v938 = vmul.f32 %v893, 1.442695
      %v939 = vpow.pop %v938
      %v940 = vmul.f32 %v894, 1.442695
      %v941 = vpow.pop %v940
      %v942 = vmul.f32 %v895, 1.442695
      %v943 = vpow.pop %v942
      %v944 = vmul.f32 %v896, 1.442695
      %v945 = vpow.pop %v944
      %v946 = vmul.f32 %v897, 1.442695
      %v947 = vpow.pop %v946
      %v948 = vadd.f32 %v899, 1.0
      %v949 = vadd.f32 %v901, 1.0
      %v950 = vadd.f32 %v903, 1.0
      %v951 = vadd.f32 %v905, 1.0
      %v952 = vadd.f32 %v907, 1.0
      %v953 = vadd.f32 %v909, 1.0
      %v954 = vadd.f32 %v911, 1.0
      %v955 = vadd.f32 %v913, 1.0
      %v956 = vadd.f32 %v915, 1.0
      %v957 = vadd.f32 %v917, 1.0
      %v958 = vadd.f32 %v919, 1.0
      %v959 = vadd.f32 %v921, 1.0
      %v960 = vadd.f32 %v923, 1.0
      %v961 = vadd.f32 %v925, 1.0
      %v962 = vadd.f32 %v927, 1.0
      %v963 = vadd.f32 %v929, 1.0
      %v964 = vadd.f32 %v931, 1.0
      %v965 = vadd.f32 %v933, 1.0
      %v966 = vadd.f32 %v935, 1.0
      %v967 = vadd.f32 %v937, 1.0
      %v968 = vadd.f32 %v939, 1.0
      %v969 = vadd.f32 %v941, 1.0
      %v970 = vadd.f32 %v943, 1.0
      %v971 = vadd.f32 %v945, 1.0
      %v972 = vadd.f32 %v947, 1.0
      %v973 = vrcp.pop %v948
      %v974 = vrcp.pop %v949
      %v975 = vrcp.pop %v950
      %v976 = vrcp.pop %v951
      %v977 = vrcp.pop %v952
      %v978 = vrcp.pop %v953
      %v979 = vrcp.pop %v954
      %v980 = vrcp.pop %v955
      %v981 = vrcp.pop %v956
      %v982 = vrcp.pop %v957
      %v983 = vrcp.pop %v958
      %v984 = vrcp.pop %v959
      %v985 = vrcp.pop %v960
      %v986 = vrcp.pop %v961
      %v987 = vrcp.pop %v962
      %v988 = vrcp.pop %v963
      %v989 = vrcp.pop %v964
      %v990 = vrcp.pop %v965
      %v991 = vrcp.pop %v966
      %v992 = vrcp.pop %v967
      %v993 = vrcp.pop %v968
      %v994 = vrcp.pop %v969
      %v995 = vrcp.pop %v970
      %v996 = vrcp.pop %v971
      %v997 = vrcp.pop %v972
      %v998 = vadd.f32 %v584, %v973
      %v999 = vadd.f32 %v585, %v974
      %v1000 = vadd.f32 %v586, %v975
      %v1001 = vadd.f32 %v587, %v976
      %v1002 = vadd.f32 %v588, %v977
      %v1003 = vadd.f32 %v589, %v978
      %v1004 = vadd.f32 %v590, %v979
      %v1005 = vadd.f32 %v591, %v980
      %v1006 = vadd.f32 %v592, %v981
      %v1007 = vadd.f32 %v593, %v982
      %v1008 = vadd.f32 %v594, %v983
      %v1009 = vadd.f32 %v595, %v984
      %v1010 = vadd.f32 %v596, %v985
      %v1011 = vadd.f32 %v597, %v986
      %v1012 = vadd.f32 %v598, %v987
      %v1013 = vadd.f32 %v599, %v988
      %v1014 = vadd.f32 %v600, %v989
      %v1015 = vadd.f32 %v601, %v990
      %v1016 = vadd.f32 %v602, %v991
      %v1017 = vadd.f32 %v603, %v992
      %v1018 = vadd.f32 %v604, %v993
      %v1019 = vadd.f32 %v605, %v994
      %v1020 = vadd.f32 %v606, %v995
      %v1021 = vadd.f32 %v607, %v996
      %v1022 = vadd.f32 %v608, %v997
      %s1023 = scalar_lea.vmem %s165, 200
      %v1024 = vld [vmem:[%s1023] sm:$0xf]
      %v1025 = vld [vmem:[%s1023 + $0x4] sm:$0xf]
      %v1026 = vld [vmem:[%s1023 + $0x8] sm:$0xf]
      %v1027 = vld [vmem:[%s1023 + $0xc] sm:$0xf]
      %v1028 = vld [vmem:[%s1023 + $0x10] sm:$0xf]
      %v1029 = vld [vmem:[%s1023 + $0x14] sm:$0xf]
      %v1030 = vld [vmem:[%s1023 + $0x18] sm:$0xf]
      %v1031 = vld [vmem:[%s1023 + $0x1c] sm:$0xf]
      %v1032 = vld [vmem:[%s1023 + $0x20] sm:$0xf]
      %v1033 = vld [vmem:[%s1023 + $0x24] sm:$0xf]
      %v1034 = vld [vmem:[%s1023 + $0x28] sm:$0xf]
      %v1035 = vld [vmem:[%s1023 + $0x2c] sm:$0xf]
      %v1036 = vld [vmem:[%s1023 + $0x30] sm:$0xf]
      %v1037 = vld [vmem:[%s1023 + $0x34] sm:$0xf]
      %v1038 = vld [vmem:[%s1023 + $0x38] sm:$0xf]
      %v1039 = vld [vmem:[%s1023 + $0x3c] sm:$0xf]
      %v1040 = vld [vmem:[%s1023 + $0x40] sm:$0xf]
      %v1041 = vld [vmem:[%s1023 + $0x44] sm:$0xf]
      %v1042 = vld [vmem:[%s1023 + $0x48] sm:$0xf]
      %v1043 = vld [vmem:[%s1023 + $0x4c] sm:$0xf]
      %v1044 = vld [vmem:[%s1023 + $0x50] sm:$0xf]
      %v1045 = vld [vmem:[%s1023 + $0x54] sm:$0xf]
      %v1046 = vld [vmem:[%s1023 + $0x58] sm:$0xf]
      %v1047 = vld [vmem:[%s1023 + $0x5c] sm:$0xf]
      %v1048 = vld [vmem:[%s1023 + $0x60] sm:$0x3]
      %v1074 = vunpack.c.l.b16 %v1024
      %v1075 = vunpack.c.l.b16 %v1025
      %v1076 = vunpack.c.l.b16 %v1026
      %v1077 = vunpack.c.l.b16 %v1027
      %v1078 = vunpack.c.l.b16 %v1028
      %v1079 = vunpack.c.l.b16 %v1029
      %v1080 = vunpack.c.l.b16 %v1030
      %v1081 = vunpack.c.l.b16 %v1031
      %v1082 = vunpack.c.l.b16 %v1032
      %v1083 = vunpack.c.l.b16 %v1033
      %v1084 = vunpack.c.l.b16 %v1034
      %v1085 = vunpack.c.l.b16 %v1035
      %v1086 = vunpack.c.l.b16 %v1036
      %v1087 = vunpack.c.l.b16 %v1037
      %v1088 = vunpack.c.l.b16 %v1038
      %v1089 = vunpack.c.l.b16 %v1039
      %v1090 = vunpack.c.l.b16 %v1040
      %v1091 = vunpack.c.l.b16 %v1041
      %v1092 = vunpack.c.l.b16 %v1042
      %v1093 = vunpack.c.l.b16 %v1043
      %v1094 = vunpack.c.l.b16 %v1044
      %v1095 = vunpack.c.l.b16 %v1045
      %v1096 = vunpack.c.l.b16 %v1046
      %v1097 = vunpack.c.l.b16 %v1047
      %v1098 = vunpack.c.l.b16 %v1048
      %v1099 = vpack.c.b16 %v1075, %v1074
      %v1100 = vpack.c.b16 %v1077, %v1076
      %v1101 = vpack.c.b16 %v1079, %v1078
      %v1102 = vpack.c.b16 %v1081, %v1080
      %v1103 = vpack.c.b16 %v1083, %v1082
      %v1104 = vpack.c.b16 %v1085, %v1084
      %v1105 = vpack.c.b16 %v1087, %v1086
      %v1106 = vpack.c.b16 %v1089, %v1088
      %v1107 = vpack.c.b16 %v1091, %v1090
      %v1108 = vpack.c.b16 %v1093, %v1092
      %v1109 = vpack.c.b16 %v1095, %v1094
      %v1110 = vpack.c.b16 %v1097, %v1096
      %v1111 = vpack.c.b16 %v1098, %v1098
      %v1113 = vsel %vm283, %v1099, 0
      %v1116 = vsel %vm283, %v1100, 0
      %v1119 = vsel %vm283, %v1101, 0
      %v1122 = vsel %vm283, %v1102, 0
      %v1125 = vsel %vm283, %v1103, 0
      %v1128 = vsel %vm283, %v1104, 0
      %v1131 = vsel %vm283, %v1105, 0
      %v1134 = vsel %vm283, %v1106, 0
      %v1137 = vsel %vm283, %v1107, 0
      %v1140 = vsel %vm283, %v1108, 0
      %v1143 = vsel %vm283, %v1109, 0
      %v1146 = vsel %vm283, %v1110, 0
      %v1149 = vsel %vm283, %v1111, 0
      %1151 = vmatprep.subr.bf16.mxu0 0
      %1152 = vmatpush1.bf16.msra.mxu0 0
      %1153 = vmatprep.subr.bf16.mxu0 0
      %1154 = vmatpush1.bf16.msra.mxu0 0
      %1155 = vmatprep.subr.bf16.mxu0 0
      %1156 = vmatpush1.bf16.msra.mxu0 0
      %1157 = vmatprep.subr.bf16.mxu0 0
      %1158 = vmatpush1.bf16.msra.mxu0 0
      %1159 = vmatprep.subr.bf16.mxu0 0
      %1160 = vmatpush1.bf16.msra.mxu0 0
      %1161 = vmatprep.subr.bf16.mxu0 0
      %1162 = vmatpush1.bf16.msra.mxu0 0
      %1163 = vmatprep.subr.bf16.mxu0 0
      %1164 = vmatpush1.bf16.msra.mxu0 %v280
      %1165 = vmatprep.subr.bf16.mxu0 0
      %1166 = vmatpush1.bf16.msra.mxu0 %v279
      %1167 = vmatprep.subr.bf16.mxu0 0
      %1168 = vmatpush2.bf16.msra.mxu0 0
      %1169 = vmatprep.subr.bf16.mxu0 0
      %1170 = vmatpush2.bf16.msra.mxu0 0
      %1171 = vmatprep.subr.bf16.mxu0 0
      %1172 = vmatpush2.bf16.msra.mxu0 0
      %1173 = vmatprep.subr.bf16.mxu0 0
      %1174 = vmatpush2.bf16.msra.mxu0 0
      %1175 = vmatprep.subr.bf16.mxu0 0
      %1176 = vmatpush2.bf16.msra.mxu0 0
      %1177 = vmatprep.subr.bf16.mxu0 0
      %1178 = vmatpush2.bf16.msra.mxu0 0
      %1179 = vmatprep.subr.bf16.mxu0 0
      %1180 = vmatpush2.bf16.msra.mxu0 0
      %1181 = vmatprep.subr.bf16.mxu0 0
      %1182 = vmatpush2.bf16.msra.mxu0 0
      %1183 = vmatprep.mubr.bf16.mxu0 0
      %1184 = vmatmul.mubr.bf16.gmra.mxu0 %v1113
      %v1185 = vpop.f32.mrf.mxu0
      %v1186 = vadd.f32 %v206, %v1185
      %v1187 = vpop.f32.mrf.mxu0
      %v1188 = vpop.f32.mrf.mxu0
      %v1189 = vadd.f32 %v206, %v1188
      %v1190 = vpop.f32.mrf.mxu0
      %1191 = vmatprep.mubr.bf16.mxu0 0
      %1192 = vmatmul.mubr.bf16.gmra.mxu0 %v1116
      %v1193 = vpop.f32.mrf.mxu0
      %v1194 = vadd.f32 %v206, %v1193
      %v1195 = vpop.f32.mrf.mxu0
      %v1196 = vpop.f32.mrf.mxu0
      %v1197 = vadd.f32 %v206, %v1196
      %v1198 = vpop.f32.mrf.mxu0
      %1199 = vmatprep.mubr.bf16.mxu0 0
      %1200 = vmatmul.mubr.bf16.gmra.mxu0 %v1119
      %v1201 = vpop.f32.mrf.mxu0
      %v1202 = vadd.f32 %v206, %v1201
      %v1203 = vpop.f32.mrf.mxu0
      %v1204 = vpop.f32.mrf.mxu0
      %v1205 = vadd.f32 %v206, %v1204
      %v1206 = vpop.f32.mrf.mxu0
      %1207 = vmatprep.mubr.bf16.mxu0 0
      %1208 = vmatmul.mubr.bf16.gmra.mxu0 %v1122
      %v1209 = vpop.f32.mrf.mxu0
      %v1210 = vadd.f32 %v206, %v1209
      %v1211 = vpop.f32.mrf.mxu0
      %v1212 = vpop.f32.mrf.mxu0
      %v1213 = vadd.f32 %v206, %v1212
      %v1214 = vpop.f32.mrf.mxu0
      %1215 = vmatprep.mubr.bf16.mxu0 0
      %1216 = vmatmul.mubr.bf16.gmra.mxu0 %v1125
      %v1217 = vpop.f32.mrf.mxu0
      %v1218 = vadd.f32 %v206, %v1217
      %v1219 = vpop.f32.mrf.mxu0
      %v1220 = vpop.f32.mrf.mxu0
      %v1221 = vadd.f32 %v206, %v1220
      %v1222 = vpop.f32.mrf.mxu0
      %1223 = vmatprep.mubr.bf16.mxu0 0
      %1224 = vmatmul.mubr.bf16.gmra.mxu0 %v1128
      %v1225 = vpop.f32.mrf.mxu0
      %v1226 = vadd.f32 %v206, %v1225
      %v1227 = vpop.f32.mrf.mxu0
      %v1228 = vpop.f32.mrf.mxu0
      %v1229 = vadd.f32 %v206, %v1228
      %v1230 = vpop.f32.mrf.mxu0
      %1231 = vmatprep.mubr.bf16.mxu0 0
      %1232 = vmatmul.mubr.bf16.gmra.mxu0 %v1131
      %v1233 = vpop.f32.mrf.mxu0
      %v1234 = vadd.f32 %v206, %v1233
      %v1235 = vpop.f32.mrf.mxu0
      %v1236 = vpop.f32.mrf.mxu0
      %v1237 = vadd.f32 %v206, %v1236
      %v1238 = vpop.f32.mrf.mxu0
      %1239 = vmatprep.mubr.bf16.mxu0 0
      %1240 = vmatmul.mubr.bf16.gmra.mxu0 %v1134
      %v1241 = vpop.f32.mrf.mxu0
      %v1242 = vadd.f32 %v206, %v1241
      %v1243 = vpop.f32.mrf.mxu0
      %v1244 = vpop.f32.mrf.mxu0
      %v1245 = vadd.f32 %v206, %v1244
      %v1246 = vpop.f32.mrf.mxu0
      %1247 = vmatprep.mubr.bf16.mxu0 0
      %1248 = vmatmul.mubr.bf16.gmra.mxu0 %v1137
      %v1249 = vpop.f32.mrf.mxu0
      %v1250 = vadd.f32 %v206, %v1249
      %v1251 = vpop.f32.mrf.mxu0
      %v1252 = vpop.f32.mrf.mxu0
      %v1253 = vadd.f32 %v206, %v1252
      %v1254 = vpop.f32.mrf.mxu0
      %1255 = vmatprep.mubr.bf16.mxu0 0
      %1256 = vmatmul.mubr.bf16.gmra.mxu0 %v1140
      %v1257 = vpop.f32.mrf.mxu0
      %v1258 = vadd.f32 %v206, %v1257
      %v1259 = vpop.f32.mrf.mxu0
      %v1260 = vpop.f32.mrf.mxu0
      %v1261 = vadd.f32 %v206, %v1260
      %v1262 = vpop.f32.mrf.mxu0
      %1263 = vmatprep.mubr.bf16.mxu0 0
      %1264 = vmatmul.mubr.bf16.gmra.mxu0 %v1143
      %v1265 = vpop.f32.mrf.mxu0
      %v1266 = vadd.f32 %v206, %v1265
      %v1267 = vpop.f32.mrf.mxu0
      %v1268 = vpop.f32.mrf.mxu0
      %v1269 = vadd.f32 %v206, %v1268
      %v1270 = vpop.f32.mrf.mxu0
      %1271 = vmatprep.mubr.bf16.mxu0 0
      %1272 = vmatmul.mubr.bf16.gmra.mxu0 %v1146
      %v1273 = vpop.f32.mrf.mxu0
      %v1274 = vadd.f32 %v206, %v1273
      %v1275 = vpop.f32.mrf.mxu0
      %v1276 = vpop.f32.mrf.mxu0
      %v1277 = vadd.f32 %v206, %v1276
      %v1278 = vpop.f32.mrf.mxu0
      %1279 = vmatprep.mubr.bf16.mxu0 0
      %1280 = vmatmul.mubr.bf16.gmra.mxu0 %v1149
      %v1281 = vpop.f32.mrf.mxu0
      %v1282 = vadd.f32 %v206, %v1281
      %v1283 = vpop.f32.mrf.mxu0
      %v1284 = vpop.f32.mrf.mxu0
      %v1285 = vpop.f32.mrf.mxu0
      %1286 = vdwg.mxu0
      %v1287 = vsub.f32 0.0, %v1186
      %v1288 = vsub.f32 0.0, %v1189
      %v1289 = vsub.f32 0.0, %v1194
      %v1290 = vsub.f32 0.0, %v1197
      %v1291 = vsub.f32 0.0, %v1202
      %v1292 = vsub.f32 0.0, %v1205
      %v1293 = vsub.f32 0.0, %v1210
      %v1294 = vsub.f32 0.0, %v1213
      %v1295 = vsub.f32 0.0, %v1218
      %v1296 = vsub.f32 0.0, %v1221
      %v1297 = vsub.f32 0.0, %v1226
      %v1298 = vsub.f32 0.0, %v1229
      %v1299 = vsub.f32 0.0, %v1234
      %v1300 = vsub.f32 0.0, %v1237
      %v1301 = vsub.f32 0.0, %v1242
      %v1302 = vsub.f32 0.0, %v1245
      %v1303 = vsub.f32 0.0, %v1250
      %v1304 = vsub.f32 0.0, %v1253
      %v1305 = vsub.f32 0.0, %v1258
      %v1306 = vsub.f32 0.0, %v1261
      %v1307 = vsub.f32 0.0, %v1266
      %v1308 = vsub.f32 0.0, %v1269
      %v1309 = vsub.f32 0.0, %v1274
      %v1310 = vsub.f32 0.0, %v1277
      %v1311 = vsub.f32 0.0, %v1282
      %v1312 = vmul.f32 %v1287, 1.442695
      %v1313 = vpow.pop %v1312
      %v1314 = vmul.f32 %v1288, 1.442695
      %v1315 = vpow.pop %v1314
      %v1316 = vmul.f32 %v1289, 1.442695
      %v1317 = vpow.pop %v1316
      %v1318 = vmul.f32 %v1290, 1.442695
      %v1319 = vpow.pop %v1318
      %v1320 = vmul.f32 %v1291, 1.442695
      %v1321 = vpow.pop %v1320
      %v1322 = vmul.f32 %v1292, 1.442695
      %v1323 = vpow.pop %v1322
      %v1324 = vmul.f32 %v1293, 1.442695
      %v1325 = vpow.pop %v1324
      %v1326 = vmul.f32 %v1294, 1.442695
      %v1327 = vpow.pop %v1326
      %v1328 = vmul.f32 %v1295, 1.442695
      %v1329 = vpow.pop %v1328
      %v1330 = vmul.f32 %v1296, 1.442695
      %v1331 = vpow.pop %v1330
      %v1332 = vmul.f32 %v1297, 1.442695
      %v1333 = vpow.pop %v1332
      %v1334 = vmul.f32 %v1298, 1.442695
      %v1335 = vpow.pop %v1334
      %v1336 = vmul.f32 %v1299, 1.442695
      %v1337 = vpow.pop %v1336
      %v1338 = vmul.f32 %v1300, 1.442695
      %v1339 = vpow.pop %v1338
      %v1340 = vmul.f32 %v1301, 1.442695
      %v1341 = vpow.pop %v1340
      %v1342 = vmul.f32 %v1302, 1.442695
      %v1343 = vpow.pop %v1342
      %v1344 = vmul.f32 %v1303, 1.442695
      %v1345 = vpow.pop %v1344
      %v1346 = vmul.f32 %v1304, 1.442695
      %v1347 = vpow.pop %v1346
      %v1348 = vmul.f32 %v1305, 1.442695
      %v1349 = vpow.pop %v1348
      %v1350 = vmul.f32 %v1306, 1.442695
      %v1351 = vpow.pop %v1350
      %v1352 = vmul.f32 %v1307, 1.442695
      %v1353 = vpow.pop %v1352
      %v1354 = vmul.f32 %v1308, 1.442695
      %v1355 = vpow.pop %v1354
      %v1356 = vmul.f32 %v1309, 1.442695
      %v1357 = vpow.pop %v1356
      %v1358 = vmul.f32 %v1310, 1.442695
      %v1359 = vpow.pop %v1358
      %v1360 = vmul.f32 %v1311, 1.442695
      %v1361 = vpow.pop %v1360
      %v1362 = vadd.f32 %v1313, 1.0
      %v1363 = vadd.f32 %v1315, 1.0
      %v1364 = vadd.f32 %v1317, 1.0
      %v1365 = vadd.f32 %v1319, 1.0
      %v1366 = vadd.f32 %v1321, 1.0
      %v1367 = vadd.f32 %v1323, 1.0
      %v1368 = vadd.f32 %v1325, 1.0
      %v1369 = vadd.f32 %v1327, 1.0
      %v1370 = vadd.f32 %v1329, 1.0
      %v1371 = vadd.f32 %v1331, 1.0
      %v1372 = vadd.f32 %v1333, 1.0
      %v1373 = vadd.f32 %v1335, 1.0
      %v1374 = vadd.f32 %v1337, 1.0
      %v1375 = vadd.f32 %v1339, 1.0
      %v1376 = vadd.f32 %v1341, 1.0
      %v1377 = vadd.f32 %v1343, 1.0
      %v1378 = vadd.f32 %v1345, 1.0
      %v1379 = vadd.f32 %v1347, 1.0
      %v1380 = vadd.f32 %v1349, 1.0
      %v1381 = vadd.f32 %v1351, 1.0
      %v1382 = vadd.f32 %v1353, 1.0
      %v1383 = vadd.f32 %v1355, 1.0
      %v1384 = vadd.f32 %v1357, 1.0
      %v1385 = vadd.f32 %v1359, 1.0
      %v1386 = vadd.f32 %v1361, 1.0
      %v1387 = vrcp.pop %v1362
      %v1388 = vrcp.pop %v1363
      %v1389 = vrcp.pop %v1364
      %v1390 = vrcp.pop %v1365
      %v1391 = vrcp.pop %v1366
      %v1392 = vrcp.pop %v1367
      %v1393 = vrcp.pop %v1368
      %v1394 = vrcp.pop %v1369
      %v1395 = vrcp.pop %v1370
      %v1396 = vrcp.pop %v1371
      %v1397 = vrcp.pop %v1372
      %v1398 = vrcp.pop %v1373
      %v1399 = vrcp.pop %v1374
      %v1400 = vrcp.pop %v1375
      %v1401 = vrcp.pop %v1376
      %v1402 = vrcp.pop %v1377
      %v1403 = vrcp.pop %v1378
      %v1404 = vrcp.pop %v1379
      %v1405 = vrcp.pop %v1380
      %v1406 = vrcp.pop %v1381
      %v1407 = vrcp.pop %v1382
      %v1408 = vrcp.pop %v1383
      %v1409 = vrcp.pop %v1384
      %v1410 = vrcp.pop %v1385
      %v1411 = vrcp.pop %v1386
      %v1412 = vadd.f32 %v998, %v1387
      %v1413 = vadd.f32 %v999, %v1388
      %v1414 = vadd.f32 %v1000, %v1389
      %v1415 = vadd.f32 %v1001, %v1390
      %v1416 = vadd.f32 %v1002, %v1391
      %v1417 = vadd.f32 %v1003, %v1392
      %v1418 = vadd.f32 %v1004, %v1393
      %v1419 = vadd.f32 %v1005, %v1394
      %v1420 = vadd.f32 %v1006, %v1395
      %v1421 = vadd.f32 %v1007, %v1396
      %v1422 = vadd.f32 %v1008, %v1397
      %v1423 = vadd.f32 %v1009, %v1398
      %v1424 = vadd.f32 %v1010, %v1399
      %v1425 = vadd.f32 %v1011, %v1400
      %v1426 = vadd.f32 %v1012, %v1401
      %v1427 = vadd.f32 %v1013, %v1402
      %v1428 = vadd.f32 %v1014, %v1403
      %v1429 = vadd.f32 %v1015, %v1404
      %v1430 = vadd.f32 %v1016, %v1405
      %v1431 = vadd.f32 %v1017, %v1406
      %v1432 = vadd.f32 %v1018, %v1407
      %v1433 = vadd.f32 %v1019, %v1408
      %v1434 = vadd.f32 %v1020, %v1409
      %v1435 = vadd.f32 %v1021, %v1410
      %v1436 = vadd.f32 %v1022, %v1411
      %s1437 = scalar_lea.vmem %s165, 300
      %v1438 = vld [vmem:[%s1437] sm:$0xf]
      %v1439 = vld [vmem:[%s1437 + $0x4] sm:$0xf]
      %v1440 = vld [vmem:[%s1437 + $0x8] sm:$0xf]
      %v1441 = vld [vmem:[%s1437 + $0xc] sm:$0xf]
      %v1442 = vld [vmem:[%s1437 + $0x10] sm:$0xf]
      %v1443 = vld [vmem:[%s1437 + $0x14] sm:$0xf]
      %v1444 = vld [vmem:[%s1437 + $0x18] sm:$0xf]
      %v1445 = vld [vmem:[%s1437 + $0x1c] sm:$0xf]
      %v1446 = vld [vmem:[%s1437 + $0x20] sm:$0xf]
      %v1447 = vld [vmem:[%s1437 + $0x24] sm:$0xf]
      %v1448 = vld [vmem:[%s1437 + $0x28] sm:$0xf]
      %v1449 = vld [vmem:[%s1437 + $0x2c] sm:$0xf]
      %v1450 = vld [vmem:[%s1437 + $0x30] sm:$0xf]
      %v1451 = vld [vmem:[%s1437 + $0x34] sm:$0xf]
      %v1452 = vld [vmem:[%s1437 + $0x38] sm:$0xf]
      %v1453 = vld [vmem:[%s1437 + $0x3c] sm:$0xf]
      %v1454 = vld [vmem:[%s1437 + $0x40] sm:$0xf]
      %v1455 = vld [vmem:[%s1437 + $0x44] sm:$0xf]
      %v1456 = vld [vmem:[%s1437 + $0x48] sm:$0xf]
      %v1457 = vld [vmem:[%s1437 + $0x4c] sm:$0xf]
      %v1458 = vld [vmem:[%s1437 + $0x50] sm:$0xf]
      %v1459 = vld [vmem:[%s1437 + $0x54] sm:$0xf]
      %v1460 = vld [vmem:[%s1437 + $0x58] sm:$0xf]
      %v1461 = vld [vmem:[%s1437 + $0x5c] sm:$0xf]
      %v1462 = vld [vmem:[%s1437 + $0x60] sm:$0x3]
      %v1488 = vunpack.c.l.b16 %v1438
      %v1489 = vunpack.c.l.b16 %v1439
      %v1490 = vunpack.c.l.b16 %v1440
      %v1491 = vunpack.c.l.b16 %v1441
      %v1492 = vunpack.c.l.b16 %v1442
      %v1493 = vunpack.c.l.b16 %v1443
      %v1494 = vunpack.c.l.b16 %v1444
      %v1495 = vunpack.c.l.b16 %v1445
      %v1496 = vunpack.c.l.b16 %v1446
      %v1497 = vunpack.c.l.b16 %v1447
      %v1498 = vunpack.c.l.b16 %v1448
      %v1499 = vunpack.c.l.b16 %v1449
      %v1500 = vunpack.c.l.b16 %v1450
      %v1501 = vunpack.c.l.b16 %v1451
      %v1502 = vunpack.c.l.b16 %v1452
      %v1503 = vunpack.c.l.b16 %v1453
      %v1504 = vunpack.c.l.b16 %v1454
      %v1505 = vunpack.c.l.b16 %v1455
      %v1506 = vunpack.c.l.b16 %v1456
      %v1507 = vunpack.c.l.b16 %v1457
      %v1508 = vunpack.c.l.b16 %v1458
      %v1509 = vunpack.c.l.b16 %v1459
      %v1510 = vunpack.c.l.b16 %v1460
      %v1511 = vunpack.c.l.b16 %v1461
      %v1512 = vunpack.c.l.b16 %v1462
      %v1513 = vpack.c.b16 %v1489, %v1488
      %v1514 = vpack.c.b16 %v1491, %v1490
      %v1515 = vpack.c.b16 %v1493, %v1492
      %v1516 = vpack.c.b16 %v1495, %v1494
      %v1517 = vpack.c.b16 %v1497, %v1496
      %v1518 = vpack.c.b16 %v1499, %v1498
      %v1519 = vpack.c.b16 %v1501, %v1500
      %v1520 = vpack.c.b16 %v1503, %v1502
      %v1521 = vpack.c.b16 %v1505, %v1504
      %v1522 = vpack.c.b16 %v1507, %v1506
      %v1523 = vpack.c.b16 %v1509, %v1508
      %v1524 = vpack.c.b16 %v1511, %v1510
      %v1525 = vpack.c.b16 %v1512, %v1512
      %v1527 = vsel %vm283, %v1513, 0
      %v1530 = vsel %vm283, %v1514, 0
      %v1533 = vsel %vm283, %v1515, 0
      %v1536 = vsel %vm283, %v1516, 0
      %v1539 = vsel %vm283, %v1517, 0
      %v1542 = vsel %vm283, %v1518, 0
      %v1545 = vsel %vm283, %v1519, 0
      %v1548 = vsel %vm283, %v1520, 0
      %v1551 = vsel %vm283, %v1521, 0
      %v1554 = vsel %vm283, %v1522, 0
      %v1557 = vsel %vm283, %v1523, 0
      %v1560 = vsel %vm283, %v1524, 0
      %v1563 = vsel %vm283, %v1525, 0
      %1565 = vmatprep.subr.bf16.mxu0 0
      %1566 = vmatpush1.bf16.msra.mxu0 0
      %1567 = vmatprep.subr.bf16.mxu0 0
      %1568 = vmatpush1.bf16.msra.mxu0 0
      %1569 = vmatprep.subr.bf16.mxu0 0
      %1570 = vmatpush1.bf16.msra.mxu0 0
      %1571 = vmatprep.subr.bf16.mxu0 0
      %1572 = vmatpush1.bf16.msra.mxu0 0
      %1573 = vmatprep.subr.bf16.mxu0 0
      %1574 = vmatpush1.bf16.msra.mxu0 0
      %1575 = vmatprep.subr.bf16.mxu0 0
      %1576 = vmatpush1.bf16.msra.mxu0 0
      %1577 = vmatprep.subr.bf16.mxu0 0
      %1578 = vmatpush1.bf16.msra.mxu0 %v280
      %1579 = vmatprep.subr.bf16.mxu0 0
      %1580 = vmatpush1.bf16.msra.mxu0 %v279
      %1581 = vmatprep.subr.bf16.mxu0 0
      %1582 = vmatpush2.bf16.msra.mxu0 0
      %1583 = vmatprep.subr.bf16.mxu0 0
      %1584 = vmatpush2.bf16.msra.mxu0 0
      %1585 = vmatprep.subr.bf16.mxu0 0
      %1586 = vmatpush2.bf16.msra.mxu0 0
      %1587 = vmatprep.subr.bf16.mxu0 0
      %1588 = vmatpush2.bf16.msra.mxu0 0
      %1589 = vmatprep.subr.bf16.mxu0 0
      %1590 = vmatpush2.bf16.msra.mxu0 0
      %1591 = vmatprep.subr.bf16.mxu0 0
      %1592 = vmatpush2.bf16.msra.mxu0 0
      %1593 = vmatprep.subr.bf16.mxu0 0
      %1594 = vmatpush2.bf16.msra.mxu0 0
      %1595 = vmatprep.subr.bf16.mxu0 0
      %1596 = vmatpush2.bf16.msra.mxu0 0
      %1597 = vmatprep.mubr.bf16.mxu0 0
      %1598 = vmatmul.mubr.bf16.gmra.mxu0 %v1527
      %v1599 = vpop.f32.mrf.mxu0
      %v1600 = vadd.f32 %v206, %v1599
      %v1601 = vpop.f32.mrf.mxu0
      %v1602 = vpop.f32.mrf.mxu0
      %v1603 = vadd.f32 %v206, %v1602
      %v1604 = vpop.f32.mrf.mxu0
      %1605 = vmatprep.mubr.bf16.mxu0 0
      %1606 = vmatmul.mubr.bf16.gmra.mxu0 %v1530
      %v1607 = vpop.f32.mrf.mxu0
      %v1608 = vadd.f32 %v206, %v1607
      %v1609 = vpop.f32.mrf.mxu0
      %v1610 = vpop.f32.mrf.mxu0
      %v1611 = vadd.f32 %v206, %v1610
      %v1612 = vpop.f32.mrf.mxu0
      %1613 = vmatprep.mubr.bf16.mxu0 0
      %1614 = vmatmul.mubr.bf16.gmra.mxu0 %v1533
      %v1615 = vpop.f32.mrf.mxu0
      %v1616 = vadd.f32 %v206, %v1615
      %v1617 = vpop.f32.mrf.mxu0
      %v1618 = vpop.f32.mrf.mxu0
      %v1619 = vadd.f32 %v206, %v1618
      %v1620 = vpop.f32.mrf.mxu0
      %1621 = vmatprep.mubr.bf16.mxu0 0
      %1622 = vmatmul.mubr.bf16.gmra.mxu0 %v1536
      %v1623 = vpop.f32.mrf.mxu0
      %v1624 = vadd.f32 %v206, %v1623
      %v1625 = vpop.f32.mrf.mxu0
      %v1626 = vpop.f32.mrf.mxu0
      %v1627 = vadd.f32 %v206, %v1626
      %v1628 = vpop.f32.mrf.mxu0
      %1629 = vmatprep.mubr.bf16.mxu0 0
      %1630 = vmatmul.mubr.bf16.gmra.mxu0 %v1539
      %v1631 = vpop.f32.mrf.mxu0
      %v1632 = vadd.f32 %v206, %v1631
      %v1633 = vpop.f32.mrf.mxu0
      %v1634 = vpop.f32.mrf.mxu0
      %v1635 = vadd.f32 %v206, %v1634
      %v1636 = vpop.f32.mrf.mxu0
      %1637 = vmatprep.mubr.bf16.mxu0 0
      %1638 = vmatmul.mubr.bf16.gmra.mxu0 %v1542
      %v1639 = vpop.f32.mrf.mxu0
      %v1640 = vadd.f32 %v206, %v1639
      %v1641 = vpop.f32.mrf.mxu0
      %v1642 = vpop.f32.mrf.mxu0
      %v1643 = vadd.f32 %v206, %v1642
      %v1644 = vpop.f32.mrf.mxu0
      %1645 = vmatprep.mubr.bf16.mxu0 0
      %1646 = vmatmul.mubr.bf16.gmra.mxu0 %v1545
      %v1647 = vpop.f32.mrf.mxu0
      %v1648 = vadd.f32 %v206, %v1647
      %v1649 = vpop.f32.mrf.mxu0
      %v1650 = vpop.f32.mrf.mxu0
      %v1651 = vadd.f32 %v206, %v1650
      %v1652 = vpop.f32.mrf.mxu0
      %1653 = vmatprep.mubr.bf16.mxu0 0
      %1654 = vmatmul.mubr.bf16.gmra.mxu0 %v1548
      %v1655 = vpop.f32.mrf.mxu0
      %v1656 = vadd.f32 %v206, %v1655
      %v1657 = vpop.f32.mrf.mxu0
      %v1658 = vpop.f32.mrf.mxu0
      %v1659 = vadd.f32 %v206, %v1658
      %v1660 = vpop.f32.mrf.mxu0
      %1661 = vmatprep.mubr.bf16.mxu0 0
      %1662 = vmatmul.mubr.bf16.gmra.mxu0 %v1551
      %v1663 = vpop.f32.mrf.mxu0
      %v1664 = vadd.f32 %v206, %v1663
      %v1665 = vpop.f32.mrf.mxu0
      %v1666 = vpop.f32.mrf.mxu0
      %v1667 = vadd.f32 %v206, %v1666
      %v1668 = vpop.f32.mrf.mxu0
      %1669 = vmatprep.mubr.bf16.mxu0 0
      %1670 = vmatmul.mubr.bf16.gmra.mxu0 %v1554
      %v1671 = vpop.f32.mrf.mxu0
      %v1672 = vadd.f32 %v206, %v1671
      %v1673 = vpop.f32.mrf.mxu0
      %v1674 = vpop.f32.mrf.mxu0
      %v1675 = vadd.f32 %v206, %v1674
      %v1676 = vpop.f32.mrf.mxu0
      %1677 = vmatprep.mubr.bf16.mxu0 0
      %1678 = vmatmul.mubr.bf16.gmra.mxu0 %v1557
      %v1679 = vpop.f32.mrf.mxu0
      %v1680 = vadd.f32 %v206, %v1679
      %v1681 = vpop.f32.mrf.mxu0
      %v1682 = vpop.f32.mrf.mxu0
      %v1683 = vadd.f32 %v206, %v1682
      %v1684 = vpop.f32.mrf.mxu0
      %1685 = vmatprep.mubr.bf16.mxu0 0
      %1686 = vmatmul.mubr.bf16.gmra.mxu0 %v1560
      %v1687 = vpop.f32.mrf.mxu0
      %v1688 = vadd.f32 %v206, %v1687
      %v1689 = vpop.f32.mrf.mxu0
      %v1690 = vpop.f32.mrf.mxu0
      %v1691 = vadd.f32 %v206, %v1690
      %v1692 = vpop.f32.mrf.mxu0
      %1693 = vmatprep.mubr.bf16.mxu0 0
      %1694 = vmatmul.mubr.bf16.gmra.mxu0 %v1563
      %v1695 = vpop.f32.mrf.mxu0
      %v1696 = vadd.f32 %v206, %v1695
      %v1697 = vpop.f32.mrf.mxu0
      %v1698 = vpop.f32.mrf.mxu0
      %v1699 = vpop.f32.mrf.mxu0
      %1700 = vdwg.mxu0
      %v1701 = vsub.f32 0.0, %v1600
      %v1702 = vsub.f32 0.0, %v1603
      %v1703 = vsub.f32 0.0, %v1608
      %v1704 = vsub.f32 0.0, %v1611
      %v1705 = vsub.f32 0.0, %v1616
      %v1706 = vsub.f32 0.0, %v1619
      %v1707 = vsub.f32 0.0, %v1624
      %v1708 = vsub.f32 0.0, %v1627
      %v1709 = vsub.f32 0.0, %v1632
      %v1710 = vsub.f32 0.0, %v1635
      %v1711 = vsub.f32 0.0, %v1640
      %v1712 = vsub.f32 0.0, %v1643
      %v1713 = vsub.f32 0.0, %v1648
      %v1714 = vsub.f32 0.0, %v1651
      %v1715 = vsub.f32 0.0, %v1656
      %v1716 = vsub.f32 0.0, %v1659
      %v1717 = vsub.f32 0.0, %v1664
      %v1718 = vsub.f32 0.0, %v1667
      %v1719 = vsub.f32 0.0, %v1672
      %v1720 = vsub.f32 0.0, %v1675
      %v1721 = vsub.f32 0.0, %v1680
      %v1722 = vsub.f32 0.0, %v1683
      %v1723 = vsub.f32 0.0, %v1688
      %v1724 = vsub.f32 0.0, %v1691
      %v1725 = vsub.f32 0.0, %v1696
      %v1726 = vmul.f32 %v1701, 1.442695
      %v1727 = vpow.pop %v1726
      %v1728 = vmul.f32 %v1702, 1.442695
      %v1729 = vpow.pop %v1728
      %v1730 = vmul.f32 %v1703, 1.442695
      %v1731 = vpow.pop %v1730
      %v1732 = vmul.f32 %v1704, 1.442695
      %v1733 = vpow.pop %v1732
      %v1734 = vmul.f32 %v1705, 1.442695
      %v1735 = vpow.pop %v1734
      %v1736 = vmul.f32 %v1706, 1.442695
      %v1737 = vpow.pop %v1736
      %v1738 = vmul.f32 %v1707, 1.442695
      %v1739 = vpow.pop %v1738
      %v1740 = vmul.f32 %v1708, 1.442695
      %v1741 = vpow.pop %v1740
      %v1742 = vmul.f32 %v1709, 1.442695
      %v1743 = vpow.pop %v1742
      %v1744 = vmul.f32 %v1710, 1.442695
      %v1745 = vpow.pop %v1744
      %v1746 = vmul.f32 %v1711, 1.442695
      %v1747 = vpow.pop %v1746
      %v1748 = vmul.f32 %v1712, 1.442695
      %v1749 = vpow.pop %v1748
      %v1750 = vmul.f32 %v1713, 1.442695
      %v1751 = vpow.pop %v1750
      %v1752 = vmul.f32 %v1714, 1.442695
      %v1753 = vpow.pop %v1752
      %v1754 = vmul.f32 %v1715, 1.442695
      %v1755 = vpow.pop %v1754
      %v1756 = vmul.f32 %v1716, 1.442695
      %v1757 = vpow.pop %v1756
      %v1758 = vmul.f32 %v1717, 1.442695
      %v1759 = vpow.pop %v1758
      %v1760 = vmul.f32 %v1718, 1.442695
      %v1761 = vpow.pop %v1760
      %v1762 = vmul.f32 %v1719, 1.442695
      %v1763 = vpow.pop %v1762
      %v1764 = vmul.f32 %v1720, 1.442695
      %v1765 = vpow.pop %v1764
      %v1766 = vmul.f32 %v1721, 1.442695
      %v1767 = vpow.pop %v1766
      %v1768 = vmul.f32 %v1722, 1.442695
      %v1769 = vpow.pop %v1768
      %v1770 = vmul.f32 %v1723, 1.442695
      %v1771 = vpow.pop %v1770
      %v1772 = vmul.f32 %v1724, 1.442695
      %v1773 = vpow.pop %v1772
      %v1774 = vmul.f32 %v1725, 1.442695
      %v1775 = vpow.pop %v1774
      %v1776 = vadd.f32 %v1727, 1.0
      %v1777 = vadd.f32 %v1729, 1.0
      %v1778 = vadd.f32 %v1731, 1.0
      %v1779 = vadd.f32 %v1733, 1.0
      %v1780 = vadd.f32 %v1735, 1.0
      %v1781 = vadd.f32 %v1737, 1.0
      %v1782 = vadd.f32 %v1739, 1.0
      %v1783 = vadd.f32 %v1741, 1.0
      %v1784 = vadd.f32 %v1743, 1.0
      %v1785 = vadd.f32 %v1745, 1.0
      %v1786 = vadd.f32 %v1747, 1.0
      %v1787 = vadd.f32 %v1749, 1.0
      %v1788 = vadd.f32 %v1751, 1.0
      %v1789 = vadd.f32 %v1753, 1.0
      %v1790 = vadd.f32 %v1755, 1.0
      %v1791 = vadd.f32 %v1757, 1.0
      %v1792 = vadd.f32 %v1759, 1.0
      %v1793 = vadd.f32 %v1761, 1.0
      %v1794 = vadd.f32 %v1763, 1.0
      %v1795 = vadd.f32 %v1765, 1.0
      %v1796 = vadd.f32 %v1767, 1.0
      %v1797 = vadd.f32 %v1769, 1.0
      %v1798 = vadd.f32 %v1771, 1.0
      %v1799 = vadd.f32 %v1773, 1.0
      %v1800 = vadd.f32 %v1775, 1.0
      %v1801 = vrcp.pop %v1776
      %v1802 = vrcp.pop %v1777
      %v1803 = vrcp.pop %v1778
      %v1804 = vrcp.pop %v1779
      %v1805 = vrcp.pop %v1780
      %v1806 = vrcp.pop %v1781
      %v1807 = vrcp.pop %v1782
      %v1808 = vrcp.pop %v1783
      %v1809 = vrcp.pop %v1784
      %v1810 = vrcp.pop %v1785
      %v1811 = vrcp.pop %v1786
      %v1812 = vrcp.pop %v1787
      %v1813 = vrcp.pop %v1788
      %v1814 = vrcp.pop %v1789
      %v1815 = vrcp.pop %v1790
      %v1816 = vrcp.pop %v1791
      %v1817 = vrcp.pop %v1792
      %v1818 = vrcp.pop %v1793
      %v1819 = vrcp.pop %v1794
      %v1820 = vrcp.pop %v1795
      %v1821 = vrcp.pop %v1796
      %v1822 = vrcp.pop %v1797
      %v1823 = vrcp.pop %v1798
      %v1824 = vrcp.pop %v1799
      %v1825 = vrcp.pop %v1800
      %v1826 = vadd.f32 %v1412, %v1801
      %v1827 = vadd.f32 %v1413, %v1802
      %v1828 = vadd.f32 %v1414, %v1803
      %v1829 = vadd.f32 %v1415, %v1804
      %v1830 = vadd.f32 %v1416, %v1805
      %v1831 = vadd.f32 %v1417, %v1806
      %v1832 = vadd.f32 %v1418, %v1807
      %v1833 = vadd.f32 %v1419, %v1808
      %v1834 = vadd.f32 %v1420, %v1809
      %v1835 = vadd.f32 %v1421, %v1810
      %v1836 = vadd.f32 %v1422, %v1811
      %v1837 = vadd.f32 %v1423, %v1812
      %v1838 = vadd.f32 %v1424, %v1813
      %v1839 = vadd.f32 %v1425, %v1814
      %v1840 = vadd.f32 %v1426, %v1815
      %v1841 = vadd.f32 %v1427, %v1816
      %v1842 = vadd.f32 %v1428, %v1817
      %v1843 = vadd.f32 %v1429, %v1818
      %v1844 = vadd.f32 %v1430, %v1819
      %v1845 = vadd.f32 %v1431, %v1820
      %v1846 = vadd.f32 %v1432, %v1821
      %v1847 = vadd.f32 %v1433, %v1822
      %v1848 = vadd.f32 %v1434, %v1823
      %v1849 = vadd.f32 %v1435, %v1824
      %v1850 = vadd.f32 %v1436, %v1825
      %v1851 = vmul.f32 %v1826, 0.25
      %v1852 = vmul.f32 %v1827, 0.25
      %v1853 = vmul.f32 %v1828, 0.25
      %v1854 = vmul.f32 %v1829, 0.25
      %v1855 = vmul.f32 %v1830, 0.25
      %v1856 = vmul.f32 %v1831, 0.25
      %v1857 = vmul.f32 %v1832, 0.25
      %v1858 = vmul.f32 %v1833, 0.25
      %v1859 = vmul.f32 %v1834, 0.25
      %v1860 = vmul.f32 %v1835, 0.25
      %v1861 = vmul.f32 %v1836, 0.25
      %v1862 = vmul.f32 %v1837, 0.25
      %v1863 = vmul.f32 %v1838, 0.25
      %v1864 = vmul.f32 %v1839, 0.25
      %v1865 = vmul.f32 %v1840, 0.25
      %v1866 = vmul.f32 %v1841, 0.25
      %v1867 = vmul.f32 %v1842, 0.25
      %v1868 = vmul.f32 %v1843, 0.25
      %v1869 = vmul.f32 %v1844, 0.25
      %v1870 = vmul.f32 %v1845, 0.25
      %v1871 = vmul.f32 %v1846, 0.25
      %v1872 = vmul.f32 %v1847, 0.25
      %v1873 = vmul.f32 %v1848, 0.25
      %v1874 = vmul.f32 %v1849, 0.25
      %v1875 = vmul.f32 %v1850, 0.25
      %v1876 = vpack.c.bf16 %v1852, %v1851
      %v1877 = vpack.c.bf16 %v1854, %v1853
      %v1878 = vpack.c.bf16 %v1856, %v1855
      %v1879 = vpack.c.bf16 %v1858, %v1857
      %v1880 = vpack.c.bf16 %v1860, %v1859
      %v1881 = vpack.c.bf16 %v1862, %v1861
      %v1882 = vpack.c.bf16 %v1864, %v1863
      %v1883 = vpack.c.bf16 %v1866, %v1865
      %v1884 = vpack.c.bf16 %v1868, %v1867
      %v1885 = vpack.c.bf16 %v1870, %v1869
      %v1886 = vpack.c.bf16 %v1872, %v1871
      %v1887 = vpack.c.bf16 %v1874, %v1873
      %v1888 = vpack.c.bf16 %v1875, %v1875
      %v1902 = vunpack.c.l.b16 %v1876
      %v1903 = vunpack.c.h.b16 %v1876
      %v1904 = vunpack.c.l.b16 %v1877
      %v1905 = vunpack.c.h.b16 %v1877
      %v1906 = vunpack.c.l.b16 %v1878
      %v1907 = vunpack.c.h.b16 %v1878
      %v1908 = vunpack.c.l.b16 %v1879
      %v1909 = vunpack.c.h.b16 %v1879
      %v1910 = vunpack.c.l.b16 %v1880
      %v1911 = vunpack.c.h.b16 %v1880
      %v1912 = vunpack.c.l.b16 %v1881
      %v1913 = vunpack.c.h.b16 %v1881
      %v1914 = vunpack.c.l.b16 %v1882
      %v1915 = vunpack.c.h.b16 %v1882
      %v1916 = vunpack.c.l.b16 %v1883
      %v1917 = vunpack.c.h.b16 %v1883
      %v1918 = vunpack.c.l.b16 %v1884
      %v1919 = vunpack.c.h.b16 %v1884
      %v1920 = vunpack.c.l.b16 %v1885
      %v1921 = vunpack.c.h.b16 %v1885
      %v1922 = vunpack.c.l.b16 %v1886
      %v1923 = vunpack.c.h.b16 %v1886
      %v1924 = vunpack.c.l.b16 %v1887
      %v1925 = vunpack.c.h.b16 %v1887
      %v1926 = vunpack.c.l.b16 %v1888
      %v1927 = vpack.c.b16 %v1902, %v1902
      %v1928 = vpack.c.b16 %v1903, %v1903
      %v1929 = vpack.c.b16 %v1904, %v1904
      %v1930 = vpack.c.b16 %v1905, %v1905
      %v1931 = vpack.c.b16 %v1906, %v1906
      %v1932 = vpack.c.b16 %v1907, %v1907
      %v1933 = vpack.c.b16 %v1908, %v1908
      %v1934 = vpack.c.b16 %v1909, %v1909
      %v1935 = vpack.c.b16 %v1910, %v1910
      %v1936 = vpack.c.b16 %v1911, %v1911
      %v1937 = vpack.c.b16 %v1912, %v1912
      %v1938 = vpack.c.b16 %v1913, %v1913
      %v1939 = vpack.c.b16 %v1914, %v1914
      %v1940 = vpack.c.b16 %v1915, %v1915
      %v1941 = vpack.c.b16 %v1916, %v1916
      %v1942 = vpack.c.b16 %v1917, %v1917
      %v1943 = vpack.c.b16 %v1918, %v1918
      %v1944 = vpack.c.b16 %v1919, %v1919
      %v1945 = vpack.c.b16 %v1920, %v1920
      %v1946 = vpack.c.b16 %v1921, %v1921
      %v1947 = vpack.c.b16 %v1922, %v1922
      %v1948 = vpack.c.b16 %v1923, %v1923
      %v1949 = vpack.c.b16 %v1924, %v1924
      %v1950 = vpack.c.b16 %v1925, %v1925
      %v1951 = vpack.c.b16 %v1926, %v1926
      %1977 = vst [vmem:[%s170] sm:$0xf] %v1927
      %1978 = vst [vmem:[%s170 + $0x4] sm:$0xf] %v1928
      %1979 = vst [vmem:[%s170 + $0x8] sm:$0xf] %v1929
      %1980 = vst [vmem:[%s170 + $0xc] sm:$0xf] %v1930
      %1981 = vst [vmem:[%s170 + $0x10] sm:$0xf] %v1931
      %1982 = vst [vmem:[%s170 + $0x14] sm:$0xf] %v1932
      %1983 = vst [vmem:[%s170 + $0x18] sm:$0xf] %v1933
      %1984 = vst [vmem:[%s170 + $0x1c] sm:$0xf] %v1934
      %1985 = vst [vmem:[%s170 + $0x20] sm:$0xf] %v1935
      %1986 = vst [vmem:[%s170 + $0x24] sm:$0xf] %v1936
      %1987 = vst [vmem:[%s170 + $0x28] sm:$0xf] %v1937
      %1988 = vst [vmem:[%s170 + $0x2c] sm:$0xf] %v1938
      %1989 = vst [vmem:[%s170 + $0x30] sm:$0xf] %v1939
      %1990 = vst [vmem:[%s170 + $0x34] sm:$0xf] %v1940
      %1991 = vst [vmem:[%s170 + $0x38] sm:$0xf] %v1941
      %1992 = vst [vmem:[%s170 + $0x3c] sm:$0xf] %v1942
      %1993 = vst [vmem:[%s170 + $0x40] sm:$0xf] %v1943
      %1994 = vst [vmem:[%s170 + $0x44] sm:$0xf] %v1944
      %1995 = vst [vmem:[%s170 + $0x48] sm:$0xf] %v1945
      %1996 = vst [vmem:[%s170 + $0x4c] sm:$0xf] %v1946
      %1997 = vst [vmem:[%s170 + $0x50] sm:$0xf] %v1947
      %1998 = vst [vmem:[%s170 + $0x54] sm:$0xf] %v1948
      %1999 = vst [vmem:[%s170 + $0x58] sm:$0xf] %v1949
      %2000 = vst [vmem:[%s170 + $0x5c] sm:$0xf] %v1950
      %2001 = vst [vmem:[%s170 + $0x60] sm:$0x3] %v1951
      %p2002 = scmp.lt.s32.totalorder %s14, 1
      %s2003 = scalar_select %p2002, %s14, 1
      %s2004 = smul.addr %s2003, 25
      %s2005 = smul.addr %s2004, 4
      %s2006 = scalar_lea.vmem %s3, %s2005
      // Predicated region
      $region33: #{lenet_forward.3} parent=31 // pred_check
        %p2007 = pneg %p100
      $region34: #{lenet_forward.3} parent=31 // pred_check_branch
        %2009 = sbr.rel (%p2007) target = $region36
      $region35: #{lenet_forward.3} parent=31 // pred_region
        _
      $region36: #{lenet_forward.3} parent=31 // pred_fallthru
        _
    $region32: #{lenet_forward.3} parent=5 // pred_fallthru
      _
    %p2010 = scmp.le.s32.totalorder 2, %s9
    // Predicated region
    $region37: #{lenet_forward.3} parent=5 // pred_check
      %p2011 = pneg %p2010
    $region38: #{lenet_forward.3} parent=5 // pred_check_branch
      %2013 = sbr.rel (%p2011) target = $region40
    $region39: #{lenet_forward.3} parent=5 // pred_region
      %s2014 = ssub.s32 %s9, 2
      // Predicated region
      $region41: #{lenet_forward.3} parent=39 // pred_check
        %p2015 = pneg %p106
      $region42: #{lenet_forward.3} parent=39 // pred_check_branch
        %2017 = sbr.rel (%p2015) target = $region44
      $region43: #{lenet_forward.3} parent=39 // pred_region
        %p2018 = scmp.lt.s32.totalorder %s15, 1
        %s2019 = scalar_select %p2018, %s15, 1
        %s2020 = smul.addr %s2019, 25
        %s2021 = smul.addr %s2020, 4
        %s2022 = scalar_lea.vmem %s3, %s2021
      $region44: #{lenet_forward.3} parent=39 // pred_fallthru
        _
    $region40: #{lenet_forward.3} parent=5 // pred_fallthru
      _
  $region6: #{lenet_forward.3} parent=0 // loop_footer
    %s13 = sadd.s32 1, %s9
  $region7: #{lenet_forward.3} parent=0 // loop_footer_branch
    %8 = sbr.rel target = $region3
  $region8: #{lenet_forward.3} parent=0 // loop_exit
    _

// kernel: lenet_forward.4
$region0: #{lenet_forward.4}
  #allocation0 [shape = 'u32[]', space=smem, size = 0x4, offset = 0x4, fixed_abs, tag = 'smem constant byte address 0x4 - core index']
  #allocation1 [shape = 'u32[144,128]{1,0:T(1,128)}', space=vmem, size = 0x12000, scoped, tag = 'internal scratch']
  %s0 = inlined_call_operand.vmem [shape: bf16[2,4,25,160], index: 0, kind: input, shape index: {}]
  %s1 = inlined_call_operand.vmem [shape: bf16[160,128], index: 1, kind: input, shape index: {}]
  %s2 = inlined_call_operand.vmem [shape: f32[1,128], index: 2, kind: input, shape index: {}]
  %s3 = inlined_call_operand.vmem [shape: bf16[2,25,128], index: 3, kind: output, shape index: {}]
  %s4 = sld [smem:[#allocation0]]
  $region45: #{lenet_forward.4} parent=0
    _
  %s6 = ssub.s32 1, %s4
  %s7 = scalar_select 0, %s6, %s4
  loop: start=0, step=1, limit=4
  $region2: #{lenet_forward.4} parent=0 // loop_pre_header
    _
  $region3: #{lenet_forward.4} parent=0 // loop_header
    %s9 = sphi 0, %s13
    %p10 = scmp.ge.s32.totalorder %s9, 4
    %s19 = sphi 0, %s21
    %s22 = sphi 0, %s19
    %s23 = sphi 0, %s22
    %s39 = sphi 0, %s23
    %s43 = sphi 0, %s43
    %s45 = sphi 0, %s43
    %s46 = sphi 0, %s45
    %s60 = sphi 0, %s46
    %s64 = sphi 0, %s64
    %s66 = sphi 0, %s64
    %s67 = sphi 0, %s66
    %s81 = sphi 0, %s67
    %s87 = sphi 0, %s89
    %s90 = sphi 0, %s87
    %s91 = sphi 0, %s90
    %s107 = sphi 0, %s91
  $region4: #{lenet_forward.4} parent=0 // loop_header_branch
    %12 = sbr.rel (%p10) target = $region8
  $region5: #{lenet_forward.4} parent=0 // loop_body
    %s14 = ssub.s32 %s9, 1
    %s15 = ssub.s32 %s9, 2
    %s16 = sadd.s32 %s9, 1
    %s17 = ssub.s32 %s9, %s16
    %p18 = scmp.eq.s32.totalorder %s17, 0
    %s20 = sadd.s32 %s19, 1
    %s21 = scalar_select %p18, %s19, %s20
    %p24 = pneg %p18
    %p25 = scmp.eq.s32.totalorder %s9, 1
    %p26 = por %p24, %p25
    %p27 = scmp.ne.s32.totalorder %s19, %s22
    %p28 = scmp.eq.s32.totalorder %s9, 0
    %p29 = por %p27, %p28
    %p30 = scmp.ne.s32.totalorder %s19, %s22
    %p31 = scmp.eq.s32.totalorder %s14, 1
    %p32 = por %p30, %p31
    %p33 = scmp.ne.s32.totalorder %s22, %s23
    %p34 = scmp.eq.s32.totalorder %s14, 0
    %p35 = por %p33, %p34
    %p36 = scmp.ne.s32.totalorder %s22, %s23
    %p37 = scmp.eq.s32.totalorder %s15, 1
    %p38 = por %p36, %p37
    %p40 = scmp.ne.s32.totalorder %s23, %s39
    %p41 = scmp.eq.s32.totalorder %s15, 0
    %p42 = por %p40, %p41
    %s44 = sadd.s32 %s43, 1
    %p47 = scmp.eq.s32.totalorder %s9, 1
    %p48 = scmp.ne.s32.totalorder %s43, %s45
    %p49 = scmp.eq.s32.totalorder %s9, 0
    %p50 = por %p48, %p49
    %p51 = scmp.ne.s32.totalorder %s43, %s45
    %p52 = scmp.eq.s32.totalorder %s14, 1
    %p53 = por %p51, %p52
    %p54 = scmp.ne.s32.totalorder %s45, %s46
    %p55 = scmp.eq.s32.totalorder %s14, 0
    %p56 = por %p54, %p55
    %p57 = scmp.ne.s32.totalorder %s45, %s46
    %p58 = scmp.eq.s32.totalorder %s15, 1
    %p59 = por %p57, %p58
    %p61 = scmp.ne.s32.totalorder %s46, %s60
    %p62 = scmp.eq.s32.totalorder %s15, 0
    %p63 = por %p61, %p62
    %s65 = sadd.s32 %s64, 1
    %p68 = scmp.eq.s32.totalorder %s9, 1
    %p69 = scmp.ne.s32.totalorder %s64, %s66
    %p70 = scmp.eq.s32.totalorder %s9, 0
    %p71 = por %p69, %p70
    %p72 = scmp.ne.s32.totalorder %s64, %s66
    %p73 = scmp.eq.s32.totalorder %s14, 1
    %p74 = por %p72, %p73
    %p75 = scmp.ne.s32.totalorder %s66, %s67
    %p76 = scmp.eq.s32.totalorder %s14, 0
    %p77 = por %p75, %p76
    %p78 = scmp.ne.s32.totalorder %s66, %s67
    %p79 = scmp.eq.s32.totalorder %s15, 1
    %p80 = por %p78, %p79
    %p82 = scmp.ne.s32.totalorder %s67, %s81
    %p83 = scmp.eq.s32.totalorder %s15, 0
    %p84 = por %p82, %p83
    %s85 = ssub.s32 %s9, %s16
    %p86 = scmp.eq.s32.totalorder %s85, 0
    %s88 = sadd.s32 %s87, 1
    %s89 = scalar_select %p86, %s87, %s88
    %p92 = pneg %p86
    %p93 = scmp.eq.s32.totalorder %s9, 1
    %p94 = por %p92, %p93
    %p95 = scmp.ne.s32.totalorder %s87, %s90
    %p96 = scmp.eq.s32.totalorder %s9, 0
    %p97 = por %p95, %p96
    %p98 = scmp.ne.s32.totalorder %s87, %s90
    %p99 = scmp.eq.s32.totalorder %s14, 1
    %p100 = por %p98, %p99
    %p101 = scmp.ne.s32.totalorder %s90, %s91
    %p102 = scmp.eq.s32.totalorder %s14, 0
    %p103 = por %p101, %p102
    %p104 = scmp.ne.s32.totalorder %s90, %s91
    %p105 = scmp.eq.s32.totalorder %s15, 1
    %p106 = por %p104, %p105
    %p108 = scmp.ne.s32.totalorder %s91, %s107
    %p109 = scmp.eq.s32.totalorder %s15, 0
    %p110 = por %p108, %p109
    %p111 = scmp.le.s32.totalorder 1, %s9
    %p112 = scmp.lt.s32.totalorder %s9, 3
    %p113 = pnand %p111, %p112
    %p114 = pneg %p113
    // Predicated region
    $region9: #{lenet_forward.4} parent=5 // pred_check
      _
    $region10: #{lenet_forward.4} parent=5 // pred_check_branch
      %116 = sbr.rel (%p113) target = $region12
    $region11: #{lenet_forward.4} parent=5 // pred_region
      %s117 = ssub.s32 %s9, 1
      // Predicated region
      $region13: #{lenet_forward.4} parent=11 // pred_check
        %p118 = pneg %p56
      $region14: #{lenet_forward.4} parent=11 // pred_check_branch
        %120 = sbr.rel (%p118) target = $region16
      $region15: #{lenet_forward.4} parent=11 // pred_region
        _
      $region16: #{lenet_forward.4} parent=11 // pred_fallthru
        _
      // Predicated region
      $region17: #{lenet_forward.4} parent=11 // pred_check
        %p121 = pneg %p77
      $region18: #{lenet_forward.4} parent=11 // pred_check_branch
        %123 = sbr.rel (%p121) target = $region20
      $region19: #{lenet_forward.4} parent=11 // pred_region
        _
      $region20: #{lenet_forward.4} parent=11 // pred_fallthru
        _
    $region12: #{lenet_forward.4} parent=5 // pred_fallthru
      _
    %p124 = scmp.lt.s32.totalorder %s9, 2
    // Predicated region
    $region21: #{lenet_forward.4} parent=5 // pred_check
      %p125 = pneg %p124
    $region22: #{lenet_forward.4} parent=5 // pred_check_branch
      %127 = sbr.rel (%p125) target = $region24
    $region23: #{lenet_forward.4} parent=5 // pred_region
      // Predicated region
      $region25: #{lenet_forward.4} parent=23 // pred_check
        %p128 = pneg %p29
      $region26: #{lenet_forward.4} parent=23 // pred_check_branch
        %130 = sbr.rel (%p128) target = $region28
      $region27: #{lenet_forward.4} parent=23 // pred_region
        %p131 = scmp.lt.s32.totalorder %s9, 1
        %s132 = scalar_select %p131, %s9, 1
        %s133 = smul.addr %s132, 32
        %s134 = smul.addr %s133, 4
        %s135 = scalar_lea.vmem %s0, %s134
      $region28: #{lenet_forward.4} parent=23 // pred_fallthru
        _
    $region24: #{lenet_forward.4} parent=5 // pred_fallthru
      _
    %p136 = scmp.le.s32.totalorder 1, %s9
    %p137 = scmp.lt.s32.totalorder %s9, 3
    %p138 = pnand %p136, %p137
    %p139 = pneg %p138
    // Predicated region
    $region29: #{lenet_forward.4} parent=5 // pred_check
      _
    $region30: #{lenet_forward.4} parent=5 // pred_check_branch
      %141 = sbr.rel (%p138) target = $region32
    $region31: #{lenet_forward.4} parent=5 // pred_region
      %s142 = ssub.s32 %s9, 1
      %p143 = scmp.lt.s32.totalorder %s14, 1
      %s144 = scalar_select %p143, %s14, 1
      %s145 = smul.addr %s144, 32
      %s146 = smul.addr %s145, 4
      %s147 = scalar_lea.vmem %s0, %s146
      %p148 = pneg %p35
      %p149 = pneg %p32
      %p150 = pneg %p56
      %p151 = pneg %p53
      %p152 = pneg %p77
      %p153 = pneg %p74
      %p154 = pneg %p103
      %p155 = pneg %p100
      %p156 = scmp.lt.s32.totalorder %s14, 1
      %s157 = scalar_select %p156, %s14, 1
      %s158 = smul.addr %s157, 4
      %s159 = smul.addr %s158, 4
      %s160 = scalar_lea.vmem %s3, %s159
      %p161 = scmp.lt.s32.totalorder %s14, 1
      %s162 = scalar_select %p161, %s14, 1
      %s163 = smul.addr %s162, 32
      %s164 = smul.addr %s163, 4
      %s165 = scalar_lea.vmem %s0, %s164
      %p166 = scmp.lt.s32.totalorder %s14, 1
      %s167 = scalar_select %p166, %s14, 1
      %s168 = smul.addr %s167, 4
      %s169 = smul.addr %s168, 4
      %s170 = scalar_lea.vmem %s3, %s169
      %v172 = vld [vmem:[%s1] sm:$0xf]
      %v173 = vld [vmem:[%s1 + $0x4] sm:$0xf]
      %v174 = vld [vmem:[%s1 + $0x8] sm:$0xf]
      %v175 = vld [vmem:[%s1 + $0xc] sm:$0xf]
      %v176 = vld [vmem:[%s1 + $0x10] sm:$0xf]
      %v177 = vld [vmem:[%s1 + $0x14] sm:$0xf]
      %v178 = vld [vmem:[%s1 + $0x18] sm:$0xf]
      %v179 = vld [vmem:[%s1 + $0x1c] sm:$0xf]
      %v180 = vld [vmem:[%s1 + $0x20] sm:$0xf]
      %v181 = vld [vmem:[%s1 + $0x24] sm:$0xf]
      %v182 = vld [vmem:[%s1 + $0x28] sm:$0xf]
      %v183 = vld [vmem:[%s1 + $0x2c] sm:$0xf]
      %v184 = vld [vmem:[%s1 + $0x30] sm:$0xf]
      %v185 = vld [vmem:[%s1 + $0x34] sm:$0xf]
      %v186 = vld [vmem:[%s1 + $0x38] sm:$0xf]
      %v187 = vld [vmem:[%s1 + $0x3c] sm:$0xf]
      %v188 = vld [vmem:[%s1 + $0x40] sm:$0xf]
      %v189 = vld [vmem:[%s1 + $0x44] sm:$0xf]
      %v190 = vld [vmem:[%s1 + $0x48] sm:$0xf]
      %v191 = vld [vmem:[%s1 + $0x4c] sm:$0xf]
      %v192 = vld [vmem:[%s2] sm:$0x1]
      %v193 = vld [vmem:[%s165] sm:$0xff]
      %v194 = vld [vmem:[%s165 + $0x8] sm:$0xff]
      %v195 = vld [vmem:[%s165 + $0x10] sm:$0xff]
      %v196 = vld [vmem:[%s165 + $0x18] sm:$0x11]
      %v198 = vlaneseq
      %v199 = vshrl.u32 %v198, 7
      %v200 = vsub.s32 0, %v199
      %v201 = vrot.slane %v192, %v200
      %v207 = vunpack.c.l.b16 %v193
      %v208 = vunpack.c.h.b16 %v193
      %v209 = vunpack.c.l.b16 %v194
      %v210 = vunpack.c.h.b16 %v194
      %v211 = vunpack.c.l.b16 %v195
      %v212 = vunpack.c.h.b16 %v195
      %v213 = vunpack.c.l.b16 %v196
      %v214 = vunpack.c.h.b16 %v196
      %v215 = vpack.c.b16 %v209, %v207
      %v216 = vpack.c.b16 %v210, %v208
      %v217 = vpack.c.b16 %v213, %v211
      %v218 = vpack.c.b16 %v214, %v212
      %v241 = vunpack.c.l.b16 %v172
      %v242 = vunpack.c.l.b16 %v173
      %v243 = vunpack.c.l.b16 %v174
      %v244 = vunpack.c.l.b16 %v175
      %v245 = vunpack.c.l.b16 %v176
      %v246 = vunpack.c.l.b16 %v177
      %v247 = vunpack.c.l.b16 %v178
      %v248 = vunpack.c.l.b16 %v179
      %v249 = vunpack.c.l.b16 %v180
      %v250 = vunpack.c.l.b16 %v181
      %v251 = vunpack.c.l.b16 %v182
      %v252 = vunpack.c.l.b16 %v183
      %v253 = vunpack.c.l.b16 %v184
      %v254 = vunpack.c.l.b16 %v185
      %v255 = vunpack.c.l.b16 %v186
      %v256 = vunpack.c.l.b16 %v187
      %v257 = vunpack.c.l.b16 %v188
      %v258 = vunpack.c.l.b16 %v189
      %v259 = vunpack.c.l.b16 %v190
      %v260 = vunpack.c.l.b16 %v191
      %v261 = vpack.c.b16 %v242, %v241
      %v262 = vpack.c.b16 %v244, %v243
      %v263 = vpack.c.b16 %v246, %v245
      %v264 = vpack.c.b16 %v248, %v247
      %v265 = vpack.c.b16 %v250, %v249
      %v266 = vpack.c.b16 %v252, %v251
      %v267 = vpack.c.b16 %v254, %v253
      %v268 = vpack.c.b16 %v256, %v255
      %v269 = vpack.c.b16 %v258, %v257
      %v270 = vpack.c.b16 %v260, %v259
      %vm281 = vcmask 261120
      %v283 = vsel %vm281, %v216, 0
      %v286 = vsel %vm281, %v218, 0
      %288 = vmatprep.subr.bf16.mxu0 0
      %289 = vmatpush1.bf16.msra.mxu0 %v268
      %290 = vmatprep.subr.bf16.mxu0 0
      %291 = vmatpush1.bf16.msra.mxu0 %v267
      %292 = vmatprep.subr.bf16.mxu0 0
      %293 = vmatpush1.bf16.msra.mxu0 %v266
      %294 = vmatprep.subr.bf16.mxu0 0
      %295 = vmatpush1.bf16.msra.mxu0 %v265
      %296 = vmatprep.subr.bf16.mxu0 0
      %297 = vmatpush1.bf16.msra.mxu0 %v264
      %298 = vmatprep.subr.bf16.mxu0 0
      %299 = vmatpush1.bf16.msra.mxu0 %v263
      %300 = vmatprep.subr.bf16.mxu0 0
      %301 = vmatpush1.bf16.msra.mxu0 %v262
      %302 = vmatprep.subr.bf16.mxu0 0
      %303 = vmatpush1.bf16.msra.mxu0 %v261
      %304 = vmatprep.subr.bf16.mxu0 0
      %305 = vmatpush2.bf16.msra.mxu0 0
      %306 = vmatprep.subr.bf16.mxu0 0
      %307 = vmatpush2.bf16.msra.mxu0 0
      %308 = vmatprep.subr.bf16.mxu0 0
      %309 = vmatpush2.bf16.msra.mxu0 0
      %310 = vmatprep.subr.bf16.mxu0 0
      %311 = vmatpush2.bf16.msra.mxu0 0
      %312 = vmatprep.subr.bf16.mxu0 0
      %313 = vmatpush2.bf16.msra.mxu0 0
      %314 = vmatprep.subr.bf16.mxu0 0
      %315 = vmatpush2.bf16.msra.mxu0 0
      %316 = vmatprep.subr.bf16.mxu0 0
      %317 = vmatpush2.bf16.msra.mxu0 %v270
      %318 = vmatprep.subr.bf16.mxu0 0
      %319 = vmatpush2.bf16.msra.mxu0 %v269
      %320 = vmatprep.mubr.bf16.mxu0 %v283
      %321 = vmatmul.mubr.bf16.gmra.mxu0 %v215
      %v322 = vpop.f32.mrf.mxu0
      %v323 = vadd.f32 %v201, %v322
      %v324 = vpop.f32.mrf.mxu0
      %v325 = vpop.f32.mrf.mxu0
      %v326 = vadd.f32 %v201, %v325
      %v327 = vpop.f32.mrf.mxu0
      %328 = vmatprep.mubr.bf16.mxu0 %v286
      %329 = vmatmul.mubr.bf16.gmra.mxu0 %v217
      %v330 = vpop.f32.mrf.mxu0
      %v331 = vadd.f32 %v201, %v330
      %v332 = vpop.f32.mrf.mxu0
      %v333 = vpop.f32.mrf.mxu0
      %v334 = vadd.f32 %v201, %v333
      %v335 = vpop.f32.mrf.mxu0
      %336 = vdwg.mxu0
      %v337 = vsub.f32 0.0, %v323
      %v338 = vsub.f32 0.0, %v326
      %v339 = vsub.f32 0.0, %v331
      %v340 = vsub.f32 0.0, %v334
      %v341 = vmul.f32 %v337, 1.442695
      %v342 = vpow.pop %v341
      %v343 = vmul.f32 %v338, 1.442695
      %v344 = vpow.pop %v343
      %v345 = vmul.f32 %v339, 1.442695
      %v346 = vpow.pop %v345
      %v347 = vmul.f32 %v340, 1.442695
      %v348 = vpow.pop %v347
      %v349 = vadd.f32 %v342, 1.0
      %v350 = vadd.f32 %v344, 1.0
      %v351 = vadd.f32 %v346, 1.0
      %v352 = vadd.f32 %v348, 1.0
      %v353 = vrcp.pop %v349
      %v354 = vrcp.pop %v350
      %v355 = vrcp.pop %v351
      %v356 = vrcp.pop %v352
      %v357 = vadd.f32 %v353, 0.0
      %v358 = vadd.f32 %v354, 0.0
      %v359 = vadd.f32 %v355, 0.0
      %v360 = vadd.f32 %v356, 0.0
      %s361 = scalar_lea.vmem %s165, 32
      %v362 = vld [vmem:[%s361] sm:$0xff]
      %v363 = vld [vmem:[%s361 + $0x8] sm:$0xff]
      %v364 = vld [vmem:[%s361 + $0x10] sm:$0xff]
      %v365 = vld [vmem:[%s361 + $0x18] sm:$0x11]
      %v370 = vunpack.c.l.b16 %v362
      %v371 = vunpack.c.h.b16 %v362
      %v372 = vunpack.c.l.b16 %v363
      %v373 = vunpack.c.h.b16 %v363
      %v374 = vunpack.c.l.b16 %v364
      %v375 = vunpack.c.h.b16 %v364
      %v376 = vunpack.c.l.b16 %v365
      %v377 = vunpack.c.h.b16 %v365
      %v378 = vpack.c.b16 %v372, %v370
      %v379 = vpack.c.b16 %v373, %v371
      %v380 = vpack.c.b16 %v376, %v374
      %v381 = vpack.c.b16 %v377, %v375
      %v385 = vsel %vm281, %v379, 0
      %v388 = vsel %vm281, %v381, 0
      %390 = vmatprep.subr.bf16.mxu0 0
      %391 = vmatpush1.bf16.msra.mxu0 %v268
      %392 = vmatprep.subr.bf16.mxu0 0
      %393 = vmatpush1.bf16.msra.mxu0 %v267
      %394 = vmatprep.subr.bf16.mxu0 0
      %395 = vmatpush1.bf16.msra.mxu0 %v266
      %396 = vmatprep.subr.bf16.mxu0 0
      %397 = vmatpush1.bf16.msra.mxu0 %v265
      %398 = vmatprep.subr.bf16.mxu0 0
      %399 = vmatpush1.bf16.msra.mxu0 %v264
      %400 = vmatprep.subr.bf16.mxu0 0
      %401 = vmatpush1.bf16.msra.mxu0 %v263
      %402 = vmatprep.subr.bf16.mxu0 0
      %403 = vmatpush1.bf16.msra.mxu0 %v262
      %404 = vmatprep.subr.bf16.mxu0 0
      %405 = vmatpush1.bf16.msra.mxu0 %v261
      %406 = vmatprep.subr.bf16.mxu0 0
      %407 = vmatpush2.bf16.msra.mxu0 0
      %408 = vmatprep.subr.bf16.mxu0 0
      %409 = vmatpush2.bf16.msra.mxu0 0
      %410 = vmatprep.subr.bf16.mxu0 0
      %411 = vmatpush2.bf16.msra.mxu0 0
      %412 = vmatprep.subr.bf16.mxu0 0
      %413 = vmatpush2.bf16.msra.mxu0 0
      %414 = vmatprep.subr.bf16.mxu0 0
      %415 = vmatpush2.bf16.msra.mxu0 0
      %416 = vmatprep.subr.bf16.mxu0 0
      %417 = vmatpush2.bf16.msra.mxu0 0
      %418 = vmatprep.subr.bf16.mxu0 0
      %419 = vmatpush2.bf16.msra.mxu0 %v270
      %420 = vmatprep.subr.bf16.mxu0 0
      %421 = vmatpush2.bf16.msra.mxu0 %v269
      %422 = vmatprep.mubr.bf16.mxu0 %v385
      %423 = vmatmul.mubr.bf16.gmra.mxu0 %v378
      %v424 = vpop.f32.mrf.mxu0
      %v425 = vadd.f32 %v201, %v424
      %v426 = vpop.f32.mrf.mxu0
      %v427 = vpop.f32.mrf.mxu0
      %v428 = vadd.f32 %v201, %v427
      %v429 = vpop.f32.mrf.mxu0
      %430 = vmatprep.mubr.bf16.mxu0 %v388
      %431 = vmatmul.mubr.bf16.gmra.mxu0 %v380
      %v432 = vpop.f32.mrf.mxu0
      %v433 = vadd.f32 %v201, %v432
      %v434 = vpop.f32.mrf.mxu0
      %v435 = vpop.f32.mrf.mxu0
      %v436 = vadd.f32 %v201, %v435
      %v437 = vpop.f32.mrf.mxu0
      %438 = vdwg.mxu0
      %v439 = vsub.f32 0.0, %v425
      %v440 = vsub.f32 0.0, %v428
      %v441 = vsub.f32 0.0, %v433
      %v442 = vsub.f32 0.0, %v436
      %v443 = vmul.f32 %v439, 1.442695
      %v444 = vpow.pop %v443
      %v445 = vmul.f32 %v440, 1.442695
      %v446 = vpow.pop %v445
      %v447 = vmul.f32 %v441, 1.442695
      %v448 = vpow.pop %v447
      %v449 = vmul.f32 %v442, 1.442695
      %v450 = vpow.pop %v449
      %v451 = vadd.f32 %v444, 1.0
      %v452 = vadd.f32 %v446, 1.0
      %v453 = vadd.f32 %v448, 1.0
      %v454 = vadd.f32 %v450, 1.0
      %v455 = vrcp.pop %v451
      %v456 = vrcp.pop %v452
      %v457 = vrcp.pop %v453
      %v458 = vrcp.pop %v454
      %v459 = vadd.f32 %v357, %v455
      %v460 = vadd.f32 %v358, %v456
      %v461 = vadd.f32 %v359, %v457
      %v462 = vadd.f32 %v360, %v458
      %s463 = scalar_lea.vmem %s165, 64
      %v464 = vld [vmem:[%s463] sm:$0xff]
      %v465 = vld [vmem:[%s463 + $0x8] sm:$0xff]
      %v466 = vld [vmem:[%s463 + $0x10] sm:$0xff]
      %v467 = vld [vmem:[%s463 + $0x18] sm:$0x11]
      %v472 = vunpack.c.l.b16 %v464
      %v473 = vunpack.c.h.b16 %v464
      %v474 = vunpack.c.l.b16 %v465
      %v475 = vunpack.c.h.b16 %v465
      %v476 = vunpack.c.l.b16 %v466
      %v477 = vunpack.c.h.b16 %v466
      %v478 = vunpack.c.l.b16 %v467
      %v479 = vunpack.c.h.b16 %v467
      %v480 = vpack.c.b16 %v474, %v472
      %v481 = vpack.c.b16 %v475, %v473
      %v482 = vpack.c.b16 %v478, %v476
      %v483 = vpack.c.b16 %v479, %v477
      %v487 = vsel %vm281, %v481, 0
      %v490 = vsel %vm281, %v483, 0
      %492 = vmatprep.subr.bf16.mxu0 0
      %493 = vmatpush1.bf16.msra.mxu0 %v268
      %494 = vmatprep.subr.bf16.mxu0 0
      %495 = vmatpush1.bf16.msra.mxu0 %v267
      %496 = vmatprep.subr.bf16.mxu0 0
      %497 = vmatpush1.bf16.msra.mxu0 %v266
      %498 = vmatprep.subr.bf16.mxu0 0
      %499 = vmatpush1.bf16.msra.mxu0 %v265
      %500 = vmatprep.subr.bf16.mxu0 0
      %501 = vmatpush1.bf16.msra.mxu0 %v264
      %502 = vmatprep.subr.bf16.mxu0 0
      %503 = vmatpush1.bf16.msra.mxu0 %v263
      %504 = vmatprep.subr.bf16.mxu0 0
      %505 = vmatpush1.bf16.msra.mxu0 %v262
      %506 = vmatprep.subr.bf16.mxu0 0
      %507 = vmatpush1.bf16.msra.mxu0 %v261
      %508 = vmatprep.subr.bf16.mxu0 0
      %509 = vmatpush2.bf16.msra.mxu0 0
      %510 = vmatprep.subr.bf16.mxu0 0
      %511 = vmatpush2.bf16.msra.mxu0 0
      %512 = vmatprep.subr.bf16.mxu0 0
      %513 = vmatpush2.bf16.msra.mxu0 0
      %514 = vmatprep.subr.bf16.mxu0 0
      %515 = vmatpush2.bf16.msra.mxu0 0
      %516 = vmatprep.subr.bf16.mxu0 0
      %517 = vmatpush2.bf16.msra.mxu0 0
      %518 = vmatprep.subr.bf16.mxu0 0
      %519 = vmatpush2.bf16.msra.mxu0 0
      %520 = vmatprep.subr.bf16.mxu0 0
      %521 = vmatpush2.bf16.msra.mxu0 %v270
      %522 = vmatprep.subr.bf16.mxu0 0
      %523 = vmatpush2.bf16.msra.mxu0 %v269
      %524 = vmatprep.mubr.bf16.mxu0 %v487
      %525 = vmatmul.mubr.bf16.gmra.mxu0 %v480
      %v526 = vpop.f32.mrf.mxu0
      %v527 = vadd.f32 %v201, %v526
      %v528 = vpop.f32.mrf.mxu0
      %v529 = vpop.f32.mrf.mxu0
      %v530 = vadd.f32 %v201, %v529
      %v531 = vpop.f32.mrf.mxu0
      %532 = vmatprep.mubr.bf16.mxu0 %v490
      %533 = vmatmul.mubr.bf16.gmra.mxu0 %v482
      %v534 = vpop.f32.mrf.mxu0
      %v535 = vadd.f32 %v201, %v534
      %v536 = vpop.f32.mrf.mxu0
      %v537 = vpop.f32.mrf.mxu0
      %v538 = vadd.f32 %v201, %v537
      %v539 = vpop.f32.mrf.mxu0
      %540 = vdwg.mxu0
      %v541 = vsub.f32 0.0, %v527
      %v542 = vsub.f32 0.0, %v530
      %v543 = vsub.f32 0.0, %v535
      %v544 = vsub.f32 0.0, %v538
      %v545 = vmul.f32 %v541, 1.442695
      %v546 = vpow.pop %v545
      %v547 = vmul.f32 %v542, 1.442695
      %v548 = vpow.pop %v547
      %v549 = vmul.f32 %v543, 1.442695
      %v550 = vpow.pop %v549
      %v551 = vmul.f32 %v544, 1.442695
      %v552 = vpow.pop %v551
      %v553 = vadd.f32 %v546, 1.0
      %v554 = vadd.f32 %v548, 1.0
      %v555 = vadd.f32 %v550, 1.0
      %v556 = vadd.f32 %v552, 1.0
      %v557 = vrcp.pop %v553
      %v558 = vrcp.pop %v554
      %v559 = vrcp.pop %v555
      %v560 = vrcp.pop %v556
      %v561 = vadd.f32 %v459, %v557
      %v562 = vadd.f32 %v460, %v558
      %v563 = vadd.f32 %v461, %v559
      %v564 = vadd.f32 %v462, %v560
      %s565 = scalar_lea.vmem %s165, 96
      %v566 = vld [vmem:[%s565] sm:$0xff]
      %v567 = vld [vmem:[%s565 + $0x8] sm:$0xff]
      %v568 = vld [vmem:[%s565 + $0x10] sm:$0xff]
      %v569 = vld [vmem:[%s565 + $0x18] sm:$0x11]
      %v574 = vunpack.c.l.b16 %v566
      %v575 = vunpack.c.h.b16 %v566
      %v576 = vunpack.c.l.b16 %v567
      %v577 = vunpack.c.h.b16 %v567
      %v578 = vunpack.c.l.b16 %v568
      %v579 = vunpack.c.h.b16 %v568
      %v580 = vunpack.c.l.b16 %v569
      %v581 = vunpack.c.h.b16 %v569
      %v582 = vpack.c.b16 %v576, %v574
      %v583 = vpack.c.b16 %v577, %v575
      %v584 = vpack.c.b16 %v580, %v578
      %v585 = vpack.c.b16 %v581, %v579
      %v589 = vsel %vm281, %v583, 0
      %v592 = vsel %vm281, %v585, 0
      %594 = vmatprep.subr.bf16.mxu0 0
      %595 = vmatpush1.bf16.msra.mxu0 %v268
      %596 = vmatprep.subr.bf16.mxu0 0
      %597 = vmatpush1.bf16.msra.mxu0 %v267
      %598 = vmatprep.subr.bf16.mxu0 0
      %599 = vmatpush1.bf16.msra.mxu0 %v266
      %600 = vmatprep.subr.bf16.mxu0 0
      %601 = vmatpush1.bf16.msra.mxu0 %v265
      %602 = vmatprep.subr.bf16.mxu0 0
      %603 = vmatpush1.bf16.msra.mxu0 %v264
      %604 = vmatprep.subr.bf16.mxu0 0
      %605 = vmatpush1.bf16.msra.mxu0 %v263
      %606 = vmatprep.subr.bf16.mxu0 0
      %607 = vmatpush1.bf16.msra.mxu0 %v262
      %608 = vmatprep.subr.bf16.mxu0 0
      %609 = vmatpush1.bf16.msra.mxu0 %v261
      %610 = vmatprep.subr.bf16.mxu0 0
      %611 = vmatpush2.bf16.msra.mxu0 0
      %612 = vmatprep.subr.bf16.mxu0 0
      %613 = vmatpush2.bf16.msra.mxu0 0
      %614 = vmatprep.subr.bf16.mxu0 0
      %615 = vmatpush2.bf16.msra.mxu0 0
      %616 = vmatprep.subr.bf16.mxu0 0
      %617 = vmatpush2.bf16.msra.mxu0 0
      %618 = vmatprep.subr.bf16.mxu0 0
      %619 = vmatpush2.bf16.msra.mxu0 0
      %620 = vmatprep.subr.bf16.mxu0 0
      %621 = vmatpush2.bf16.msra.mxu0 0
      %622 = vmatprep.subr.bf16.mxu0 0
      %623 = vmatpush2.bf16.msra.mxu0 %v270
      %624 = vmatprep.subr.bf16.mxu0 0
      %625 = vmatpush2.bf16.msra.mxu0 %v269
      %626 = vmatprep.mubr.bf16.mxu0 %v589
      %627 = vmatmul.mubr.bf16.gmra.mxu0 %v582
      %v628 = vpop.f32.mrf.mxu0
      %v629 = vadd.f32 %v201, %v628
      %v630 = vpop.f32.mrf.mxu0
      %v631 = vpop.f32.mrf.mxu0
      %v632 = vadd.f32 %v201, %v631
      %v633 = vpop.f32.mrf.mxu0
      %634 = vmatprep.mubr.bf16.mxu0 %v592
      %635 = vmatmul.mubr.bf16.gmra.mxu0 %v584
      %v636 = vpop.f32.mrf.mxu0
      %v637 = vadd.f32 %v201, %v636
      %v638 = vpop.f32.mrf.mxu0
      %v639 = vpop.f32.mrf.mxu0
      %v640 = vadd.f32 %v201, %v639
      %v641 = vpop.f32.mrf.mxu0
      %642 = vdwg.mxu0
      %v643 = vsub.f32 0.0, %v629
      %v644 = vsub.f32 0.0, %v632
      %v645 = vsub.f32 0.0, %v637
      %v646 = vsub.f32 0.0, %v640
      %v647 = vmul.f32 %v643, 1.442695
      %v648 = vpow.pop %v647
      %v649 = vmul.f32 %v644, 1.442695
      %v650 = vpow.pop %v649
      %v651 = vmul.f32 %v645, 1.442695
      %v652 = vpow.pop %v651
      %v653 = vmul.f32 %v646, 1.442695
      %v654 = vpow.pop %v653
      %v655 = vadd.f32 %v648, 1.0
      %v656 = vadd.f32 %v650, 1.0
      %v657 = vadd.f32 %v652, 1.0
      %v658 = vadd.f32 %v654, 1.0
      %v659 = vrcp.pop %v655
      %v660 = vrcp.pop %v656
      %v661 = vrcp.pop %v657
      %v662 = vrcp.pop %v658
      %v663 = vadd.f32 %v561, %v659
      %v664 = vadd.f32 %v562, %v660
      %v665 = vadd.f32 %v563, %v661
      %v666 = vadd.f32 %v564, %v662
      %v667 = vmul.f32 %v663, 0.25
      %v668 = vmul.f32 %v664, 0.25
      %v669 = vmul.f32 %v665, 0.25
      %v670 = vmul.f32 %v666, 0.25
      %v671 = vpack.c.bf16 %v668, %v667
      %v672 = vpack.c.bf16 %v670, %v669
      %v675 = vunpack.c.l.b16 %v671
      %v676 = vunpack.c.h.b16 %v671
      %v677 = vunpack.c.l.b16 %v672
      %v678 = vunpack.c.h.b16 %v672
      %v679 = vpack.c.b16 %v675, %v675
      %v680 = vpack.c.b16 %v676, %v676
      %v681 = vpack.c.b16 %v677, %v677
      %v682 = vpack.c.b16 %v678, %v678
      %687 = vst [vmem:[%s170] sm:$0xf] %v679
      %688 = vst [vmem:[%s170 + $0x4] sm:$0xf] %v680
      %689 = vst [vmem:[%s170 + $0x8] sm:$0xf] %v681
      %vm690 = vcmask 1040384
      %vm691 = vsmask.f32 256
      %vm692 = vmand %vm690, %vm691
      %v693 = vld [vmem:[%s170 + $0xc] sm:$0x1]
      %v694 = vsel %vm692, %v682, %v693
      %695 = vst [vmem:[%s170 + $0xc] sm:$0x1] %v694
      %p696 = scmp.lt.s32.totalorder %s14, 1
      %s697 = scalar_select %p696, %s14, 1
      %s698 = smul.addr %s697, 4
      %s699 = smul.addr %s698, 4
      %s700 = scalar_lea.vmem %s3, %s699
      // Predicated region
      $region33: #{lenet_forward.4} parent=31 // pred_check
        %p701 = pneg %p100
      $region34: #{lenet_forward.4} parent=31 // pred_check_branch
        %703 = sbr.rel (%p701) target = $region36
      $region35: #{lenet_forward.4} parent=31 // pred_region
        _
      $region36: #{lenet_forward.4} parent=31 // pred_fallthru
        _
    $region32: #{lenet_forward.4} parent=5 // pred_fallthru
      _
    %p704 = scmp.le.s32.totalorder 2, %s9
    // Predicated region
    $region37: #{lenet_forward.4} parent=5 // pred_check
      %p705 = pneg %p704
    $region38: #{lenet_forward.4} parent=5 // pred_check_branch
      %707 = sbr.rel (%p705) target = $region40
    $region39: #{lenet_forward.4} parent=5 // pred_region
      %s708 = ssub.s32 %s9, 2
      // Predicated region
      $region41: #{lenet_forward.4} parent=39 // pred_check
        %p709 = pneg %p106
      $region42: #{lenet_forward.4} parent=39 // pred_check_branch
        %711 = sbr.rel (%p709) target = $region44
      $region43: #{lenet_forward.4} parent=39 // pred_region
        %p712 = scmp.lt.s32.totalorder %s15, 1
        %s713 = scalar_select %p712, %s15, 1
        %s714 = smul.addr %s713, 4
        %s715 = smul.addr %s714, 4
        %s716 = scalar_lea.vmem %s3, %s715
      $region44: #{lenet_forward.4} parent=39 // pred_fallthru
        _
    $region40: #{lenet_forward.4} parent=5 // pred_fallthru
      _
  $region6: #{lenet_forward.4} parent=0 // loop_footer
    %s13 = sadd.s32 1, %s9
  $region7: #{lenet_forward.4} parent=0 // loop_footer_branch
    %8 = sbr.rel target = $region3
  $region8: #{lenet_forward.4} parent=0 // loop_exit
    _

// kernel: lenet_forward.5
$region0: #{lenet_forward.5}
  #allocation0 [shape = 'u32[]', space=smem, size = 0x4, offset = 0x4, fixed_abs, tag = 'smem constant byte address 0x4 - core index']
  #allocation1 [shape = 'u32[144,128]{1,0:T(1,128)}', space=vmem, size = 0x12000, scoped, tag = 'internal scratch']
  %s0 = inlined_call_operand.vmem [shape: bf16[2,400], index: 0, kind: input, shape index: {}]
  %s1 = inlined_call_operand.vmem [shape: bf16[400,128], index: 1, kind: input, shape index: {}]
  %s2 = inlined_call_operand.vmem [shape: f32[1,128], index: 2, kind: input, shape index: {}]
  %s3 = inlined_call_operand.vmem [shape: bf16[128,128], index: 3, kind: input, shape index: {}]
  %s4 = inlined_call_operand.vmem [shape: f32[1,128], index: 4, kind: input, shape index: {}]
  %s5 = inlined_call_operand.vmem [shape: bf16[128,128], index: 5, kind: input, shape index: {}]
  %s6 = inlined_call_operand.vmem [shape: f32[1,128], index: 6, kind: input, shape index: {}]
  %s7 = inlined_call_operand.hbm [shape: f32[2,128], index: 7, kind: output, shape index: {}]
  %s8 = sld [smem:[#allocation0]]
  $region38: #{lenet_forward.5} parent=0
    _
  %s10 = ssub.s32 1, %s8
  %s11 = scalar_select 0, %s10, %s8
  $region1: #{lenet_forward.5} parent=0
    #allocation2 [shape = 'u8[1024]{0}', space=vmem, size = 0x400, scoped, tag = 'output window, operand 0, single buffered']
    #allocation3 [shape = 's32[1]{0}', space=sflag, size = 0x4, scoped, tag = 'scoped memory for lenet_forward.5']
    %12 = vsyncpa [#allocation3], 0
    // Predicated region
    $region2: #{lenet_forward.5} parent=1 // pred_check
      _
    $region3: #{lenet_forward.5} parent=1 // pred_check_branch
      %14 = sbr.rel (0) target = $region5
    $region4: #{lenet_forward.5} parent=1 // pred_region
      _
    $region5: #{lenet_forward.5} parent=1 // pred_fallthru
      _
    // Predicated region
    $region6: #{lenet_forward.5} parent=1 // pred_check
      _
    $region7: #{lenet_forward.5} parent=1 // pred_check_branch
      %16 = sbr.rel (0) target = $region9
    $region8: #{lenet_forward.5} parent=1 // pred_region
      _
    $region9: #{lenet_forward.5} parent=1 // pred_fallthru
      _
    // Predicated region
    $region10: #{lenet_forward.5} parent=1 // pred_check
      _
    $region11: #{lenet_forward.5} parent=1 // pred_check_branch
      %18 = sbr.rel (0) target = $region13
    $region12: #{lenet_forward.5} parent=1 // pred_region
      _
    $region13: #{lenet_forward.5} parent=1 // pred_fallthru
      _
    // Predicated region
    $region14: #{lenet_forward.5} parent=1 // pred_check
      _
    $region15: #{lenet_forward.5} parent=1 // pred_check_branch
      %20 = sbr.rel (0) target = $region17
    $region16: #{lenet_forward.5} parent=1 // pred_region
      _
    $region17: #{lenet_forward.5} parent=1 // pred_fallthru
      _
    // Predicated region
    $region18: #{lenet_forward.5} parent=1 // pred_check
      _
    $region19: #{lenet_forward.5} parent=1 // pred_check_branch
      %22 = sbr.rel (0) target = $region21
    $region20: #{lenet_forward.5} parent=1 // pred_region
      _
    $region21: #{lenet_forward.5} parent=1 // pred_fallthru
      _
    // Predicated region
    $region22: #{lenet_forward.5} parent=1 // pred_check
      _
    $region23: #{lenet_forward.5} parent=1 // pred_check_branch
      %24 = sbr.rel (0) target = $region25
    $region24: #{lenet_forward.5} parent=1 // pred_region
      _
    $region25: #{lenet_forward.5} parent=1 // pred_fallthru
      _
    // Predicated region
    $region26: #{lenet_forward.5} parent=1 // pred_check
      _
    $region27: #{lenet_forward.5} parent=1 // pred_check_branch
      %26 = sbr.rel (0) target = $region29
    $region28: #{lenet_forward.5} parent=1 // pred_region
      _
    $region29: #{lenet_forward.5} parent=1 // pred_fallthru
      _
    %v28 = vld [vmem:[%s0] sm:$0xf]
    %v29 = vld [vmem:[%s1] sm:$0xf]
    %v30 = vld [vmem:[%s1 + $0x4] sm:$0xf]
    %v31 = vld [vmem:[%s1 + $0x8] sm:$0xf]
    %v32 = vld [vmem:[%s1 + $0xc] sm:$0xf]
    %v33 = vld [vmem:[%s1 + $0x10] sm:$0xf]
    %v34 = vld [vmem:[%s1 + $0x14] sm:$0xf]
    %v35 = vld [vmem:[%s1 + $0x18] sm:$0xf]
    %v36 = vld [vmem:[%s1 + $0x1c] sm:$0xf]
    %v37 = vld [vmem:[%s1 + $0x20] sm:$0xf]
    %v38 = vld [vmem:[%s1 + $0x24] sm:$0xf]
    %v39 = vld [vmem:[%s1 + $0x28] sm:$0xf]
    %v40 = vld [vmem:[%s1 + $0x2c] sm:$0xf]
    %v41 = vld [vmem:[%s1 + $0x30] sm:$0xf]
    %v42 = vld [vmem:[%s1 + $0x34] sm:$0xf]
    %v43 = vld [vmem:[%s1 + $0x38] sm:$0xf]
    %v44 = vld [vmem:[%s1 + $0x3c] sm:$0xf]
    %v45 = vld [vmem:[%s1 + $0x40] sm:$0xf]
    %v46 = vld [vmem:[%s1 + $0x44] sm:$0xf]
    %v47 = vld [vmem:[%s1 + $0x48] sm:$0xf]
    %v48 = vld [vmem:[%s1 + $0x4c] sm:$0xf]
    %v49 = vld [vmem:[%s1 + $0x50] sm:$0xf]
    %v50 = vld [vmem:[%s1 + $0x54] sm:$0xf]
    %v51 = vld [vmem:[%s1 + $0x58] sm:$0xf]
    %v52 = vld [vmem:[%s1 + $0x5c] sm:$0xf]
    %v53 = vld [vmem:[%s1 + $0x60] sm:$0xf]
    %v54 = vld [vmem:[%s1 + $0x64] sm:$0xf]
    %v55 = vld [vmem:[%s1 + $0x68] sm:$0xf]
    %v56 = vld [vmem:[%s1 + $0x6c] sm:$0xf]
    %v57 = vld [vmem:[%s1 + $0x70] sm:$0xf]
    %v58 = vld [vmem:[%s1 + $0x74] sm:$0xf]
    %v59 = vld [vmem:[%s1 + $0x78] sm:$0xf]
    %v60 = vld [vmem:[%s1 + $0x7c] sm:$0xf]
    %v61 = vld [vmem:[%s1 + $0x80] sm:$0xf]
    %v62 = vld [vmem:[%s1 + $0x84] sm:$0xf]
    %v63 = vld [vmem:[%s1 + $0x88] sm:$0xf]
    %v64 = vld [vmem:[%s1 + $0x8c] sm:$0xf]
    %v65 = vld [vmem:[%s1 + $0x90] sm:$0xf]
    %v66 = vld [vmem:[%s1 + $0x94] sm:$0xf]
    %v67 = vld [vmem:[%s1 + $0x98] sm:$0xf]
    %v68 = vld [vmem:[%s1 + $0x9c] sm:$0xf]
    %v69 = vld [vmem:[%s1 + $0xa0] sm:$0xf]
    %v70 = vld [vmem:[%s1 + $0xa4] sm:$0xf]
    %v71 = vld [vmem:[%s1 + $0xa8] sm:$0xf]
    %v72 = vld [vmem:[%s1 + $0xac] sm:$0xf]
    %v73 = vld [vmem:[%s1 + $0xb0] sm:$0xf]
    %v74 = vld [vmem:[%s1 + $0xb4] sm:$0xf]
    %v75 = vld [vmem:[%s1 + $0xb8] sm:$0xf]
    %v76 = vld [vmem:[%s1 + $0xbc] sm:$0xf]
    %v77 = vld [vmem:[%s1 + $0xc0] sm:$0xf]
    %v78 = vld [vmem:[%s1 + $0xc4] sm:$0xf]
    %v79 = vld [vmem:[%s2] sm:$0x1]
    %v81 = vlaneseq
    %v82 = vshrl.u32 %v81, 7
    %v83 = vsub.s32 0, %v82
    %v84 = vrot.slane %v79, %v83
    %v88 = vunpack.c.l.s4 1966171168
    %v89 = vunpack.c.0.s8 %v88
    %v90 = vlaneseq
    %v91 = vshrl.u32 %v90, 7
    %v92 = vsub.s32 %v89, %v91
    %v93 = vrot.slane %v28, %v92
    %v94 = vcombine.high %v93, %v93
    %v96 = vunpack.c.l.s4 1966171168
    %v97 = vunpack.c.0.s8 %v96
    %v98 = vlaneseq
    %v99 = vshrl.u32 %v98, 7
    %v100 = vsub.s32 %v97, %v99
    %v101 = vrot.slane %v93, %v100
    %v103 = vunpack.c.l.s4 1966171168
    %v104 = vunpack.c.0.s8 %v103
    %v105 = vlaneseq
    %v106 = vshrl.u32 %v105, 7
    %v107 = vsub.s32 %v104, %v106
    %v108 = vrot.slane %v94, %v107
    %v109 = vcombine.high %v101, %v101
    %v110 = vcombine.high %v108, %v108
    %v164 = vunpack.c.l.b16 %v29
    %v165 = vunpack.c.l.b16 %v30
    %v166 = vunpack.c.l.b16 %v31
    %v167 = vunpack.c.l.b16 %v32
    %v168 = vunpack.c.l.b16 %v33
    %v169 = vunpack.c.l.b16 %v34
    %v170 = vunpack.c.l.b16 %v35
    %v171 = vunpack.c.l.b16 %v36
    %v172 = vunpack.c.l.b16 %v37
    %v173 = vunpack.c.l.b16 %v38
    %v174 = vunpack.c.l.b16 %v39
    %v175 = vunpack.c.l.b16 %v40
    %v176 = vunpack.c.l.b16 %v41
    %v177 = vunpack.c.l.b16 %v42
    %v178 = vunpack.c.l.b16 %v43
    %v179 = vunpack.c.l.b16 %v44
    %v180 = vunpack.c.l.b16 %v45
    %v181 = vunpack.c.l.b16 %v46
    %v182 = vunpack.c.l.b16 %v47
    %v183 = vunpack.c.l.b16 %v48
    %v184 = vunpack.c.l.b16 %v49
    %v185 = vunpack.c.l.b16 %v50
    %v186 = vunpack.c.l.b16 %v51
    %v187 = vunpack.c.l.b16 %v52
    %v188 = vunpack.c.l.b16 %v53
    %v189 = vunpack.c.l.b16 %v54
    %v190 = vunpack.c.l.b16 %v55
    %v191 = vunpack.c.l.b16 %v56
    %v192 = vunpack.c.l.b16 %v57
    %v193 = vunpack.c.l.b16 %v58
    %v194 = vunpack.c.l.b16 %v59
    %v195 = vunpack.c.l.b16 %v60
    %v196 = vunpack.c.l.b16 %v61
    %v197 = vunpack.c.l.b16 %v62
    %v198 = vunpack.c.l.b16 %v63
    %v199 = vunpack.c.l.b16 %v64
    %v200 = vunpack.c.l.b16 %v65
    %v201 = vunpack.c.l.b16 %v66
    %v202 = vunpack.c.l.b16 %v67
    %v203 = vunpack.c.l.b16 %v68
    %v204 = vunpack.c.l.b16 %v69
    %v205 = vunpack.c.l.b16 %v70
    %v206 = vunpack.c.l.b16 %v71
    %v207 = vunpack.c.l.b16 %v72
    %v208 = vunpack.c.l.b16 %v73
    %v209 = vunpack.c.l.b16 %v74
    %v210 = vunpack.c.l.b16 %v75
    %v211 = vunpack.c.l.b16 %v76
    %v212 = vunpack.c.l.b16 %v77
    %v213 = vunpack.c.l.b16 %v78
    %v214 = vpack.c.b16 %v165, %v164
    %v215 = vpack.c.b16 %v167, %v166
    %v216 = vpack.c.b16 %v169, %v168
    %v217 = vpack.c.b16 %v171, %v170
    %v218 = vpack.c.b16 %v173, %v172
    %v219 = vpack.c.b16 %v175, %v174
    %v220 = vpack.c.b16 %v177, %v176
    %v221 = vpack.c.b16 %v179, %v178
    %v222 = vpack.c.b16 %v181, %v180
    %v223 = vpack.c.b16 %v183, %v182
    %v224 = vpack.c.b16 %v185, %v184
    %v225 = vpack.c.b16 %v187, %v186
    %v226 = vpack.c.b16 %v189, %v188
    %v227 = vpack.c.b16 %v191, %v190
    %v228 = vpack.c.b16 %v193, %v192
    %v229 = vpack.c.b16 %v195, %v194
    %v230 = vpack.c.b16 %v197, %v196
    %v231 = vpack.c.b16 %v199, %v198
    %v232 = vpack.c.b16 %v201, %v200
    %v233 = vpack.c.b16 %v203, %v202
    %v234 = vpack.c.b16 %v205, %v204
    %v235 = vpack.c.b16 %v207, %v206
    %v236 = vpack.c.b16 %v209, %v208
    %v237 = vpack.c.b16 %v211, %v210
    %v238 = vpack.c.b16 %v213, %v212
    %vm264 = vcmask 130048
    %v266 = vsel %vm264, %v110, 0
    %268 = vmatprep.subr.bf16.mxu0 0
    %269 = vmatpush1.bf16.msra.mxu0 %v221
    %270 = vmatprep.subr.bf16.mxu0 0
    %271 = vmatpush1.bf16.msra.mxu0 %v220
    %272 = vmatprep.subr.bf16.mxu0 0
    %273 = vmatpush1.bf16.msra.mxu0 %v219
    %274 = vmatprep.subr.bf16.mxu0 0
    %275 = vmatpush1.bf16.msra.mxu0 %v218
    %276 = vmatprep.subr.bf16.mxu0 0
    %277 = vmatpush1.bf16.msra.mxu0 %v217
    %278 = vmatprep.subr.bf16.mxu0 0
    %279 = vmatpush1.bf16.msra.mxu0 %v216
    %280 = vmatprep.subr.bf16.mxu0 0
    %281 = vmatpush1.bf16.msra.mxu0 %v215
    %282 = vmatprep.subr.bf16.mxu0 0
    %283 = vmatpush1.bf16.msra.mxu0 %v214
    %284 = vmatprep.subr.bf16.mxu0 0
    %285 = vmatpush2.bf16.msra.mxu0 %v229
    %286 = vmatprep.subr.bf16.mxu0 0
    %287 = vmatpush2.bf16.msra.mxu0 %v228
    %288 = vmatprep.subr.bf16.mxu0 0
    %289 = vmatpush2.bf16.msra.mxu0 %v227
    %290 = vmatprep.subr.bf16.mxu0 0
    %291 = vmatpush2.bf16.msra.mxu0 %v226
    %292 = vmatprep.subr.bf16.mxu0 0
    %293 = vmatpush2.bf16.msra.mxu0 %v225
    %294 = vmatprep.subr.bf16.mxu0 0
    %295 = vmatpush2.bf16.msra.mxu0 %v224
    %296 = vmatprep.subr.bf16.mxu0 0
    %297 = vmatpush2.bf16.msra.mxu0 %v223
    %298 = vmatprep.subr.bf16.mxu0 0
    %299 = vmatpush2.bf16.msra.mxu0 %v222
    %300 = vmatprep.mubr.bf16.mxu0 %v108
    %301 = vmatmul.mubr.bf16.gmra.mxu0 %v101
    %v302 = vpop.f32.mrf.mxu0
    %v303 = vadd.f32 %v84, %v302
    %v304 = vpop.f32.mrf.mxu0
    %v305 = vpop.f32.mrf.mxu0
    %v306 = vpop.f32.mrf.mxu0
    %307 = vdwg.mxu0
    %308 = vmatprep.subr.bf16.mxu0 0
    %309 = vmatpush1.bf16.msra.mxu0 %v237
    %310 = vmatprep.subr.bf16.mxu0 0
    %311 = vmatpush1.bf16.msra.mxu0 %v236
    %312 = vmatprep.subr.bf16.mxu0 0
    %313 = vmatpush1.bf16.msra.mxu0 %v235
    %314 = vmatprep.subr.bf16.mxu0 0
    %315 = vmatpush1.bf16.msra.mxu0 %v234
    %316 = vmatprep.subr.bf16.mxu0 0
    %317 = vmatpush1.bf16.msra.mxu0 %v233
    %318 = vmatprep.subr.bf16.mxu0 0
    %319 = vmatpush1.bf16.msra.mxu0 %v232
    %320 = vmatprep.subr.bf16.mxu0 0
    %321 = vmatpush1.bf16.msra.mxu0 %v231
    %322 = vmatprep.subr.bf16.mxu0 0
    %323 = vmatpush1.bf16.msra.mxu0 %v230
    %324 = vmatprep.subr.bf16.mxu0 0
    %325 = vmatpush2.bf16.msra.mxu0 0
    %326 = vmatprep.subr.bf16.mxu0 0
    %327 = vmatpush2.bf16.msra.mxu0 0
    %328 = vmatprep.subr.bf16.mxu0 0
    %329 = vmatpush2.bf16.msra.mxu0 0
    %330 = vmatprep.subr.bf16.mxu0 0
    %331 = vmatpush2.bf16.msra.mxu0 0
    %332 = vmatprep.subr.bf16.mxu0 0
    %333 = vmatpush2.bf16.msra.mxu0 0
    %334 = vmatprep.subr.bf16.mxu0 0
    %335 = vmatpush2.bf16.msra.mxu0 0
    %336 = vmatprep.subr.bf16.mxu0 0
    %337 = vmatpush2.bf16.msra.mxu0 0
    %338 = vmatprep.subr.bf16.mxu0 0
    %339 = vmatpush2.bf16.msra.mxu0 %v238
    %340 = vmatprep.mubr.bf16.mxu0 %v266
    %341 = vmatmul.mubr.bf16.gmra.mxu0 %v109
    %v342 = vpop.f32.mrf.mxu0
    %v343 = vadd.f32 %v303, %v342
    %v344 = vpop.f32.mrf.mxu0
    %v345 = vpop.f32.mrf.mxu0
    %v346 = vpop.f32.mrf.mxu0
    %347 = vdwg.mxu0
    %v348 = vsub.f32 0.0, %v343
    %v349 = vmul.f32 %v348, 1.442695
    %v350 = vpow.pop %v349
    %v351 = vadd.f32 %v350, 1.0
    %v352 = vrcp.pop %v351
    %v353 = vpack.c.bf16 %v352, %v352
    %v354 = vld [vmem:[%s3] sm:$0xf]
    %v355 = vld [vmem:[%s3 + $0x4] sm:$0xf]
    %v356 = vld [vmem:[%s3 + $0x8] sm:$0xf]
    %v357 = vld [vmem:[%s3 + $0xc] sm:$0xf]
    %v358 = vld [vmem:[%s3 + $0x10] sm:$0xf]
    %v359 = vld [vmem:[%s3 + $0x14] sm:$0xf]
    %v360 = vld [vmem:[%s3 + $0x18] sm:$0xf]
    %v361 = vld [vmem:[%s3 + $0x1c] sm:$0xf]
    %v362 = vld [vmem:[%s3 + $0x20] sm:$0xf]
    %v363 = vld [vmem:[%s3 + $0x24] sm:$0xf]
    %v364 = vld [vmem:[%s3 + $0x28] sm:$0xf]
    %v365 = vld [vmem:[%s3 + $0x2c] sm:$0xf]
    %v366 = vld [vmem:[%s3 + $0x30] sm:$0xf]
    %v367 = vld [vmem:[%s3 + $0x34] sm:$0xf]
    %v368 = vld [vmem:[%s3 + $0x38] sm:$0xf]
    %v369 = vld [vmem:[%s3 + $0x3c] sm:$0xf]
    %v370 = vld [vmem:[%s4] sm:$0x1]
    %v372 = vlaneseq
    %v373 = vshrl.u32 %v372, 7
    %v374 = vsub.s32 0, %v373
    %v375 = vrot.slane %v370, %v374
    %v393 = vunpack.c.l.b16 %v354
    %v394 = vunpack.c.l.b16 %v355
    %v395 = vunpack.c.l.b16 %v356
    %v396 = vunpack.c.l.b16 %v357
    %v397 = vunpack.c.l.b16 %v358
    %v398 = vunpack.c.l.b16 %v359
    %v399 = vunpack.c.l.b16 %v360
    %v400 = vunpack.c.l.b16 %v361
    %v401 = vunpack.c.l.b16 %v362
    %v402 = vunpack.c.l.b16 %v363
    %v403 = vunpack.c.l.b16 %v364
    %v404 = vunpack.c.l.b16 %v365
    %v405 = vunpack.c.l.b16 %v366
    %v406 = vunpack.c.l.b16 %v367
    %v407 = vunpack.c.l.b16 %v368
    %v408 = vunpack.c.l.b16 %v369
    %v409 = vpack.c.b16 %v394, %v393
    %v410 = vpack.c.b16 %v396, %v395
    %v411 = vpack.c.b16 %v398, %v397
    %v412 = vpack.c.b16 %v400, %v399
    %v413 = vpack.c.b16 %v402, %v401
    %v414 = vpack.c.b16 %v404, %v403
    %v415 = vpack.c.b16 %v406, %v405
    %v416 = vpack.c.b16 %v408, %v407
    %425 = vmatprep.subr.bf16.mxu0 0
    %426 = vmatpush1.bf16.msra.mxu0 %v416
    %427 = vmatprep.subr.bf16.mxu0 0
    %428 = vmatpush1.bf16.msra.mxu0 %v415
    %429 = vmatprep.subr.bf16.mxu0 0
    %430 = vmatpush1.bf16.msra.mxu0 %v414
    %431 = vmatprep.subr.bf16.mxu0 0
    %432 = vmatpush1.bf16.msra.mxu0 %v413
    %433 = vmatprep.subr.bf16.mxu0 0
    %434 = vmatpush1.bf16.msra.mxu0 %v412
    %435 = vmatprep.subr.bf16.mxu0 0
    %436 = vmatpush1.bf16.msra.mxu0 %v411
    %437 = vmatprep.subr.bf16.mxu0 0
    %438 = vmatpush1.bf16.msra.mxu0 %v410
    %439 = vmatprep.subr.bf16.mxu0 0
    %440 = vmatpush1.bf16.msra.mxu0 %v409
    %441 = vmatprep.subr.bf16.mxu0 0
    %442 = vmatpush2.bf16.msra.mxu0 0
    %443 = vmatprep.subr.bf16.mxu0 0
    %444 = vmatpush2.bf16.msra.mxu0 0
    %445 = vmatprep.subr.bf16.mxu0 0
    %446 = vmatpush2.bf16.msra.mxu0 0
    %447 = vmatprep.subr.bf16.mxu0 0
    %448 = vmatpush2.bf16.msra.mxu0 0
    %449 = vmatprep.subr.bf16.mxu0 0
    %450 = vmatpush2.bf16.msra.mxu0 0
    %451 = vmatprep.subr.bf16.mxu0 0
    %452 = vmatpush2.bf16.msra.mxu0 0
    %453 = vmatprep.subr.bf16.mxu0 0
    %454 = vmatpush2.bf16.msra.mxu0 0
    %455 = vmatprep.subr.bf16.mxu0 0
    %456 = vmatpush2.bf16.msra.mxu0 0
    %457 = vmatprep.mubr.bf16.mxu0 0
    %458 = vmatmul.mubr.bf16.gmra.mxu0 %v353
    %v459 = vpop.f32.mrf.mxu0
    %v460 = vadd.f32 %v375, %v459
    %v461 = vpop.f32.mrf.mxu0
    %v462 = vpop.f32.mrf.mxu0
    %v463 = vpop.f32.mrf.mxu0
    %464 = vdwg.mxu0
    %v465 = vpack.c.bf16 %v460, %v460
    %v466 = vld [vmem:[%s5] sm:$0xf]
    %v467 = vld [vmem:[%s5 + $0x4] sm:$0xf]
    %v468 = vld [vmem:[%s5 + $0x8] sm:$0xf]
    %v469 = vld [vmem:[%s5 + $0xc] sm:$0xf]
    %v470 = vld [vmem:[%s5 + $0x10] sm:$0xf]
    %v471 = vld [vmem:[%s5 + $0x14] sm:$0xf]
    %v472 = vld [vmem:[%s5 + $0x18] sm:$0xf]
    %v473 = vld [vmem:[%s5 + $0x1c] sm:$0xf]
    %v474 = vld [vmem:[%s5 + $0x20] sm:$0xf]
    %v475 = vld [vmem:[%s5 + $0x24] sm:$0xf]
    %v476 = vld [vmem:[%s5 + $0x28] sm:$0xf]
    %v477 = vld [vmem:[%s5 + $0x2c] sm:$0xf]
    %v478 = vld [vmem:[%s5 + $0x30] sm:$0xf]
    %v479 = vld [vmem:[%s5 + $0x34] sm:$0xf]
    %v480 = vld [vmem:[%s5 + $0x38] sm:$0xf]
    %v481 = vld [vmem:[%s5 + $0x3c] sm:$0xf]
    %v482 = vld [vmem:[%s6] sm:$0x1]
    %v484 = vlaneseq
    %v485 = vshrl.u32 %v484, 7
    %v486 = vsub.s32 0, %v485
    %v487 = vrot.slane %v482, %v486
    %v505 = vunpack.c.l.b16 %v466
    %v506 = vunpack.c.l.b16 %v467
    %v507 = vunpack.c.l.b16 %v468
    %v508 = vunpack.c.l.b16 %v469
    %v509 = vunpack.c.l.b16 %v470
    %v510 = vunpack.c.l.b16 %v471
    %v511 = vunpack.c.l.b16 %v472
    %v512 = vunpack.c.l.b16 %v473
    %v513 = vunpack.c.l.b16 %v474
    %v514 = vunpack.c.l.b16 %v475
    %v515 = vunpack.c.l.b16 %v476
    %v516 = vunpack.c.l.b16 %v477
    %v517 = vunpack.c.l.b16 %v478
    %v518 = vunpack.c.l.b16 %v479
    %v519 = vunpack.c.l.b16 %v480
    %v520 = vunpack.c.l.b16 %v481
    %v521 = vpack.c.b16 %v506, %v505
    %v522 = vpack.c.b16 %v508, %v507
    %v523 = vpack.c.b16 %v510, %v509
    %v524 = vpack.c.b16 %v512, %v511
    %v525 = vpack.c.b16 %v514, %v513
    %v526 = vpack.c.b16 %v516, %v515
    %v527 = vpack.c.b16 %v518, %v517
    %v528 = vpack.c.b16 %v520, %v519
    %537 = vmatprep.subr.bf16.mxu0 0
    %538 = vmatpush1.bf16.msra.mxu0 %v528
    %539 = vmatprep.subr.bf16.mxu0 0
    %540 = vmatpush1.bf16.msra.mxu0 %v527
    %541 = vmatprep.subr.bf16.mxu0 0
    %542 = vmatpush1.bf16.msra.mxu0 %v526
    %543 = vmatprep.subr.bf16.mxu0 0
    %544 = vmatpush1.bf16.msra.mxu0 %v525
    %545 = vmatprep.subr.bf16.mxu0 0
    %546 = vmatpush1.bf16.msra.mxu0 %v524
    %547 = vmatprep.subr.bf16.mxu0 0
    %548 = vmatpush1.bf16.msra.mxu0 %v523
    %549 = vmatprep.subr.bf16.mxu0 0
    %550 = vmatpush1.bf16.msra.mxu0 %v522
    %551 = vmatprep.subr.bf16.mxu0 0
    %552 = vmatpush1.bf16.msra.mxu0 %v521
    %553 = vmatprep.subr.bf16.mxu0 0
    %554 = vmatpush2.bf16.msra.mxu0 0
    %555 = vmatprep.subr.bf16.mxu0 0
    %556 = vmatpush2.bf16.msra.mxu0 0
    %557 = vmatprep.subr.bf16.mxu0 0
    %558 = vmatpush2.bf16.msra.mxu0 0
    %559 = vmatprep.subr.bf16.mxu0 0
    %560 = vmatpush2.bf16.msra.mxu0 0
    %561 = vmatprep.subr.bf16.mxu0 0
    %562 = vmatpush2.bf16.msra.mxu0 0
    %563 = vmatprep.subr.bf16.mxu0 0
    %564 = vmatpush2.bf16.msra.mxu0 0
    %565 = vmatprep.subr.bf16.mxu0 0
    %566 = vmatpush2.bf16.msra.mxu0 0
    %567 = vmatprep.subr.bf16.mxu0 0
    %568 = vmatpush2.bf16.msra.mxu0 0
    %569 = vmatprep.mubr.bf16.mxu0 0
    %570 = vmatmul.mubr.bf16.gmra.mxu0 %v465
    %v571 = vpop.f32.mrf.mxu0
    %v572 = vadd.f32 %v487, %v571
    %v573 = vpop.f32.mrf.mxu0
    %v574 = vpop.f32.mrf.mxu0
    %v575 = vpop.f32.mrf.mxu0
    %576 = vdwg.mxu0
    %577 = vst [vmem:[#allocation2] sm:$0x3] %v572
    // Predicated region
    $region30: #{lenet_forward.5} parent=1 // pred_check
      _
    $region31: #{lenet_forward.5} parent=1 // pred_check_branch
      %579 = sbr.rel (0) target = $region33
    $region32: #{lenet_forward.5} parent=1 // pred_region
      %s581 = ssub.s32 32, 32
      %582 = vsyncadd [#allocation3], %s581
      %s584 = sshll.u32 [#allocation2], 4
      %s585 = int_to_ptr.vmem [resolvable:$true] %s584
      %587 = dma.vmem_to_hbm [thread:$0]  %s585, 32, %s7, [#allocation3]
    $region33: #{lenet_forward.5} parent=1 // pred_fallthru
      _
    // Predicated region
    $region34: #{lenet_forward.5} parent=1 // pred_check
      _
    $region35: #{lenet_forward.5} parent=1 // pred_check_branch
      %589 = sbr.rel (0) target = $region37
    $region36: #{lenet_forward.5} parent=1 // pred_region
      %590 = dma.done [#allocation3], 32
    $region37: #{lenet_forward.5} parent=1 // pred_fallthru
      _
    %591 = vsyncpa [#allocation3], 1

</llo_original>
